<compile_context>
chip_gen: v7x
topology: tpu7x:2x2x1
jax: 0.10.0
libtpu: 0.0.40
codegen_flags: <defaults>
</compile_context>

<pallas_src>
import functools
import math

import jax
import jax.numpy as jnp
from jax import lax
from jax.experimental import pallas as pl
from jax.experimental.pallas import tpu as pltpu

_EPS = 1e-5  # nn.LayerNorm default


def _vmem_limit_bytes():
    """Generation-aware VMEM request: ~3/4 of physical, capped at 100 MiB."""
    cap = 64 * 1024 * 1024  # conservative fallback (safe on every generation)
    try:
        info = pltpu.get_tpu_info()
        cap = int(getattr(info, "vmem_capacity_bytes", cap) or cap)
    except Exception:
        pass
    return int(min(100 * 1024 * 1024, cap * 3 // 4))


# ---------------------------------------------------------------------------
# In-kernel helpers (traced inside the Pallas body)
# ---------------------------------------------------------------------------

def _layernorm(z, g, b, eps):
    mean = jnp.mean(z, axis=-1, keepdims=True)
    var = jnp.mean((z - mean) ** 2, axis=-1, keepdims=True)
    return (z - mean) * lax.rsqrt(var + eps) * g + b


def _sdpa_to_scratch(q_slab, k_slab, v_slab, scr_ref, *, bt, L, S, n_heads, scale):
    """Per-(batch, head) SDPA; each head output is written straight into the
    lane-aligned VMEM scratch slab (no concatenate, bounded live ranges)."""
    D = q_slab.shape[-1]
    Dh = D // n_heads
    for b in range(bt):                                # static unroll; bt, H are small
        ql, qr = b * L, (b + 1) * L
        kl, kr = b * S, (b + 1) * S
        for h in range(n_heads):
            c0, c1 = h * Dh, (h + 1) * Dh
            qh = (q_slab[ql:qr, c0:c1] * scale).astype(jnp.bfloat16)   # scale folded into Q
            kh = k_slab[kl:kr, c0:c1].astype(jnp.bfloat16)
            vh = v_slab[kl:kr, c0:c1].astype(jnp.bfloat16)
            # scores: contract last dims directly (no explicit transpose of K)
            s = lax.dot_general(qh, kh, (((1,), (1,)), ((), ())),
                                preferred_element_type=jnp.float32)     # (L, S) f32
            m = jnp.max(s, axis=-1, keepdims=True)
            p = jnp.exp(s - m)
            p = p * pl.reciprocal(jnp.sum(p, axis=-1, keepdims=True), approx=True)
            oh = jnp.dot(p.astype(jnp.bfloat16), vh,
                         preferred_element_type=jnp.float32)            # (L, Dh)
            scr_ref[ql:qr, c0:c1] = oh                 # lane-aligned scratch write


# ---------------------------------------------------------------------------
# Fused decoder-layer kernel (one grid step = Bt batch elements)
# ---------------------------------------------------------------------------

def _decoder_layer_kernel(x_ref, cross_ref,
                          wqkv_ref, bqkv_ref, wo1_ref, bo1_ref, g1_ref, be1_ref,
                          wq_ref, bq_ref, wkv_ref, bkv_ref, wo2_ref, bo2_ref,
                          g2_ref, be2_ref,
                          w1_ref, bf1_ref, w2_ref, bf2_ref, g3_ref, be3_ref,
                          o_ref, scr_ref,
                          *, bt, L, S, n_heads, scale, eps):
    D = x_ref.shape[-1]
    x = x_ref[...]                                     # (bt*L, D) f32
    c = cross_ref[...]                                 # (bt*S, D) f32

    # ---- self-attention + residual + LayerNorm1 --------------------------------
    qkv = jnp.dot(x.astype(jnp.bfloat16), wqkv_ref[...],
                  preferred_element_type=jnp.float32) + bqkv_ref[...]   # (bt*L, 3D)
    _sdpa_to_scratch(qkv[:, :D], qkv[:, D:2 * D], qkv[:, 2 * D:], scr_ref,
                     bt=bt, L=L, S=L, n_heads=n_heads, scale=scale)
    attn1 = jnp.dot(scr_ref[...].astype(jnp.bfloat16), wo1_ref[...],
                    preferred_element_type=jnp.float32) + bo1_ref[...]
    x1 = _layernorm(x + attn1, g1_ref[...], be1_ref[...], eps)

    # ---- cross-attention + residual + LayerNorm2 -------------------------------
    q = jnp.dot(x1.astype(jnp.bfloat16), wq_ref[...],
                preferred_element_type=jnp.float32) + bq_ref[...]       # (bt*L, D)
    kv = jnp.dot(c.astype(jnp.bfloat16), wkv_ref[...],
                 preferred_element_type=jnp.float32) + bkv_ref[...]     # (bt*S, 2D)
    _sdpa_to_scratch(q, kv[:, :D], kv[:, D:], scr_ref,
                     bt=bt, L=L, S=S, n_heads=n_heads, scale=scale)
    attn2 = jnp.dot(scr_ref[...].astype(jnp.bfloat16), wo2_ref[...],
                    preferred_element_type=jnp.float32) + bo2_ref[...]
    x2 = _layernorm(x1 + attn2, g2_ref[...], be2_ref[...], eps)

    # ---- position-wise FFN (Conv1d k=1 == per-token Linear) + LayerNorm3 -------
    h = jnp.dot(x2.astype(jnp.bfloat16), w1_ref[...],
                preferred_element_type=jnp.float32) + bf1_ref[...]
    h = jnp.maximum(h, 0.0)                            # activation='relu'
    y = jnp.dot(h.astype(jnp.bfloat16), w2_ref[...],
                preferred_element_type=jnp.float32) + bf2_ref[...]
    o_ref[...] = _layernorm(x2 + y, g3_ref[...], be3_ref[...], eps).astype(o_ref.dtype)


# ---------------------------------------------------------------------------
# Wrapper (pallas_call setup)
# ---------------------------------------------------------------------------

def _choose_batch_tile(B, L, S, target_rows=256, max_rows=2048):
    """Largest divisor Bt of B with Bt*max(L,S) <= max_rows, stopping once the
    projection M-dim (Bt*L) fills the MXU (>= target_rows).  Only Bt values that
    keep (Bt*L, D)/(Bt*S, D) legal block shapes are accepted."""
    def ok(bt):
        return bt == B or ((bt * L) % 8 == 0 and (bt * S) % 8 == 0)
    best = None
    for bt in range(1, B + 1):
        if B % bt != 0 or not ok(bt):
            continue
        if best is not None and bt * max(L, S) > max_rows:
            break
        best = bt
        if bt * L >= target_rows:
            break
    return best if best is not None else B


def decoder_layer(x, cross, params):
    """Forward of DecoderLayer (eval mode: dropout = identity).

    x: (B, L, D), cross: (B, S, D) -> (B, L, D)
    """
    B, L, D = x.shape
    S = cross.shape[1]
    H = params["n_heads"]
    DFF = params["w1"].shape[1]
    scale = 1.0 / math.sqrt(D // H)

    bt = _choose_batch_tile(B, L, S)
    grid = (B // bt,)

    # Flatten tokens outside the kernel (free XLA reshape) -> lane-dense 2D blocks.
    x2d = x.reshape(B * L, D)
    c2d = cross.reshape(B * S, D)

    kern = functools.partial(_decoder_layer_kernel,
                             bt=bt, L=L, S=S, n_heads=H, scale=scale, eps=_EPS)

    def mat(r, c_):      # weight block, resident across the whole grid
        return pl.BlockSpec((r, c_), lambda i: (0, 0))

    def row(n):          # bias / LN-param block
        return pl.BlockSpec((1, n), lambda i: (0, 0))

    out2d = pl.pallas_call(
        kern,
        out_shape=jax.ShapeDtypeStruct((B * L, D), jnp.float32),
        grid=grid,
        in_specs=[
            pl.BlockSpec((bt * L, D), lambda i: (i, 0)),     # x tokens
            pl.BlockSpec((bt * S, D), lambda i: (i, 0)),     # cross tokens
            mat(D, 3 * D), row(3 * D), mat(D, D), row(D), row(D), row(D),   # self-attn
            mat(D, D), row(D), mat(D, 2 * D), row(2 * D),                   # cross-attn
            mat(D, D), row(D), row(D), row(D),
            mat(D, DFF), row(DFF), mat(DFF, D), row(D), row(D), row(D),     # FFN
        ],
        out_specs=pl.BlockSpec((bt * L, D), lambda i: (i, 0)),
        scratch_shapes=[pltpu.VMEM((bt * L, D), jnp.float32)],   # per-head output slab
        compiler_params=pltpu.CompilerParams(
            dimension_semantics=("parallel",),
            vmem_limit_bytes=_vmem_limit_bytes()),
    )(x2d, c2d,
      params["wqkv"], params["bqkv"].reshape(1, 3 * D),
      params["wo1"], params["bo1"].reshape(1, D),
      params["ln1_g"].reshape(1, D), params["ln1_b"].reshape(1, D),
      params["wq"], params["bq"].reshape(1, D),
      params["wkv"], params["bkv"].reshape(1, 2 * D),
      params["wo2"], params["bo2"].reshape(1, D),
      params["ln2_g"].reshape(1, D), params["ln2_b"].reshape(1, D),
      params["w1"], params["b1"].reshape(1, DFF),
      params["w2"], params["b2"].reshape(1, D),
      params["ln3_g"].reshape(1, D), params["ln3_b"].reshape(1, D))

    return out2d.reshape(B, L, D)


# ---------------------------------------------------------------------------
# Deterministic parameter init (weights stored bf16 for MXU / HBM traffic)
# ---------------------------------------------------------------------------

def init_params(key, D, H, DFF):
    ks = jax.random.split(key, 20)
    s = 0.05

    def nrm(k, shape):
        return s * jax.random.normal(k, shape, jnp.float32)

    wq, wk, wv, wo = (nrm(ks[i], (D, D)) for i in range(4))
    bq, bk, bv, bo = (nrm(ks[4 + i], (D,)) for i in range(4))
    cwq, cwk, cwv, cwo = (nrm(ks[8 + i], (D, D)) for i in range(4))
    cbq, cbk, cbv, cbo = (nrm(ks[12 + i], (D,)) for i in range(4))
    return {
        "n_heads": H,
        # self-attention (fused QKV projection)
        "wqkv": jnp.concatenate([wq, wk, wv], axis=1).astype(jnp.bfloat16),
        "bqkv": jnp.concatenate([bq, bk, bv]),
        "wo1": wo.astype(jnp.bfloat16), "bo1": bo,
        "ln1_g": jnp.ones((D,), jnp.float32), "ln1_b": jnp.zeros((D,), jnp.float32),
        # cross-attention (fused KV projection)
        "wq": cwq.astype(jnp.bfloat16), "bq": cbq,
        "wkv": jnp.concatenate([cwk, cwv], axis=1).astype(jnp.bfloat16),
        "bkv": jnp.concatenate([cbk, cbv]),
        "wo2": cwo.astype(jnp.bfloat16), "bo2": cbo,
        "ln2_g": jnp.ones((D,), jnp.float32), "ln2_b": jnp.zeros((D,), jnp.float32),
        # conv1: Conv1d(D, DFF, k=1) == Linear(D, DFF); conv2: Conv1d(DFF, D, k=1)
        "w1": nrm(ks[16], (D, DFF)).astype(jnp.bfloat16), "b1": nrm(ks[17], (DFF,)),
        "w2": nrm(ks[18], (DFF, D)).astype(jnp.bfloat16), "b2": nrm(ks[19], (D,)),
        "ln3_g": jnp.ones((D,), jnp.float32), "ln3_b": jnp.zeros((D,), jnp.float32),
    }


# ---------------------------------------------------------------------------
# Pure-JAX reference (f32, same weights) for a loose correctness check
# ---------------------------------------------------------------------------

def _reference(x, cross, params):
    def ln(z, g, b):
        m = z.mean(-1, keepdims=True)
        v = ((z - m) ** 2).mean(-1, keepdims=True)
        return (z - m) / jnp.sqrt(v + _EPS) * g + b

    def attn(q, k, v, H):
        B, L, D = q.shape
        S = k.shape[1]
        Dh = D // H
        qh = q.reshape(B, L, H, Dh).transpose(0, 2, 1, 3)
        kh = k.reshape(B, S, H, Dh).transpose(0, 2, 1, 3)
        vh = v.reshape(B, S, H, Dh).transpose(0, 2, 1, 3)
        s = jnp.einsum('bhld,bhsd->bhls', qh, kh) / math.sqrt(Dh)
        p = jax.nn.softmax(s, axis=-1)
        o = jnp.einsum('bhls,bhsd->bhld', p, vh)
        return o.transpose(0, 2, 1, 3).reshape(B, L, D)

    p = params
    H = p["n_heads"]
    D = x.shape[-1]
    f = lambda w: w.astype(jnp.float32)
    qkv = x @ f(p["wqkv"]) + p["bqkv"]
    a1 = attn(qkv[..., :D], qkv[..., D:2 * D], qkv[..., 2 * D:], H) @ f(p["wo1"]) + p["bo1"]
    x1 = ln(x + a1, p["ln1_g"], p["ln1_b"])
    q = x1 @ f(p["wq"]) + p["bq"]
    kv = cross @ f(p["wkv"]) + p["bkv"]
    a2 = attn(q, kv[..., :D], kv[..., D:], H) @ f(p["wo2"]) + p["bo2"]
    x2 = ln(x1 + a2, p["ln2_g"], p["ln2_b"])
    h = jax.nn.relu(x2 @ f(p["w1"]) + p["b1"])
    y = h @ f(p["w2"]) + p["b2"]
    return ln(x2 + y, p["ln3_g"], p["ln3_b"])


if __name__ == "__main__":
    B, L, S, D, H, DFF = 2, 8, 8, 32, 4, 64

    key = jax.random.PRNGKey(0)
    kp, kx, kc = jax.random.split(key, 3)
    params = init_params(kp, D, H, DFF)

    x = jax.random.normal(kx, (B, L, D), jnp.float32)
    cross = jax.random.normal(kc, (B, S, D), jnp.float32)

    out = jax.block_until_ready(decoder_layer(x, cross, params))
    ref = jax.block_until_ready(_reference(x, cross, params))

    assert out.shape == (B, L, D)
    assert bool(jnp.all(jnp.isfinite(out)))
    err = float(jnp.max(jnp.abs(out - ref)))
    assert err < 1e-1, f"max abs err vs f32 reference: {err}"  # bf16 weights + approx recip
    print("KERNEL_OK")
</pallas_src>

<mosaic_0001>
module attributes {stable_mosaic.version = 11 : i64} {
  func.func @_decoder_layer_kernel(%arg0: i32, %arg1: memref<16x32xf32, #tpu.memory_space<vmem>>, %arg2: memref<16x32xf32, #tpu.memory_space<vmem>>, %arg3: memref<32x96xbf16, #tpu.memory_space<vmem>>, %arg4: memref<1x96xf32, #tpu.memory_space<vmem>>, %arg5: memref<32x32xbf16, #tpu.memory_space<vmem>>, %arg6: memref<1x32xf32, #tpu.memory_space<vmem>>, %arg7: memref<1x32xf32, #tpu.memory_space<vmem>>, %arg8: memref<1x32xf32, #tpu.memory_space<vmem>>, %arg9: memref<32x32xbf16, #tpu.memory_space<vmem>>, %arg10: memref<1x32xf32, #tpu.memory_space<vmem>>, %arg11: memref<32x64xbf16, #tpu.memory_space<vmem>>, %arg12: memref<1x64xf32, #tpu.memory_space<vmem>>, %arg13: memref<32x32xbf16, #tpu.memory_space<vmem>>, %arg14: memref<1x32xf32, #tpu.memory_space<vmem>>, %arg15: memref<1x32xf32, #tpu.memory_space<vmem>>, %arg16: memref<1x32xf32, #tpu.memory_space<vmem>>, %arg17: memref<32x64xbf16, #tpu.memory_space<vmem>>, %arg18: memref<1x64xf32, #tpu.memory_space<vmem>>, %arg19: memref<64x32xbf16, #tpu.memory_space<vmem>>, %arg20: memref<1x32xf32, #tpu.memory_space<vmem>>, %arg21: memref<1x32xf32, #tpu.memory_space<vmem>>, %arg22: memref<1x32xf32, #tpu.memory_space<vmem>>, %arg23: memref<16x32xf32, #tpu.memory_space<vmem>>, %arg24: memref<16x32xf32, #tpu.memory_space<vmem>>) attributes {dimension_semantics = [#tpu.dimension_semantics<parallel>], iteration_bounds = array<i64: 1>, scalar_prefetch = 0 : i64, scratch_operands = 1 : i64, tpu.core_type = #tpu.core_type<tc>, window_params = [{transform_indices = @transform_0, window_bounds = array<i64: 16, 32>}, {transform_indices = @transform_1, window_bounds = array<i64: 16, 32>}, {pipeline_mode = #tpu.pipeline_mode<synchronous>, transform_indices = @transform_2, window_bounds = array<i64: 32, 96>}, {pipeline_mode = #tpu.pipeline_mode<synchronous>, transform_indices = @transform_3, window_bounds = array<i64: 1, 96>}, {pipeline_mode = #tpu.pipeline_mode<synchronous>, transform_indices = @transform_4, window_bounds = array<i64: 32, 32>}, {pipeline_mode = #tpu.pipeline_mode<synchronous>, transform_indices = @transform_5, window_bounds = array<i64: 1, 32>}, {pipeline_mode = #tpu.pipeline_mode<synchronous>, transform_indices = @transform_6, window_bounds = array<i64: 1, 32>}, {pipeline_mode = #tpu.pipeline_mode<synchronous>, transform_indices = @transform_7, window_bounds = array<i64: 1, 32>}, {pipeline_mode = #tpu.pipeline_mode<synchronous>, transform_indices = @transform_8, window_bounds = array<i64: 32, 32>}, {pipeline_mode = #tpu.pipeline_mode<synchronous>, transform_indices = @transform_9, window_bounds = array<i64: 1, 32>}, {pipeline_mode = #tpu.pipeline_mode<synchronous>, transform_indices = @transform_10, window_bounds = array<i64: 32, 64>}, {pipeline_mode = #tpu.pipeline_mode<synchronous>, transform_indices = @transform_11, window_bounds = array<i64: 1, 64>}, {pipeline_mode = #tpu.pipeline_mode<synchronous>, transform_indices = @transform_12, window_bounds = array<i64: 32, 32>}, {pipeline_mode = #tpu.pipeline_mode<synchronous>, transform_indices = @transform_13, window_bounds = array<i64: 1, 32>}, {pipeline_mode = #tpu.pipeline_mode<synchronous>, transform_indices = @transform_14, window_bounds = array<i64: 1, 32>}, {pipeline_mode = #tpu.pipeline_mode<synchronous>, transform_indices = @transform_15, window_bounds = array<i64: 1, 32>}, {pipeline_mode = #tpu.pipeline_mode<synchronous>, transform_indices = @transform_16, window_bounds = array<i64: 32, 64>}, {pipeline_mode = #tpu.pipeline_mode<synchronous>, transform_indices = @transform_17, window_bounds = array<i64: 1, 64>}, {pipeline_mode = #tpu.pipeline_mode<synchronous>, transform_indices = @transform_18, window_bounds = array<i64: 64, 32>}, {pipeline_mode = #tpu.pipeline_mode<synchronous>, transform_indices = @transform_19, window_bounds = array<i64: 1, 32>}, {pipeline_mode = #tpu.pipeline_mode<synchronous>, transform_indices = @transform_20, window_bounds = array<i64: 1, 32>}, {pipeline_mode = #tpu.pipeline_mode<synchronous>, transform_indices = @transform_21, window_bounds = array<i64: 1, 32>}, {transform_indices = @transform_22, window_bounds = array<i64: 16, 32>}]} {
    %c0 = arith.constant 0 : index
    %c0_0 = arith.constant 0 : index
    %0 = vector.load %arg1[%c0, %c0_0] : memref<16x32xf32, #tpu.memory_space<vmem>>, vector<16x32xf32>
    %c0_1 = arith.constant 0 : index
    %c0_2 = arith.constant 0 : index
    %1 = vector.load %arg2[%c0_1, %c0_2] : memref<16x32xf32, #tpu.memory_space<vmem>>, vector<16x32xf32>
    %2 = arith.truncf %0 : vector<16x32xf32> to vector<16x32xbf16>
    %c0_3 = arith.constant 0 : index
    %c0_4 = arith.constant 0 : index
    %3 = vector.load %arg3[%c0_3, %c0_4] : memref<32x96xbf16, #tpu.memory_space<vmem>>, vector<32x96xbf16>
    %cst = arith.constant dense<0.000000e+00> : vector<16x96xf32>
    %4 = tpu.matmul %2, %3, %cst {dimension_numbers = #tpu.dot_dimension_numbers<[1], [0], [0], [1], [0, 0, 1, 1], [], []>} : vector<16x32xbf16>, vector<32x96xbf16>, vector<16x96xf32> -> vector<16x96xf32>
    %c0_5 = arith.constant 0 : index
    %c0_6 = arith.constant 0 : index
    %5 = vector.load %arg4[%c0_5, %c0_6] : memref<1x96xf32, #tpu.memory_space<vmem>>, vector<1x96xf32>
    %6 = vector.broadcast %5 : vector<1x96xf32> to vector<16x96xf32>
    %7 = arith.addf %4, %6 : vector<16x96xf32>
    %8 = vector.extract_strided_slice %7 {offsets = [0, 0], sizes = [16, 32], strides = [1, 1]} : vector<16x96xf32> to vector<16x32xf32>
    %9 = vector.extract_strided_slice %7 {offsets = [0, 32], sizes = [16, 32], strides = [1, 1]} : vector<16x96xf32> to vector<16x32xf32>
    %10 = vector.extract_strided_slice %7 {offsets = [0, 64], sizes = [16, 32], strides = [1, 1]} : vector<16x96xf32> to vector<16x32xf32>
    %11 = vector.extract_strided_slice %8 {offsets = [0, 0], sizes = [8, 8], strides = [1, 1]} : vector<16x32xf32> to vector<8x8xf32>
    %cst_7 = arith.constant 0.353553385 : f32
    %12 = vector.broadcast %cst_7 : f32 to vector<8x8xf32>
    %13 = arith.mulf %11, %12 : vector<8x8xf32>
    %14 = arith.truncf %13 : vector<8x8xf32> to vector<8x8xbf16>
    %15 = vector.extract_strided_slice %9 {offsets = [0, 0], sizes = [8, 8], strides = [1, 1]} : vector<16x32xf32> to vector<8x8xf32>
    %16 = arith.truncf %15 : vector<8x8xf32> to vector<8x8xbf16>
    %17 = vector.extract_strided_slice %10 {offsets = [0, 0], sizes = [8, 8], strides = [1, 1]} : vector<16x32xf32> to vector<8x8xf32>
    %18 = arith.truncf %17 : vector<8x8xf32> to vector<8x8xbf16>
    %cst_8 = arith.constant dense<0.000000e+00> : vector<8x8xf32>
    %19 = tpu.matmul %14, %16, %cst_8 {dimension_numbers = #tpu.dot_dimension_numbers<[1], [1], [0], [0], [0, 0, 1, 0], [], []>} : vector<8x8xbf16>, vector<8x8xbf16>, vector<8x8xf32> -> vector<8x8xf32>
    %cst_9 = arith.constant dense<0xFF800000> : vector<8xf32>
    %20 = vector.multi_reduction <maximumf>, %19, %cst_9 [1] : vector<8x8xf32> to vector<8xf32>
    %21 = vector.shape_cast %20 : vector<8xf32> to vector<8x1xf32>
    %22 = vector.broadcast %21 : vector<8x1xf32> to vector<8x8xf32>
    %23 = arith.subf %19, %22 : vector<8x8xf32>
    %24 = math.exp %23 : vector<8x8xf32>
    %cst_10 = arith.constant dense<0.000000e+00> : vector<8xf32>
    %25 = vector.multi_reduction <add>, %24, %cst_10 [1] : vector<8x8xf32> to vector<8xf32>
    %26 = vector.shape_cast %25 : vector<8xf32> to vector<8x1xf32>
    %27 = tpu.reciprocal %26 {approx = true} : vector<8x1xf32> -> vector<8x1xf32>
    %28 = vector.broadcast %27 : vector<8x1xf32> to vector<8x8xf32>
    %29 = arith.mulf %24, %28 : vector<8x8xf32>
    %30 = arith.truncf %29 : vector<8x8xf32> to vector<8x8xbf16>
    %cst_11 = arith.constant dense<0.000000e+00> : vector<8x8xf32>
    %31 = tpu.matmul %30, %18, %cst_11 {dimension_numbers = #tpu.dot_dimension_numbers<[1], [0], [0], [1], [0, 0, 1, 1], [], []>} : vector<8x8xbf16>, vector<8x8xbf16>, vector<8x8xf32> -> vector<8x8xf32>
    %c0_12 = arith.constant 0 : index
    %c0_13 = arith.constant 0 : index
    %32 = vector.load %arg24[%c0_12, %c0_13] : memref<16x32xf32, #tpu.memory_space<vmem>>, vector<8x8xf32>
    tpu.vector_store %arg24[%c0_12, %c0_13], %31 {strides = array<i32>} : memref<16x32xf32, #tpu.memory_space<vmem>>, vector<8x8xf32>,
    %33 = vector.extract_strided_slice %8 {offsets = [0, 8], sizes = [8, 8], strides = [1, 1]} : vector<16x32xf32> to vector<8x8xf32>
    %cst_14 = arith.constant 0.353553385 : f32
    %34 = vector.broadcast %cst_14 : f32 to vector<8x8xf32>
    %35 = arith.mulf %33, %34 : vector<8x8xf32>
    %36 = arith.truncf %35 : vector<8x8xf32> to vector<8x8xbf16>
    %37 = vector.extract_strided_slice %9 {offsets = [0, 8], sizes = [8, 8], strides = [1, 1]} : vector<16x32xf32> to vector<8x8xf32>
    %38 = arith.truncf %37 : vector<8x8xf32> to vector<8x8xbf16>
    %39 = vector.extract_strided_slice %10 {offsets = [0, 8], sizes = [8, 8], strides = [1, 1]} : vector<16x32xf32> to vector<8x8xf32>
    %40 = arith.truncf %39 : vector<8x8xf32> to vector<8x8xbf16>
    %cst_15 = arith.constant dense<0.000000e+00> : vector<8x8xf32>
    %41 = tpu.matmul %36, %38, %cst_15 {dimension_numbers = #tpu.dot_dimension_numbers<[1], [1], [0], [0], [0, 0, 1, 0], [], []>} : vector<8x8xbf16>, vector<8x8xbf16>, vector<8x8xf32> -> vector<8x8xf32>
    %cst_16 = arith.constant dense<0xFF800000> : vector<8xf32>
    %42 = vector.multi_reduction <maximumf>, %41, %cst_16 [1] : vector<8x8xf32> to vector<8xf32>
    %43 = vector.shape_cast %42 : vector<8xf32> to vector<8x1xf32>
    %44 = vector.broadcast %43 : vector<8x1xf32> to vector<8x8xf32>
    %45 = arith.subf %41, %44 : vector<8x8xf32>
    %46 = math.exp %45 : vector<8x8xf32>
    %cst_17 = arith.constant dense<0.000000e+00> : vector<8xf32>
    %47 = vector.multi_reduction <add>, %46, %cst_17 [1] : vector<8x8xf32> to vector<8xf32>
    %48 = vector.shape_cast %47 : vector<8xf32> to vector<8x1xf32>
    %49 = tpu.reciprocal %48 {approx = true} : vector<8x1xf32> -> vector<8x1xf32>
    %50 = vector.broadcast %49 : vector<8x1xf32> to vector<8x8xf32>
    %51 = arith.mulf %46, %50 : vector<8x8xf32>
    %52 = arith.truncf %51 : vector<8x8xf32> to vector<8x8xbf16>
    %cst_18 = arith.constant dense<0.000000e+00> : vector<8x8xf32>
    %53 = tpu.matmul %52, %40, %cst_18 {dimension_numbers = #tpu.dot_dimension_numbers<[1], [0], [0], [1], [0, 0, 1, 1], [], []>} : vector<8x8xbf16>, vector<8x8xbf16>, vector<8x8xf32> -> vector<8x8xf32>
    %c0_19 = arith.constant 0 : index
    %c8 = arith.constant 8 : index
    %54 = vector.load %arg24[%c0_19, %c8] : memref<16x32xf32, #tpu.memory_space<vmem>>, vector<8x8xf32>
    tpu.vector_store %arg24[%c0_19, %c8], %53 {strides = array<i32>} : memref<16x32xf32, #tpu.memory_space<vmem>>, vector<8x8xf32>,
    %55 = vector.extract_strided_slice %8 {offsets = [0, 16], sizes = [8, 8], strides = [1, 1]} : vector<16x32xf32> to vector<8x8xf32>
    %cst_20 = arith.constant 0.353553385 : f32
    %56 = vector.broadcast %cst_20 : f32 to vector<8x8xf32>
    %57 = arith.mulf %55, %56 : vector<8x8xf32>
    %58 = arith.truncf %57 : vector<8x8xf32> to vector<8x8xbf16>
    %59 = vector.extract_strided_slice %9 {offsets = [0, 16], sizes = [8, 8], strides = [1, 1]} : vector<16x32xf32> to vector<8x8xf32>
    %60 = arith.truncf %59 : vector<8x8xf32> to vector<8x8xbf16>
    %61 = vector.extract_strided_slice %10 {offsets = [0, 16], sizes = [8, 8], strides = [1, 1]} : vector<16x32xf32> to vector<8x8xf32>
    %62 = arith.truncf %61 : vector<8x8xf32> to vector<8x8xbf16>
    %cst_21 = arith.constant dense<0.000000e+00> : vector<8x8xf32>
    %63 = tpu.matmul %58, %60, %cst_21 {dimension_numbers = #tpu.dot_dimension_numbers<[1], [1], [0], [0], [0, 0, 1, 0], [], []>} : vector<8x8xbf16>, vector<8x8xbf16>, vector<8x8xf32> -> vector<8x8xf32>
    %cst_22 = arith.constant dense<0xFF800000> : vector<8xf32>
    %64 = vector.multi_reduction <maximumf>, %63, %cst_22 [1] : vector<8x8xf32> to vector<8xf32>
    %65 = vector.shape_cast %64 : vector<8xf32> to vector<8x1xf32>
    %66 = vector.broadcast %65 : vector<8x1xf32> to vector<8x8xf32>
    %67 = arith.subf %63, %66 : vector<8x8xf32>
    %68 = math.exp %67 : vector<8x8xf32>
    %cst_23 = arith.constant dense<0.000000e+00> : vector<8xf32>
    %69 = vector.multi_reduction <add>, %68, %cst_23 [1] : vector<8x8xf32> to vector<8xf32>
    %70 = vector.shape_cast %69 : vector<8xf32> to vector<8x1xf32>
    %71 = tpu.reciprocal %70 {approx = true} : vector<8x1xf32> -> vector<8x1xf32>
    %72 = vector.broadcast %71 : vector<8x1xf32> to vector<8x8xf32>
    %73 = arith.mulf %68, %72 : vector<8x8xf32>
    %74 = arith.truncf %73 : vector<8x8xf32> to vector<8x8xbf16>
    %cst_24 = arith.constant dense<0.000000e+00> : vector<8x8xf32>
    %75 = tpu.matmul %74, %62, %cst_24 {dimension_numbers = #tpu.dot_dimension_numbers<[1], [0], [0], [1], [0, 0, 1, 1], [], []>} : vector<8x8xbf16>, vector<8x8xbf16>, vector<8x8xf32> -> vector<8x8xf32>
    %c0_25 = arith.constant 0 : index
    %c16 = arith.constant 16 : index
    %76 = vector.load %arg24[%c0_25, %c16] : memref<16x32xf32, #tpu.memory_space<vmem>>, vector<8x8xf32>
    tpu.vector_store %arg24[%c0_25, %c16], %75 {strides = array<i32>} : memref<16x32xf32, #tpu.memory_space<vmem>>, vector<8x8xf32>,
    %77 = vector.extract_strided_slice %8 {offsets = [0, 24], sizes = [8, 8], strides = [1, 1]} : vector<16x32xf32> to vector<8x8xf32>
    %cst_26 = arith.constant 0.353553385 : f32
    %78 = vector.broadcast %cst_26 : f32 to vector<8x8xf32>
    %79 = arith.mulf %77, %78 : vector<8x8xf32>
    %80 = arith.truncf %79 : vector<8x8xf32> to vector<8x8xbf16>
    %81 = vector.extract_strided_slice %9 {offsets = [0, 24], sizes = [8, 8], strides = [1, 1]} : vector<16x32xf32> to vector<8x8xf32>
    %82 = arith.truncf %81 : vector<8x8xf32> to vector<8x8xbf16>
    %83 = vector.extract_strided_slice %10 {offsets = [0, 24], sizes = [8, 8], strides = [1, 1]} : vector<16x32xf32> to vector<8x8xf32>
    %84 = arith.truncf %83 : vector<8x8xf32> to vector<8x8xbf16>
    %cst_27 = arith.constant dense<0.000000e+00> : vector<8x8xf32>
    %85 = tpu.matmul %80, %82, %cst_27 {dimension_numbers = #tpu.dot_dimension_numbers<[1], [1], [0], [0], [0, 0, 1, 0], [], []>} : vector<8x8xbf16>, vector<8x8xbf16>, vector<8x8xf32> -> vector<8x8xf32>
    %cst_28 = arith.constant dense<0xFF800000> : vector<8xf32>
    %86 = vector.multi_reduction <maximumf>, %85, %cst_28 [1] : vector<8x8xf32> to vector<8xf32>
    %87 = vector.shape_cast %86 : vector<8xf32> to vector<8x1xf32>
    %88 = vector.broadcast %87 : vector<8x1xf32> to vector<8x8xf32>
    %89 = arith.subf %85, %88 : vector<8x8xf32>
    %90 = math.exp %89 : vector<8x8xf32>
    %cst_29 = arith.constant dense<0.000000e+00> : vector<8xf32>
    %91 = vector.multi_reduction <add>, %90, %cst_29 [1] : vector<8x8xf32> to vector<8xf32>
    %92 = vector.shape_cast %91 : vector<8xf32> to vector<8x1xf32>
    %93 = tpu.reciprocal %92 {approx = true} : vector<8x1xf32> -> vector<8x1xf32>
    %94 = vector.broadcast %93 : vector<8x1xf32> to vector<8x8xf32>
    %95 = arith.mulf %90, %94 : vector<8x8xf32>
    %96 = arith.truncf %95 : vector<8x8xf32> to vector<8x8xbf16>
    %cst_30 = arith.constant dense<0.000000e+00> : vector<8x8xf32>
    %97 = tpu.matmul %96, %84, %cst_30 {dimension_numbers = #tpu.dot_dimension_numbers<[1], [0], [0], [1], [0, 0, 1, 1], [], []>} : vector<8x8xbf16>, vector<8x8xbf16>, vector<8x8xf32> -> vector<8x8xf32>
    %c0_31 = arith.constant 0 : index
    %c24 = arith.constant 24 : index
    %98 = vector.load %arg24[%c0_31, %c24] : memref<16x32xf32, #tpu.memory_space<vmem>>, vector<8x8xf32>
    tpu.vector_store %arg24[%c0_31, %c24], %97 {strides = array<i32>} : memref<16x32xf32, #tpu.memory_space<vmem>>, vector<8x8xf32>,
    %99 = vector.extract_strided_slice %8 {offsets = [8, 0], sizes = [8, 8], strides = [1, 1]} : vector<16x32xf32> to vector<8x8xf32>
    %cst_32 = arith.constant 0.353553385 : f32
    %100 = vector.broadcast %cst_32 : f32 to vector<8x8xf32>
    %101 = arith.mulf %99, %100 : vector<8x8xf32>
    %102 = arith.truncf %101 : vector<8x8xf32> to vector<8x8xbf16>
    %103 = vector.extract_strided_slice %9 {offsets = [8, 0], sizes = [8, 8], strides = [1, 1]} : vector<16x32xf32> to vector<8x8xf32>
    %104 = arith.truncf %103 : vector<8x8xf32> to vector<8x8xbf16>
    %105 = vector.extract_strided_slice %10 {offsets = [8, 0], sizes = [8, 8], strides = [1, 1]} : vector<16x32xf32> to vector<8x8xf32>
    %106 = arith.truncf %105 : vector<8x8xf32> to vector<8x8xbf16>
    %cst_33 = arith.constant dense<0.000000e+00> : vector<8x8xf32>
    %107 = tpu.matmul %102, %104, %cst_33 {dimension_numbers = #tpu.dot_dimension_numbers<[1], [1], [0], [0], [0, 0, 1, 0], [], []>} : vector<8x8xbf16>, vector<8x8xbf16>, vector<8x8xf32> -> vector<8x8xf32>
    %cst_34 = arith.constant dense<0xFF800000> : vector<8xf32>
    %108 = vector.multi_reduction <maximumf>, %107, %cst_34 [1] : vector<8x8xf32> to vector<8xf32>
    %109 = vector.shape_cast %108 : vector<8xf32> to vector<8x1xf32>
    %110 = vector.broadcast %109 : vector<8x1xf32> to vector<8x8xf32>
    %111 = arith.subf %107, %110 : vector<8x8xf32>
    %112 = math.exp %111 : vector<8x8xf32>
    %cst_35 = arith.constant dense<0.000000e+00> : vector<8xf32>
    %113 = vector.multi_reduction <add>, %112, %cst_35 [1] : vector<8x8xf32> to vector<8xf32>
    %114 = vector.shape_cast %113 : vector<8xf32> to vector<8x1xf32>
    %115 = tpu.reciprocal %114 {approx = true} : vector<8x1xf32> -> vector<8x1xf32>
    %116 = vector.broadcast %115 : vector<8x1xf32> to vector<8x8xf32>
    %117 = arith.mulf %112, %116 : vector<8x8xf32>
    %118 = arith.truncf %117 : vector<8x8xf32> to vector<8x8xbf16>
    %cst_36 = arith.constant dense<0.000000e+00> : vector<8x8xf32>
    %119 = tpu.matmul %118, %106, %cst_36 {dimension_numbers = #tpu.dot_dimension_numbers<[1], [0], [0], [1], [0, 0, 1, 1], [], []>} : vector<8x8xbf16>, vector<8x8xbf16>, vector<8x8xf32> -> vector<8x8xf32>
    %c8_37 = arith.constant 8 : index
    %c0_38 = arith.constant 0 : index
    %120 = vector.load %arg24[%c8_37, %c0_38] : memref<16x32xf32, #tpu.memory_space<vmem>>, vector<8x8xf32>
    tpu.vector_store %arg24[%c8_37, %c0_38], %119 {strides = array<i32>} : memref<16x32xf32, #tpu.memory_space<vmem>>, vector<8x8xf32>,
    %121 = vector.extract_strided_slice %8 {offsets = [8, 8], sizes = [8, 8], strides = [1, 1]} : vector<16x32xf32> to vector<8x8xf32>
    %cst_39 = arith.constant 0.353553385 : f32
    %122 = vector.broadcast %cst_39 : f32 to vector<8x8xf32>
    %123 = arith.mulf %121, %122 : vector<8x8xf32>
    %124 = arith.truncf %123 : vector<8x8xf32> to vector<8x8xbf16>
    %125 = vector.extract_strided_slice %9 {offsets = [8, 8], sizes = [8, 8], strides = [1, 1]} : vector<16x32xf32> to vector<8x8xf32>
    %126 = arith.truncf %125 : vector<8x8xf32> to vector<8x8xbf16>
    %127 = vector.extract_strided_slice %10 {offsets = [8, 8], sizes = [8, 8], strides = [1, 1]} : vector<16x32xf32> to vector<8x8xf32>
    %128 = arith.truncf %127 : vector<8x8xf32> to vector<8x8xbf16>
    %cst_40 = arith.constant dense<0.000000e+00> : vector<8x8xf32>
    %129 = tpu.matmul %124, %126, %cst_40 {dimension_numbers = #tpu.dot_dimension_numbers<[1], [1], [0], [0], [0, 0, 1, 0], [], []>} : vector<8x8xbf16>, vector<8x8xbf16>, vector<8x8xf32> -> vector<8x8xf32>
    %cst_41 = arith.constant dense<0xFF800000> : vector<8xf32>
    %130 = vector.multi_reduction <maximumf>, %129, %cst_41 [1] : vector<8x8xf32> to vector<8xf32>
    %131 = vector.shape_cast %130 : vector<8xf32> to vector<8x1xf32>
    %132 = vector.broadcast %131 : vector<8x1xf32> to vector<8x8xf32>
    %133 = arith.subf %129, %132 : vector<8x8xf32>
    %134 = math.exp %133 : vector<8x8xf32>
    %cst_42 = arith.constant dense<0.000000e+00> : vector<8xf32>
    %135 = vector.multi_reduction <add>, %134, %cst_42 [1] : vector<8x8xf32> to vector<8xf32>
    %136 = vector.shape_cast %135 : vector<8xf32> to vector<8x1xf32>
    %137 = tpu.reciprocal %136 {approx = true} : vector<8x1xf32> -> vector<8x1xf32>
    %138 = vector.broadcast %137 : vector<8x1xf32> to vector<8x8xf32>
    %139 = arith.mulf %134, %138 : vector<8x8xf32>
    %140 = arith.truncf %139 : vector<8x8xf32> to vector<8x8xbf16>
    %cst_43 = arith.constant dense<0.000000e+00> : vector<8x8xf32>
    %141 = tpu.matmul %140, %128, %cst_43 {dimension_numbers = #tpu.dot_dimension_numbers<[1], [0], [0], [1], [0, 0, 1, 1], [], []>} : vector<8x8xbf16>, vector<8x8xbf16>, vector<8x8xf32> -> vector<8x8xf32>
    %c8_44 = arith.constant 8 : index
    %c8_45 = arith.constant 8 : index
    %142 = vector.load %arg24[%c8_44, %c8_45] : memref<16x32xf32, #tpu.memory_space<vmem>>, vector<8x8xf32>
    tpu.vector_store %arg24[%c8_44, %c8_45], %141 {strides = array<i32>} : memref<16x32xf32, #tpu.memory_space<vmem>>, vector<8x8xf32>,
    %143 = vector.extract_strided_slice %8 {offsets = [8, 16], sizes = [8, 8], strides = [1, 1]} : vector<16x32xf32> to vector<8x8xf32>
    %cst_46 = arith.constant 0.353553385 : f32
    %144 = vector.broadcast %cst_46 : f32 to vector<8x8xf32>
    %145 = arith.mulf %143, %144 : vector<8x8xf32>
    %146 = arith.truncf %145 : vector<8x8xf32> to vector<8x8xbf16>
    %147 = vector.extract_strided_slice %9 {offsets = [8, 16], sizes = [8, 8], strides = [1, 1]} : vector<16x32xf32> to vector<8x8xf32>
    %148 = arith.truncf %147 : vector<8x8xf32> to vector<8x8xbf16>
    %149 = vector.extract_strided_slice %10 {offsets = [8, 16], sizes = [8, 8], strides = [1, 1]} : vector<16x32xf32> to vector<8x8xf32>
    %150 = arith.truncf %149 : vector<8x8xf32> to vector<8x8xbf16>
    %cst_47 = arith.constant dense<0.000000e+00> : vector<8x8xf32>
    %151 = tpu.matmul %146, %148, %cst_47 {dimension_numbers = #tpu.dot_dimension_numbers<[1], [1], [0], [0], [0, 0, 1, 0], [], []>} : vector<8x8xbf16>, vector<8x8xbf16>, vector<8x8xf32> -> vector<8x8xf32>
    %cst_48 = arith.constant dense<0xFF800000> : vector<8xf32>
    %152 = vector.multi_reduction <maximumf>, %151, %cst_48 [1] : vector<8x8xf32> to vector<8xf32>
    %153 = vector.shape_cast %152 : vector<8xf32> to vector<8x1xf32>
    %154 = vector.broadcast %153 : vector<8x1xf32> to vector<8x8xf32>
    %155 = arith.subf %151, %154 : vector<8x8xf32>
    %156 = math.exp %155 : vector<8x8xf32>
    %cst_49 = arith.constant dense<0.000000e+00> : vector<8xf32>
    %157 = vector.multi_reduction <add>, %156, %cst_49 [1] : vector<8x8xf32> to vector<8xf32>
    %158 = vector.shape_cast %157 : vector<8xf32> to vector<8x1xf32>
    %159 = tpu.reciprocal %158 {approx = true} : vector<8x1xf32> -> vector<8x1xf32>
    %160 = vector.broadcast %159 : vector<8x1xf32> to vector<8x8xf32>
    %161 = arith.mulf %156, %160 : vector<8x8xf32>
    %162 = arith.truncf %161 : vector<8x8xf32> to vector<8x8xbf16>
    %cst_50 = arith.constant dense<0.000000e+00> : vector<8x8xf32>
    %163 = tpu.matmul %162, %150, %cst_50 {dimension_numbers = #tpu.dot_dimension_numbers<[1], [0], [0], [1], [0, 0, 1, 1], [], []>} : vector<8x8xbf16>, vector<8x8xbf16>, vector<8x8xf32> -> vector<8x8xf32>
    %c8_51 = arith.constant 8 : index
    %c16_52 = arith.constant 16 : index
    %164 = vector.load %arg24[%c8_51, %c16_52] : memref<16x32xf32, #tpu.memory_space<vmem>>, vector<8x8xf32>
    tpu.vector_store %arg24[%c8_51, %c16_52], %163 {strides = array<i32>} : memref<16x32xf32, #tpu.memory_space<vmem>>, vector<8x8xf32>,
    %165 = vector.extract_strided_slice %8 {offsets = [8, 24], sizes = [8, 8], strides = [1, 1]} : vector<16x32xf32> to vector<8x8xf32>
    %cst_53 = arith.constant 0.353553385 : f32
    %166 = vector.broadcast %cst_53 : f32 to vector<8x8xf32>
    %167 = arith.mulf %165, %166 : vector<8x8xf32>
    %168 = arith.truncf %167 : vector<8x8xf32> to vector<8x8xbf16>
    %169 = vector.extract_strided_slice %9 {offsets = [8, 24], sizes = [8, 8], strides = [1, 1]} : vector<16x32xf32> to vector<8x8xf32>
    %170 = arith.truncf %169 : vector<8x8xf32> to vector<8x8xbf16>
    %171 = vector.extract_strided_slice %10 {offsets = [8, 24], sizes = [8, 8], strides = [1, 1]} : vector<16x32xf32> to vector<8x8xf32>
    %172 = arith.truncf %171 : vector<8x8xf32> to vector<8x8xbf16>
    %cst_54 = arith.constant dense<0.000000e+00> : vector<8x8xf32>
    %173 = tpu.matmul %168, %170, %cst_54 {dimension_numbers = #tpu.dot_dimension_numbers<[1], [1], [0], [0], [0, 0, 1, 0], [], []>} : vector<8x8xbf16>, vector<8x8xbf16>, vector<8x8xf32> -> vector<8x8xf32>
    %cst_55 = arith.constant dense<0xFF800000> : vector<8xf32>
    %174 = vector.multi_reduction <maximumf>, %173, %cst_55 [1] : vector<8x8xf32> to vector<8xf32>
    %175 = vector.shape_cast %174 : vector<8xf32> to vector<8x1xf32>
    %176 = vector.broadcast %175 : vector<8x1xf32> to vector<8x8xf32>
    %177 = arith.subf %173, %176 : vector<8x8xf32>
    %178 = math.exp %177 : vector<8x8xf32>
    %cst_56 = arith.constant dense<0.000000e+00> : vector<8xf32>
    %179 = vector.multi_reduction <add>, %178, %cst_56 [1] : vector<8x8xf32> to vector<8xf32>
    %180 = vector.shape_cast %179 : vector<8xf32> to vector<8x1xf32>
    %181 = tpu.reciprocal %180 {approx = true} : vector<8x1xf32> -> vector<8x1xf32>
    %182 = vector.broadcast %181 : vector<8x1xf32> to vector<8x8xf32>
    %183 = arith.mulf %178, %182 : vector<8x8xf32>
    %184 = arith.truncf %183 : vector<8x8xf32> to vector<8x8xbf16>
    %cst_57 = arith.constant dense<0.000000e+00> : vector<8x8xf32>
    %185 = tpu.matmul %184, %172, %cst_57 {dimension_numbers = #tpu.dot_dimension_numbers<[1], [0], [0], [1], [0, 0, 1, 1], [], []>} : vector<8x8xbf16>, vector<8x8xbf16>, vector<8x8xf32> -> vector<8x8xf32>
    %c8_58 = arith.constant 8 : index
    %c24_59 = arith.constant 24 : index
    %186 = vector.load %arg24[%c8_58, %c24_59] : memref<16x32xf32, #tpu.memory_space<vmem>>, vector<8x8xf32>
    tpu.vector_store %arg24[%c8_58, %c24_59], %185 {strides = array<i32>} : memref<16x32xf32, #tpu.memory_space<vmem>>, vector<8x8xf32>,
    %c0_60 = arith.constant 0 : index
    %c0_61 = arith.constant 0 : index
    %187 = vector.load %arg24[%c0_60, %c0_61] : memref<16x32xf32, #tpu.memory_space<vmem>>, vector<16x32xf32>
    %188 = arith.truncf %187 : vector<16x32xf32> to vector<16x32xbf16>
    %c0_62 = arith.constant 0 : index
    %c0_63 = arith.constant 0 : index
    %189 = vector.load %arg5[%c0_62, %c0_63] : memref<32x32xbf16, #tpu.memory_space<vmem>>, vector<32x32xbf16>
    %cst_64 = arith.constant dense<0.000000e+00> : vector<16x32xf32>
    %190 = tpu.matmul %188, %189, %cst_64 {dimension_numbers = #tpu.dot_dimension_numbers<[1], [0], [0], [1], [0, 0, 1, 1], [], []>} : vector<16x32xbf16>, vector<32x32xbf16>, vector<16x32xf32> -> vector<16x32xf32>
    %c0_65 = arith.constant 0 : index
    %c0_66 = arith.constant 0 : index
    %191 = vector.load %arg6[%c0_65, %c0_66] : memref<1x32xf32, #tpu.memory_space<vmem>>, vector<1x32xf32>
    %192 = vector.broadcast %191 : vector<1x32xf32> to vector<16x32xf32>
    %193 = arith.addf %190, %192 : vector<16x32xf32>
    %194 = arith.addf %0, %193 : vector<16x32xf32>
    %c0_67 = arith.constant 0 : index
    %c0_68 = arith.constant 0 : index
    %195 = vector.load %arg7[%c0_67, %c0_68] : memref<1x32xf32, #tpu.memory_space<vmem>>, vector<1x32xf32>
    %c0_69 = arith.constant 0 : index
    %c0_70 = arith.constant 0 : index
    %196 = vector.load %arg8[%c0_69, %c0_70] : memref<1x32xf32, #tpu.memory_space<vmem>>, vector<1x32xf32>
    %cst_71 = arith.constant dense<0.000000e+00> : vector<16xf32>
    %197 = vector.multi_reduction <add>, %194, %cst_71 [1] : vector<16x32xf32> to vector<16xf32>
    %198 = vector.shape_cast %197 : vector<16xf32> to vector<16x1xf32>
    %cst_72 = arith.constant 3.200000e+01 : f32
    %199 = vector.broadcast %cst_72 : f32 to vector<16x1xf32>
    %200 = arith.divf %198, %199 : vector<16x1xf32>
    %201 = vector.broadcast %200 : vector<16x1xf32> to vector<16x32xf32>
    %202 = arith.subf %194, %201 : vector<16x32xf32>
    %203 = arith.mulf %202, %202 : vector<16x32xf32>
    %cst_73 = arith.constant dense<0.000000e+00> : vector<16xf32>
    %204 = vector.multi_reduction <add>, %203, %cst_73 [1] : vector<16x32xf32> to vector<16xf32>
    %205 = vector.shape_cast %204 : vector<16xf32> to vector<16x1xf32>
    %cst_74 = arith.constant 3.200000e+01 : f32
    %206 = vector.broadcast %cst_74 : f32 to vector<16x1xf32>
    %207 = arith.divf %205, %206 : vector<16x1xf32>
    %208 = vector.broadcast %200 : vector<16x1xf32> to vector<16x32xf32>
    %209 = arith.subf %194, %208 : vector<16x32xf32>
    %cst_75 = arith.constant 9.99999974E-6 : f32
    %210 = vector.broadcast %cst_75 : f32 to vector<16x1xf32>
    %211 = arith.addf %207, %210 : vector<16x1xf32>
    %212 = math.rsqrt %211 : vector<16x1xf32>
    %213 = vector.broadcast %212 : vector<16x1xf32> to vector<16x32xf32>
    %214 = arith.mulf %209, %213 : vector<16x32xf32>
    %215 = vector.broadcast %195 : vector<1x32xf32> to vector<16x32xf32>
    %216 = arith.mulf %214, %215 : vector<16x32xf32>
    %217 = vector.broadcast %196 : vector<1x32xf32> to vector<16x32xf32>
    %218 = arith.addf %216, %217 : vector<16x32xf32>
    %219 = arith.truncf %218 : vector<16x32xf32> to vector<16x32xbf16>
    %c0_76 = arith.constant 0 : index
    %c0_77 = arith.constant 0 : index
    %220 = vector.load %arg9[%c0_76, %c0_77] : memref<32x32xbf16, #tpu.memory_space<vmem>>, vector<32x32xbf16>
    %cst_78 = arith.constant dense<0.000000e+00> : vector<16x32xf32>
    %221 = tpu.matmul %219, %220, %cst_78 {dimension_numbers = #tpu.dot_dimension_numbers<[1], [0], [0], [1], [0, 0, 1, 1], [], []>} : vector<16x32xbf16>, vector<32x32xbf16>, vector<16x32xf32> -> vector<16x32xf32>
    %c0_79 = arith.constant 0 : index
    %c0_80 = arith.constant 0 : index
    %222 = vector.load %arg10[%c0_79, %c0_80] : memref<1x32xf32, #tpu.memory_space<vmem>>, vector<1x32xf32>
    %223 = vector.broadcast %222 : vector<1x32xf32> to vector<16x32xf32>
    %224 = arith.addf %221, %223 : vector<16x32xf32>
    %225 = arith.truncf %1 : vector<16x32xf32> to vector<16x32xbf16>
    %c0_81 = arith.constant 0 : index
    %c0_82 = arith.constant 0 : index
    %226 = vector.load %arg11[%c0_81, %c0_82] : memref<32x64xbf16, #tpu.memory_space<vmem>>, vector<32x64xbf16>
    %cst_83 = arith.constant dense<0.000000e+00> : vector<16x64xf32>
    %227 = tpu.matmul %225, %226, %cst_83 {dimension_numbers = #tpu.dot_dimension_numbers<[1], [0], [0], [1], [0, 0, 1, 1], [], []>} : vector<16x32xbf16>, vector<32x64xbf16>, vector<16x64xf32> -> vector<16x64xf32>
    %c0_84 = arith.constant 0 : index
    %c0_85 = arith.constant 0 : index
    %228 = vector.load %arg12[%c0_84, %c0_85] : memref<1x64xf32, #tpu.memory_space<vmem>>, vector<1x64xf32>
    %229 = vector.broadcast %228 : vector<1x64xf32> to vector<16x64xf32>
    %230 = arith.addf %227, %229 : vector<16x64xf32>
    %231 = vector.extract_strided_slice %230 {offsets = [0, 0], sizes = [16, 32], strides = [1, 1]} : vector<16x64xf32> to vector<16x32xf32>
    %232 = vector.extract_strided_slice %230 {offsets = [0, 32], sizes = [16, 32], strides = [1, 1]} : vector<16x64xf32> to vector<16x32xf32>
    %233 = vector.extract_strided_slice %224 {offsets = [0, 0], sizes = [8, 8], strides = [1, 1]} : vector<16x32xf32> to vector<8x8xf32>
    %cst_86 = arith.constant 0.353553385 : f32
    %234 = vector.broadcast %cst_86 : f32 to vector<8x8xf32>
    %235 = arith.mulf %233, %234 : vector<8x8xf32>
    %236 = arith.truncf %235 : vector<8x8xf32> to vector<8x8xbf16>
    %237 = vector.extract_strided_slice %231 {offsets = [0, 0], sizes = [8, 8], strides = [1, 1]} : vector<16x32xf32> to vector<8x8xf32>
    %238 = arith.truncf %237 : vector<8x8xf32> to vector<8x8xbf16>
    %239 = vector.extract_strided_slice %232 {offsets = [0, 0], sizes = [8, 8], strides = [1, 1]} : vector<16x32xf32> to vector<8x8xf32>
    %240 = arith.truncf %239 : vector<8x8xf32> to vector<8x8xbf16>
    %cst_87 = arith.constant dense<0.000000e+00> : vector<8x8xf32>
    %241 = tpu.matmul %236, %238, %cst_87 {dimension_numbers = #tpu.dot_dimension_numbers<[1], [1], [0], [0], [0, 0, 1, 0], [], []>} : vector<8x8xbf16>, vector<8x8xbf16>, vector<8x8xf32> -> vector<8x8xf32>
    %cst_88 = arith.constant dense<0xFF800000> : vector<8xf32>
    %242 = vector.multi_reduction <maximumf>, %241, %cst_88 [1] : vector<8x8xf32> to vector<8xf32>
    %243 = vector.shape_cast %242 : vector<8xf32> to vector<8x1xf32>
    %244 = vector.broadcast %243 : vector<8x1xf32> to vector<8x8xf32>
    %245 = arith.subf %241, %244 : vector<8x8xf32>
    %246 = math.exp %245 : vector<8x8xf32>
    %cst_89 = arith.constant dense<0.000000e+00> : vector<8xf32>
    %247 = vector.multi_reduction <add>, %246, %cst_89 [1] : vector<8x8xf32> to vector<8xf32>
    %248 = vector.shape_cast %247 : vector<8xf32> to vector<8x1xf32>
    %249 = tpu.reciprocal %248 {approx = true} : vector<8x1xf32> -> vector<8x1xf32>
    %250 = vector.broadcast %249 : vector<8x1xf32> to vector<8x8xf32>
    %251 = arith.mulf %246, %250 : vector<8x8xf32>
    %252 = arith.truncf %251 : vector<8x8xf32> to vector<8x8xbf16>
    %cst_90 = arith.constant dense<0.000000e+00> : vector<8x8xf32>
    %253 = tpu.matmul %252, %240, %cst_90 {dimension_numbers = #tpu.dot_dimension_numbers<[1], [0], [0], [1], [0, 0, 1, 1], [], []>} : vector<8x8xbf16>, vector<8x8xbf16>, vector<8x8xf32> -> vector<8x8xf32>
    %c0_91 = arith.constant 0 : index
    %c0_92 = arith.constant 0 : index
    %254 = vector.load %arg24[%c0_91, %c0_92] : memref<16x32xf32, #tpu.memory_space<vmem>>, vector<8x8xf32>
    tpu.vector_store %arg24[%c0_91, %c0_92], %253 {strides = array<i32>} : memref<16x32xf32, #tpu.memory_space<vmem>>, vector<8x8xf32>,
    %255 = vector.extract_strided_slice %224 {offsets = [0, 8], sizes = [8, 8], strides = [1, 1]} : vector<16x32xf32> to vector<8x8xf32>
    %cst_93 = arith.constant 0.353553385 : f32
    %256 = vector.broadcast %cst_93 : f32 to vector<8x8xf32>
    %257 = arith.mulf %255, %256 : vector<8x8xf32>
    %258 = arith.truncf %257 : vector<8x8xf32> to vector<8x8xbf16>
    %259 = vector.extract_strided_slice %231 {offsets = [0, 8], sizes = [8, 8], strides = [1, 1]} : vector<16x32xf32> to vector<8x8xf32>
    %260 = arith.truncf %259 : vector<8x8xf32> to vector<8x8xbf16>
    %261 = vector.extract_strided_slice %232 {offsets = [0, 8], sizes = [8, 8], strides = [1, 1]} : vector<16x32xf32> to vector<8x8xf32>
    %262 = arith.truncf %261 : vector<8x8xf32> to vector<8x8xbf16>
    %cst_94 = arith.constant dense<0.000000e+00> : vector<8x8xf32>
    %263 = tpu.matmul %258, %260, %cst_94 {dimension_numbers = #tpu.dot_dimension_numbers<[1], [1], [0], [0], [0, 0, 1, 0], [], []>} : vector<8x8xbf16>, vector<8x8xbf16>, vector<8x8xf32> -> vector<8x8xf32>
    %cst_95 = arith.constant dense<0xFF800000> : vector<8xf32>
    %264 = vector.multi_reduction <maximumf>, %263, %cst_95 [1] : vector<8x8xf32> to vector<8xf32>
    %265 = vector.shape_cast %264 : vector<8xf32> to vector<8x1xf32>
    %266 = vector.broadcast %265 : vector<8x1xf32> to vector<8x8xf32>
    %267 = arith.subf %263, %266 : vector<8x8xf32>
    %268 = math.exp %267 : vector<8x8xf32>
    %cst_96 = arith.constant dense<0.000000e+00> : vector<8xf32>
    %269 = vector.multi_reduction <add>, %268, %cst_96 [1] : vector<8x8xf32> to vector<8xf32>
    %270 = vector.shape_cast %269 : vector<8xf32> to vector<8x1xf32>
    %271 = tpu.reciprocal %270 {approx = true} : vector<8x1xf32> -> vector<8x1xf32>
    %272 = vector.broadcast %271 : vector<8x1xf32> to vector<8x8xf32>
    %273 = arith.mulf %268, %272 : vector<8x8xf32>
    %274 = arith.truncf %273 : vector<8x8xf32> to vector<8x8xbf16>
    %cst_97 = arith.constant dense<0.000000e+00> : vector<8x8xf32>
    %275 = tpu.matmul %274, %262, %cst_97 {dimension_numbers = #tpu.dot_dimension_numbers<[1], [0], [0], [1], [0, 0, 1, 1], [], []>} : vector<8x8xbf16>, vector<8x8xbf16>, vector<8x8xf32> -> vector<8x8xf32>
    %c0_98 = arith.constant 0 : index
    %c8_99 = arith.constant 8 : index
    %276 = vector.load %arg24[%c0_98, %c8_99] : memref<16x32xf32, #tpu.memory_space<vmem>>, vector<8x8xf32>
    tpu.vector_store %arg24[%c0_98, %c8_99], %275 {strides = array<i32>} : memref<16x32xf32, #tpu.memory_space<vmem>>, vector<8x8xf32>,
    %277 = vector.extract_strided_slice %224 {offsets = [0, 16], sizes = [8, 8], strides = [1, 1]} : vector<16x32xf32> to vector<8x8xf32>
    %cst_100 = arith.constant 0.353553385 : f32
    %278 = vector.broadcast %cst_100 : f32 to vector<8x8xf32>
    %279 = arith.mulf %277, %278 : vector<8x8xf32>
    %280 = arith.truncf %279 : vector<8x8xf32> to vector<8x8xbf16>
    %281 = vector.extract_strided_slice %231 {offsets = [0, 16], sizes = [8, 8], strides = [1, 1]} : vector<16x32xf32> to vector<8x8xf32>
    %282 = arith.truncf %281 : vector<8x8xf32> to vector<8x8xbf16>
    %283 = vector.extract_strided_slice %232 {offsets = [0, 16], sizes = [8, 8], strides = [1, 1]} : vector<16x32xf32> to vector<8x8xf32>
    %284 = arith.truncf %283 : vector<8x8xf32> to vector<8x8xbf16>
    %cst_101 = arith.constant dense<0.000000e+00> : vector<8x8xf32>
    %285 = tpu.matmul %280, %282, %cst_101 {dimension_numbers = #tpu.dot_dimension_numbers<[1], [1], [0], [0], [0, 0, 1, 0], [], []>} : vector<8x8xbf16>, vector<8x8xbf16>, vector<8x8xf32> -> vector<8x8xf32>
    %cst_102 = arith.constant dense<0xFF800000> : vector<8xf32>
    %286 = vector.multi_reduction <maximumf>, %285, %cst_102 [1] : vector<8x8xf32> to vector<8xf32>
    %287 = vector.shape_cast %286 : vector<8xf32> to vector<8x1xf32>
    %288 = vector.broadcast %287 : vector<8x1xf32> to vector<8x8xf32>
    %289 = arith.subf %285, %288 : vector<8x8xf32>
    %290 = math.exp %289 : vector<8x8xf32>
    %cst_103 = arith.constant dense<0.000000e+00> : vector<8xf32>
    %291 = vector.multi_reduction <add>, %290, %cst_103 [1] : vector<8x8xf32> to vector<8xf32>
    %292 = vector.shape_cast %291 : vector<8xf32> to vector<8x1xf32>
    %293 = tpu.reciprocal %292 {approx = true} : vector<8x1xf32> -> vector<8x1xf32>
    %294 = vector.broadcast %293 : vector<8x1xf32> to vector<8x8xf32>
    %295 = arith.mulf %290, %294 : vector<8x8xf32>
    %296 = arith.truncf %295 : vector<8x8xf32> to vector<8x8xbf16>
    %cst_104 = arith.constant dense<0.000000e+00> : vector<8x8xf32>
    %297 = tpu.matmul %296, %284, %cst_104 {dimension_numbers = #tpu.dot_dimension_numbers<[1], [0], [0], [1], [0, 0, 1, 1], [], []>} : vector<8x8xbf16>, vector<8x8xbf16>, vector<8x8xf32> -> vector<8x8xf32>
    %c0_105 = arith.constant 0 : index
    %c16_106 = arith.constant 16 : index
    %298 = vector.load %arg24[%c0_105, %c16_106] : memref<16x32xf32, #tpu.memory_space<vmem>>, vector<8x8xf32>
    tpu.vector_store %arg24[%c0_105, %c16_106], %297 {strides = array<i32>} : memref<16x32xf32, #tpu.memory_space<vmem>>, vector<8x8xf32>,
    %299 = vector.extract_strided_slice %224 {offsets = [0, 24], sizes = [8, 8], strides = [1, 1]} : vector<16x32xf32> to vector<8x8xf32>
    %cst_107 = arith.constant 0.353553385 : f32
    %300 = vector.broadcast %cst_107 : f32 to vector<8x8xf32>
    %301 = arith.mulf %299, %300 : vector<8x8xf32>
    %302 = arith.truncf %301 : vector<8x8xf32> to vector<8x8xbf16>
    %303 = vector.extract_strided_slice %231 {offsets = [0, 24], sizes = [8, 8], strides = [1, 1]} : vector<16x32xf32> to vector<8x8xf32>
    %304 = arith.truncf %303 : vector<8x8xf32> to vector<8x8xbf16>
    %305 = vector.extract_strided_slice %232 {offsets = [0, 24], sizes = [8, 8], strides = [1, 1]} : vector<16x32xf32> to vector<8x8xf32>
    %306 = arith.truncf %305 : vector<8x8xf32> to vector<8x8xbf16>
    %cst_108 = arith.constant dense<0.000000e+00> : vector<8x8xf32>
    %307 = tpu.matmul %302, %304, %cst_108 {dimension_numbers = #tpu.dot_dimension_numbers<[1], [1], [0], [0], [0, 0, 1, 0], [], []>} : vector<8x8xbf16>, vector<8x8xbf16>, vector<8x8xf32> -> vector<8x8xf32>
    %cst_109 = arith.constant dense<0xFF800000> : vector<8xf32>
    %308 = vector.multi_reduction <maximumf>, %307, %cst_109 [1] : vector<8x8xf32> to vector<8xf32>
    %309 = vector.shape_cast %308 : vector<8xf32> to vector<8x1xf32>
    %310 = vector.broadcast %309 : vector<8x1xf32> to vector<8x8xf32>
    %311 = arith.subf %307, %310 : vector<8x8xf32>
    %312 = math.exp %311 : vector<8x8xf32>
    %cst_110 = arith.constant dense<0.000000e+00> : vector<8xf32>
    %313 = vector.multi_reduction <add>, %312, %cst_110 [1] : vector<8x8xf32> to vector<8xf32>
    %314 = vector.shape_cast %313 : vector<8xf32> to vector<8x1xf32>
    %315 = tpu.reciprocal %314 {approx = true} : vector<8x1xf32> -> vector<8x1xf32>
    %316 = vector.broadcast %315 : vector<8x1xf32> to vector<8x8xf32>
    %317 = arith.mulf %312, %316 : vector<8x8xf32>
    %318 = arith.truncf %317 : vector<8x8xf32> to vector<8x8xbf16>
    %cst_111 = arith.constant dense<0.000000e+00> : vector<8x8xf32>
    %319 = tpu.matmul %318, %306, %cst_111 {dimension_numbers = #tpu.dot_dimension_numbers<[1], [0], [0], [1], [0, 0, 1, 1], [], []>} : vector<8x8xbf16>, vector<8x8xbf16>, vector<8x8xf32> -> vector<8x8xf32>
    %c0_112 = arith.constant 0 : index
    %c24_113 = arith.constant 24 : index
    %320 = vector.load %arg24[%c0_112, %c24_113] : memref<16x32xf32, #tpu.memory_space<vmem>>, vector<8x8xf32>
    tpu.vector_store %arg24[%c0_112, %c24_113], %319 {strides = array<i32>} : memref<16x32xf32, #tpu.memory_space<vmem>>, vector<8x8xf32>,
    %321 = vector.extract_strided_slice %224 {offsets = [8, 0], sizes = [8, 8], strides = [1, 1]} : vector<16x32xf32> to vector<8x8xf32>
    %cst_114 = arith.constant 0.353553385 : f32
    %322 = vector.broadcast %cst_114 : f32 to vector<8x8xf32>
    %323 = arith.mulf %321, %322 : vector<8x8xf32>
    %324 = arith.truncf %323 : vector<8x8xf32> to vector<8x8xbf16>
    %325 = vector.extract_strided_slice %231 {offsets = [8, 0], sizes = [8, 8], strides = [1, 1]} : vector<16x32xf32> to vector<8x8xf32>
    %326 = arith.truncf %325 : vector<8x8xf32> to vector<8x8xbf16>
    %327 = vector.extract_strided_slice %232 {offsets = [8, 0], sizes = [8, 8], strides = [1, 1]} : vector<16x32xf32> to vector<8x8xf32>
    %328 = arith.truncf %327 : vector<8x8xf32> to vector<8x8xbf16>
    %cst_115 = arith.constant dense<0.000000e+00> : vector<8x8xf32>
    %329 = tpu.matmul %324, %326, %cst_115 {dimension_numbers = #tpu.dot_dimension_numbers<[1], [1], [0], [0], [0, 0, 1, 0], [], []>} : vector<8x8xbf16>, vector<8x8xbf16>, vector<8x8xf32> -> vector<8x8xf32>
    %cst_116 = arith.constant dense<0xFF800000> : vector<8xf32>
    %330 = vector.multi_reduction <maximumf>, %329, %cst_116 [1] : vector<8x8xf32> to vector<8xf32>
    %331 = vector.shape_cast %330 : vector<8xf32> to vector<8x1xf32>
    %332 = vector.broadcast %331 : vector<8x1xf32> to vector<8x8xf32>
    %333 = arith.subf %329, %332 : vector<8x8xf32>
    %334 = math.exp %333 : vector<8x8xf32>
    %cst_117 = arith.constant dense<0.000000e+00> : vector<8xf32>
    %335 = vector.multi_reduction <add>, %334, %cst_117 [1] : vector<8x8xf32> to vector<8xf32>
    %336 = vector.shape_cast %335 : vector<8xf32> to vector<8x1xf32>
    %337 = tpu.reciprocal %336 {approx = true} : vector<8x1xf32> -> vector<8x1xf32>
    %338 = vector.broadcast %337 : vector<8x1xf32> to vector<8x8xf32>
    %339 = arith.mulf %334, %338 : vector<8x8xf32>
    %340 = arith.truncf %339 : vector<8x8xf32> to vector<8x8xbf16>
    %cst_118 = arith.constant dense<0.000000e+00> : vector<8x8xf32>
    %341 = tpu.matmul %340, %328, %cst_118 {dimension_numbers = #tpu.dot_dimension_numbers<[1], [0], [0], [1], [0, 0, 1, 1], [], []>} : vector<8x8xbf16>, vector<8x8xbf16>, vector<8x8xf32> -> vector<8x8xf32>
    %c8_119 = arith.constant 8 : index
    %c0_120 = arith.constant 0 : index
    %342 = vector.load %arg24[%c8_119, %c0_120] : memref<16x32xf32, #tpu.memory_space<vmem>>, vector<8x8xf32>
    tpu.vector_store %arg24[%c8_119, %c0_120], %341 {strides = array<i32>} : memref<16x32xf32, #tpu.memory_space<vmem>>, vector<8x8xf32>,
    %343 = vector.extract_strided_slice %224 {offsets = [8, 8], sizes = [8, 8], strides = [1, 1]} : vector<16x32xf32> to vector<8x8xf32>
    %cst_121 = arith.constant 0.353553385 : f32
    %344 = vector.broadcast %cst_121 : f32 to vector<8x8xf32>
    %345 = arith.mulf %343, %344 : vector<8x8xf32>
    %346 = arith.truncf %345 : vector<8x8xf32> to vector<8x8xbf16>
    %347 = vector.extract_strided_slice %231 {offsets = [8, 8], sizes = [8, 8], strides = [1, 1]} : vector<16x32xf32> to vector<8x8xf32>
    %348 = arith.truncf %347 : vector<8x8xf32> to vector<8x8xbf16>
    %349 = vector.extract_strided_slice %232 {offsets = [8, 8], sizes = [8, 8], strides = [1, 1]} : vector<16x32xf32> to vector<8x8xf32>
    %350 = arith.truncf %349 : vector<8x8xf32> to vector<8x8xbf16>
    %cst_122 = arith.constant dense<0.000000e+00> : vector<8x8xf32>
    %351 = tpu.matmul %346, %348, %cst_122 {dimension_numbers = #tpu.dot_dimension_numbers<[1], [1], [0], [0], [0, 0, 1, 0], [], []>} : vector<8x8xbf16>, vector<8x8xbf16>, vector<8x8xf32> -> vector<8x8xf32>
    %cst_123 = arith.constant dense<0xFF800000> : vector<8xf32>
    %352 = vector.multi_reduction <maximumf>, %351, %cst_123 [1] : vector<8x8xf32> to vector<8xf32>
    %353 = vector.shape_cast %352 : vector<8xf32> to vector<8x1xf32>
    %354 = vector.broadcast %353 : vector<8x1xf32> to vector<8x8xf32>
    %355 = arith.subf %351, %354 : vector<8x8xf32>
    %356 = math.exp %355 : vector<8x8xf32>
    %cst_124 = arith.constant dense<0.000000e+00> : vector<8xf32>
    %357 = vector.multi_reduction <add>, %356, %cst_124 [1] : vector<8x8xf32> to vector<8xf32>
    %358 = vector.shape_cast %357 : vector<8xf32> to vector<8x1xf32>
    %359 = tpu.reciprocal %358 {approx = true} : vector<8x1xf32> -> vector<8x1xf32>
    %360 = vector.broadcast %359 : vector<8x1xf32> to vector<8x8xf32>
    %361 = arith.mulf %356, %360 : vector<8x8xf32>
    %362 = arith.truncf %361 : vector<8x8xf32> to vector<8x8xbf16>
    %cst_125 = arith.constant dense<0.000000e+00> : vector<8x8xf32>
    %363 = tpu.matmul %362, %350, %cst_125 {dimension_numbers = #tpu.dot_dimension_numbers<[1], [0], [0], [1], [0, 0, 1, 1], [], []>} : vector<8x8xbf16>, vector<8x8xbf16>, vector<8x8xf32> -> vector<8x8xf32>
    %c8_126 = arith.constant 8 : index
    %c8_127 = arith.constant 8 : index
    %364 = vector.load %arg24[%c8_126, %c8_127] : memref<16x32xf32, #tpu.memory_space<vmem>>, vector<8x8xf32>
    tpu.vector_store %arg24[%c8_126, %c8_127], %363 {strides = array<i32>} : memref<16x32xf32, #tpu.memory_space<vmem>>, vector<8x8xf32>,
    %365 = vector.extract_strided_slice %224 {offsets = [8, 16], sizes = [8, 8], strides = [1, 1]} : vector<16x32xf32> to vector<8x8xf32>
    %cst_128 = arith.constant 0.353553385 : f32
    %366 = vector.broadcast %cst_128 : f32 to vector<8x8xf32>
    %367 = arith.mulf %365, %366 : vector<8x8xf32>
    %368 = arith.truncf %367 : vector<8x8xf32> to vector<8x8xbf16>
    %369 = vector.extract_strided_slice %231 {offsets = [8, 16], sizes = [8, 8], strides = [1, 1]} : vector<16x32xf32> to vector<8x8xf32>
    %370 = arith.truncf %369 : vector<8x8xf32> to vector<8x8xbf16>
    %371 = vector.extract_strided_slice %232 {offsets = [8, 16], sizes = [8, 8], strides = [1, 1]} : vector<16x32xf32> to vector<8x8xf32>
    %372 = arith.truncf %371 : vector<8x8xf32> to vector<8x8xbf16>
    %cst_129 = arith.constant dense<0.000000e+00> : vector<8x8xf32>
    %373 = tpu.matmul %368, %370, %cst_129 {dimension_numbers = #tpu.dot_dimension_numbers<[1], [1], [0], [0], [0, 0, 1, 0], [], []>} : vector<8x8xbf16>, vector<8x8xbf16>, vector<8x8xf32> -> vector<8x8xf32>
    %cst_130 = arith.constant dense<0xFF800000> : vector<8xf32>
    %374 = vector.multi_reduction <maximumf>, %373, %cst_130 [1] : vector<8x8xf32> to vector<8xf32>
    %375 = vector.shape_cast %374 : vector<8xf32> to vector<8x1xf32>
    %376 = vector.broadcast %375 : vector<8x1xf32> to vector<8x8xf32>
    %377 = arith.subf %373, %376 : vector<8x8xf32>
    %378 = math.exp %377 : vector<8x8xf32>
    %cst_131 = arith.constant dense<0.000000e+00> : vector<8xf32>
    %379 = vector.multi_reduction <add>, %378, %cst_131 [1] : vector<8x8xf32> to vector<8xf32>
    %380 = vector.shape_cast %379 : vector<8xf32> to vector<8x1xf32>
    %381 = tpu.reciprocal %380 {approx = true} : vector<8x1xf32> -> vector<8x1xf32>
    %382 = vector.broadcast %381 : vector<8x1xf32> to vector<8x8xf32>
    %383 = arith.mulf %378, %382 : vector<8x8xf32>
    %384 = arith.truncf %383 : vector<8x8xf32> to vector<8x8xbf16>
    %cst_132 = arith.constant dense<0.000000e+00> : vector<8x8xf32>
    %385 = tpu.matmul %384, %372, %cst_132 {dimension_numbers = #tpu.dot_dimension_numbers<[1], [0], [0], [1], [0, 0, 1, 1], [], []>} : vector<8x8xbf16>, vector<8x8xbf16>, vector<8x8xf32> -> vector<8x8xf32>
    %c8_133 = arith.constant 8 : index
    %c16_134 = arith.constant 16 : index
    %386 = vector.load %arg24[%c8_133, %c16_134] : memref<16x32xf32, #tpu.memory_space<vmem>>, vector<8x8xf32>
    tpu.vector_store %arg24[%c8_133, %c16_134], %385 {strides = array<i32>} : memref<16x32xf32, #tpu.memory_space<vmem>>, vector<8x8xf32>,
    %387 = vector.extract_strided_slice %224 {offsets = [8, 24], sizes = [8, 8], strides = [1, 1]} : vector<16x32xf32> to vector<8x8xf32>
    %cst_135 = arith.constant 0.353553385 : f32
    %388 = vector.broadcast %cst_135 : f32 to vector<8x8xf32>
    %389 = arith.mulf %387, %388 : vector<8x8xf32>
    %390 = arith.truncf %389 : vector<8x8xf32> to vector<8x8xbf16>
    %391 = vector.extract_strided_slice %231 {offsets = [8, 24], sizes = [8, 8], strides = [1, 1]} : vector<16x32xf32> to vector<8x8xf32>
    %392 = arith.truncf %391 : vector<8x8xf32> to vector<8x8xbf16>
    %393 = vector.extract_strided_slice %232 {offsets = [8, 24], sizes = [8, 8], strides = [1, 1]} : vector<16x32xf32> to vector<8x8xf32>
    %394 = arith.truncf %393 : vector<8x8xf32> to vector<8x8xbf16>
    %cst_136 = arith.constant dense<0.000000e+00> : vector<8x8xf32>
    %395 = tpu.matmul %390, %392, %cst_136 {dimension_numbers = #tpu.dot_dimension_numbers<[1], [1], [0], [0], [0, 0, 1, 0], [], []>} : vector<8x8xbf16>, vector<8x8xbf16>, vector<8x8xf32> -> vector<8x8xf32>
    %cst_137 = arith.constant dense<0xFF800000> : vector<8xf32>
    %396 = vector.multi_reduction <maximumf>, %395, %cst_137 [1] : vector<8x8xf32> to vector<8xf32>
    %397 = vector.shape_cast %396 : vector<8xf32> to vector<8x1xf32>
    %398 = vector.broadcast %397 : vector<8x1xf32> to vector<8x8xf32>
    %399 = arith.subf %395, %398 : vector<8x8xf32>
    %400 = math.exp %399 : vector<8x8xf32>
    %cst_138 = arith.constant dense<0.000000e+00> : vector<8xf32>
    %401 = vector.multi_reduction <add>, %400, %cst_138 [1] : vector<8x8xf32> to vector<8xf32>
    %402 = vector.shape_cast %401 : vector<8xf32> to vector<8x1xf32>
    %403 = tpu.reciprocal %402 {approx = true} : vector<8x1xf32> -> vector<8x1xf32>
    %404 = vector.broadcast %403 : vector<8x1xf32> to vector<8x8xf32>
    %405 = arith.mulf %400, %404 : vector<8x8xf32>
    %406 = arith.truncf %405 : vector<8x8xf32> to vector<8x8xbf16>
    %cst_139 = arith.constant dense<0.000000e+00> : vector<8x8xf32>
    %407 = tpu.matmul %406, %394, %cst_139 {dimension_numbers = #tpu.dot_dimension_numbers<[1], [0], [0], [1], [0, 0, 1, 1], [], []>} : vector<8x8xbf16>, vector<8x8xbf16>, vector<8x8xf32> -> vector<8x8xf32>
    %c8_140 = arith.constant 8 : index
    %c24_141 = arith.constant 24 : index
    %408 = vector.load %arg24[%c8_140, %c24_141] : memref<16x32xf32, #tpu.memory_space<vmem>>, vector<8x8xf32>
    tpu.vector_store %arg24[%c8_140, %c24_141], %407 {strides = array<i32>} : memref<16x32xf32, #tpu.memory_space<vmem>>, vector<8x8xf32>,
    %c0_142 = arith.constant 0 : index
    %c0_143 = arith.constant 0 : index
    %409 = vector.load %arg24[%c0_142, %c0_143] : memref<16x32xf32, #tpu.memory_space<vmem>>, vector<16x32xf32>
    %410 = arith.truncf %409 : vector<16x32xf32> to vector<16x32xbf16>
    %c0_144 = arith.constant 0 : index
    %c0_145 = arith.constant 0 : index
    %411 = vector.load %arg13[%c0_144, %c0_145] : memref<32x32xbf16, #tpu.memory_space<vmem>>, vector<32x32xbf16>
    %cst_146 = arith.constant dense<0.000000e+00> : vector<16x32xf32>
    %412 = tpu.matmul %410, %411, %cst_146 {dimension_numbers = #tpu.dot_dimension_numbers<[1], [0], [0], [1], [0, 0, 1, 1], [], []>} : vector<16x32xbf16>, vector<32x32xbf16>, vector<16x32xf32> -> vector<16x32xf32>
    %c0_147 = arith.constant 0 : index
    %c0_148 = arith.constant 0 : index
    %413 = vector.load %arg14[%c0_147, %c0_148] : memref<1x32xf32, #tpu.memory_space<vmem>>, vector<1x32xf32>
    %414 = vector.broadcast %413 : vector<1x32xf32> to vector<16x32xf32>
    %415 = arith.addf %412, %414 : vector<16x32xf32>
    %416 = arith.addf %218, %415 : vector<16x32xf32>
    %c0_149 = arith.constant 0 : index
    %c0_150 = arith.constant 0 : index
    %417 = vector.load %arg15[%c0_149, %c0_150] : memref<1x32xf32, #tpu.memory_space<vmem>>, vector<1x32xf32>
    %c0_151 = arith.constant 0 : index
    %c0_152 = arith.constant 0 : index
    %418 = vector.load %arg16[%c0_151, %c0_152] : memref<1x32xf32, #tpu.memory_space<vmem>>, vector<1x32xf32>
    %cst_153 = arith.constant dense<0.000000e+00> : vector<16xf32>
    %419 = vector.multi_reduction <add>, %416, %cst_153 [1] : vector<16x32xf32> to vector<16xf32>
    %420 = vector.shape_cast %419 : vector<16xf32> to vector<16x1xf32>
    %cst_154 = arith.constant 3.200000e+01 : f32
    %421 = vector.broadcast %cst_154 : f32 to vector<16x1xf32>
    %422 = arith.divf %420, %421 : vector<16x1xf32>
    %423 = vector.broadcast %422 : vector<16x1xf32> to vector<16x32xf32>
    %424 = arith.subf %416, %423 : vector<16x32xf32>
    %425 = arith.mulf %424, %424 : vector<16x32xf32>
    %cst_155 = arith.constant dense<0.000000e+00> : vector<16xf32>
    %426 = vector.multi_reduction <add>, %425, %cst_155 [1] : vector<16x32xf32> to vector<16xf32>
    %427 = vector.shape_cast %426 : vector<16xf32> to vector<16x1xf32>
    %cst_156 = arith.constant 3.200000e+01 : f32
    %428 = vector.broadcast %cst_156 : f32 to vector<16x1xf32>
    %429 = arith.divf %427, %428 : vector<16x1xf32>
    %430 = vector.broadcast %422 : vector<16x1xf32> to vector<16x32xf32>
    %431 = arith.subf %416, %430 : vector<16x32xf32>
    %cst_157 = arith.constant 9.99999974E-6 : f32
    %432 = vector.broadcast %cst_157 : f32 to vector<16x1xf32>
    %433 = arith.addf %429, %432 : vector<16x1xf32>
    %434 = math.rsqrt %433 : vector<16x1xf32>
    %435 = vector.broadcast %434 : vector<16x1xf32> to vector<16x32xf32>
    %436 = arith.mulf %431, %435 : vector<16x32xf32>
    %437 = vector.broadcast %417 : vector<1x32xf32> to vector<16x32xf32>
    %438 = arith.mulf %436, %437 : vector<16x32xf32>
    %439 = vector.broadcast %418 : vector<1x32xf32> to vector<16x32xf32>
    %440 = arith.addf %438, %439 : vector<16x32xf32>
    %441 = arith.truncf %440 : vector<16x32xf32> to vector<16x32xbf16>
    %c0_158 = arith.constant 0 : index
    %c0_159 = arith.constant 0 : index
    %442 = vector.load %arg17[%c0_158, %c0_159] : memref<32x64xbf16, #tpu.memory_space<vmem>>, vector<32x64xbf16>
    %cst_160 = arith.constant dense<0.000000e+00> : vector<16x64xf32>
    %443 = tpu.matmul %441, %442, %cst_160 {dimension_numbers = #tpu.dot_dimension_numbers<[1], [0], [0], [1], [0, 0, 1, 1], [], []>} : vector<16x32xbf16>, vector<32x64xbf16>, vector<16x64xf32> -> vector<16x64xf32>
    %c0_161 = arith.constant 0 : index
    %c0_162 = arith.constant 0 : index
    %444 = vector.load %arg18[%c0_161, %c0_162] : memref<1x64xf32, #tpu.memory_space<vmem>>, vector<1x64xf32>
    %445 = vector.broadcast %444 : vector<1x64xf32> to vector<16x64xf32>
    %446 = arith.addf %443, %445 : vector<16x64xf32>
    %cst_163 = arith.constant 0.000000e+00 : f32
    %447 = vector.broadcast %cst_163 : f32 to vector<16x64xf32>
    %448 = arith.maximumf %446, %447 : vector<16x64xf32>
    %449 = arith.truncf %448 : vector<16x64xf32> to vector<16x64xbf16>
    %c0_164 = arith.constant 0 : index
    %c0_165 = arith.constant 0 : index
    %450 = vector.load %arg19[%c0_164, %c0_165] : memref<64x32xbf16, #tpu.memory_space<vmem>>, vector<64x32xbf16>
    %cst_166 = arith.constant dense<0.000000e+00> : vector<16x32xf32>
    %451 = tpu.matmul %449, %450, %cst_166 {dimension_numbers = #tpu.dot_dimension_numbers<[1], [0], [0], [1], [0, 0, 1, 1], [], []>} : vector<16x64xbf16>, vector<64x32xbf16>, vector<16x32xf32> -> vector<16x32xf32>
    %c0_167 = arith.constant 0 : index
    %c0_168 = arith.constant 0 : index
    %452 = vector.load %arg20[%c0_167, %c0_168] : memref<1x32xf32, #tpu.memory_space<vmem>>, vector<1x32xf32>
    %453 = vector.broadcast %452 : vector<1x32xf32> to vector<16x32xf32>
    %454 = arith.addf %451, %453 : vector<16x32xf32>
    %455 = arith.addf %440, %454 : vector<16x32xf32>
    %c0_169 = arith.constant 0 : index
    %c0_170 = arith.constant 0 : index
    %456 = vector.load %arg21[%c0_169, %c0_170] : memref<1x32xf32, #tpu.memory_space<vmem>>, vector<1x32xf32>
    %c0_171 = arith.constant 0 : index
    %c0_172 = arith.constant 0 : index
    %457 = vector.load %arg22[%c0_171, %c0_172] : memref<1x32xf32, #tpu.memory_space<vmem>>, vector<1x32xf32>
    %cst_173 = arith.constant dense<0.000000e+00> : vector<16xf32>
    %458 = vector.multi_reduction <add>, %455, %cst_173 [1] : vector<16x32xf32> to vector<16xf32>
    %459 = vector.shape_cast %458 : vector<16xf32> to vector<16x1xf32>
    %cst_174 = arith.constant 3.200000e+01 : f32
    %460 = vector.broadcast %cst_174 : f32 to vector<16x1xf32>
    %461 = arith.divf %459, %460 : vector<16x1xf32>
    %462 = vector.broadcast %461 : vector<16x1xf32> to vector<16x32xf32>
    %463 = arith.subf %455, %462 : vector<16x32xf32>
    %464 = arith.mulf %463, %463 : vector<16x32xf32>
    %cst_175 = arith.constant dense<0.000000e+00> : vector<16xf32>
    %465 = vector.multi_reduction <add>, %464, %cst_175 [1] : vector<16x32xf32> to vector<16xf32>
    %466 = vector.shape_cast %465 : vector<16xf32> to vector<16x1xf32>
    %cst_176 = arith.constant 3.200000e+01 : f32
    %467 = vector.broadcast %cst_176 : f32 to vector<16x1xf32>
    %468 = arith.divf %466, %467 : vector<16x1xf32>
    %469 = vector.broadcast %461 : vector<16x1xf32> to vector<16x32xf32>
    %470 = arith.subf %455, %469 : vector<16x32xf32>
    %cst_177 = arith.constant 9.99999974E-6 : f32
    %471 = vector.broadcast %cst_177 : f32 to vector<16x1xf32>
    %472 = arith.addf %468, %471 : vector<16x1xf32>
    %473 = math.rsqrt %472 : vector<16x1xf32>
    %474 = vector.broadcast %473 : vector<16x1xf32> to vector<16x32xf32>
    %475 = arith.mulf %470, %474 : vector<16x32xf32>
    %476 = vector.broadcast %456 : vector<1x32xf32> to vector<16x32xf32>
    %477 = arith.mulf %475, %476 : vector<16x32xf32>
    %478 = vector.broadcast %457 : vector<1x32xf32> to vector<16x32xf32>
    %479 = arith.addf %477, %478 : vector<16x32xf32>
    %c0_178 = arith.constant 0 : index
    %c0_179 = arith.constant 0 : index
    %480 = vector.load %arg23[%c0_178, %c0_179] : memref<16x32xf32, #tpu.memory_space<vmem>>, vector<16x32xf32>
    tpu.vector_store %arg23[%c0_178, %c0_179], %479 {strides = array<i32>} : memref<16x32xf32, #tpu.memory_space<vmem>>, vector<16x32xf32>,
    return
  }
  func.func @transform_0(%arg0: i32) -> (i32, i32) {
    %c0_i32 = arith.constant 0 : i32
    %c0_i32_0 = arith.constant 0 : i32
    return %arg0, %c0_i32 : i32, i32
  }
  func.func @transform_1(%arg0: i32) -> (i32, i32) {
    %c0_i32 = arith.constant 0 : i32
    %c0_i32_0 = arith.constant 0 : i32
    return %arg0, %c0_i32 : i32, i32
  }
  func.func @transform_2(%arg0: i32) -> (i32, i32) {
    %c0_i32 = arith.constant 0 : i32
    %c0_i32_0 = arith.constant 0 : i32
    %c0_i32_1 = arith.constant 0 : i32
    return %c0_i32, %c0_i32_0 : i32, i32
  }
  func.func @transform_3(%arg0: i32) -> (i32, i32) {
    %c0_i32 = arith.constant 0 : i32
    %c0_i32_0 = arith.constant 0 : i32
    %c0_i32_1 = arith.constant 0 : i32
    return %c0_i32, %c0_i32_0 : i32, i32
  }
  func.func @transform_4(%arg0: i32) -> (i32, i32) {
    %c0_i32 = arith.constant 0 : i32
    %c0_i32_0 = arith.constant 0 : i32
    %c0_i32_1 = arith.constant 0 : i32
    return %c0_i32, %c0_i32_0 : i32, i32
  }
  func.func @transform_5(%arg0: i32) -> (i32, i32) {
    %c0_i32 = arith.constant 0 : i32
    %c0_i32_0 = arith.constant 0 : i32
    %c0_i32_1 = arith.constant 0 : i32
    return %c0_i32, %c0_i32_0 : i32, i32
  }
  func.func @transform_6(%arg0: i32) -> (i32, i32) {
    %c0_i32 = arith.constant 0 : i32
    %c0_i32_0 = arith.constant 0 : i32
    %c0_i32_1 = arith.constant 0 : i32
    return %c0_i32, %c0_i32_0 : i32, i32
  }
  func.func @transform_7(%arg0: i32) -> (i32, i32) {
    %c0_i32 = arith.constant 0 : i32
    %c0_i32_0 = arith.constant 0 : i32
    %c0_i32_1 = arith.constant 0 : i32
    return %c0_i32, %c0_i32_0 : i32, i32
  }
  func.func @transform_8(%arg0: i32) -> (i32, i32) {
    %c0_i32 = arith.constant 0 : i32
    %c0_i32_0 = arith.constant 0 : i32
    %c0_i32_1 = arith.constant 0 : i32
    return %c0_i32, %c0_i32_0 : i32, i32
  }
  func.func @transform_9(%arg0: i32) -> (i32, i32) {
    %c0_i32 = arith.constant 0 : i32
    %c0_i32_0 = arith.constant 0 : i32
    %c0_i32_1 = arith.constant 0 : i32
    return %c0_i32, %c0_i32_0 : i32, i32
  }
  func.func @transform_10(%arg0: i32) -> (i32, i32) {
    %c0_i32 = arith.constant 0 : i32
    %c0_i32_0 = arith.constant 0 : i32
    %c0_i32_1 = arith.constant 0 : i32
    return %c0_i32, %c0_i32_0 : i32, i32
  }
  func.func @transform_11(%arg0: i32) -> (i32, i32) {
    %c0_i32 = arith.constant 0 : i32
    %c0_i32_0 = arith.constant 0 : i32
    %c0_i32_1 = arith.constant 0 : i32
    return %c0_i32, %c0_i32_0 : i32, i32
  }
  func.func @transform_12(%arg0: i32) -> (i32, i32) {
    %c0_i32 = arith.constant 0 : i32
    %c0_i32_0 = arith.constant 0 : i32
    %c0_i32_1 = arith.constant 0 : i32
    return %c0_i32, %c0_i32_0 : i32, i32
  }
  func.func @transform_13(%arg0: i32) -> (i32, i32) {
    %c0_i32 = arith.constant 0 : i32
    %c0_i32_0 = arith.constant 0 : i32
    %c0_i32_1 = arith.constant 0 : i32
    return %c0_i32, %c0_i32_0 : i32, i32
  }
  func.func @transform_14(%arg0: i32) -> (i32, i32) {
    %c0_i32 = arith.constant 0 : i32
    %c0_i32_0 = arith.constant 0 : i32
    %c0_i32_1 = arith.constant 0 : i32
    return %c0_i32, %c0_i32_0 : i32, i32
  }
  func.func @transform_15(%arg0: i32) -> (i32, i32) {
    %c0_i32 = arith.constant 0 : i32
    %c0_i32_0 = arith.constant 0 : i32
    %c0_i32_1 = arith.constant 0 : i32
    return %c0_i32, %c0_i32_0 : i32, i32
  }
  func.func @transform_16(%arg0: i32) -> (i32, i32) {
    %c0_i32 = arith.constant 0 : i32
    %c0_i32_0 = arith.constant 0 : i32
    %c0_i32_1 = arith.constant 0 : i32
    return %c0_i32, %c0_i32_0 : i32, i32
  }
  func.func @transform_17(%arg0: i32) -> (i32, i32) {
    %c0_i32 = arith.constant 0 : i32
    %c0_i32_0 = arith.constant 0 : i32
    %c0_i32_1 = arith.constant 0 : i32
    return %c0_i32, %c0_i32_0 : i32, i32
  }
  func.func @transform_18(%arg0: i32) -> (i32, i32) {
    %c0_i32 = arith.constant 0 : i32
    %c0_i32_0 = arith.constant 0 : i32
    %c0_i32_1 = arith.constant 0 : i32
    return %c0_i32, %c0_i32_0 : i32, i32
  }
  func.func @transform_19(%arg0: i32) -> (i32, i32) {
    %c0_i32 = arith.constant 0 : i32
    %c0_i32_0 = arith.constant 0 : i32
    %c0_i32_1 = arith.constant 0 : i32
    return %c0_i32, %c0_i32_0 : i32, i32
  }
  func.func @transform_20(%arg0: i32) -> (i32, i32) {
    %c0_i32 = arith.constant 0 : i32
    %c0_i32_0 = arith.constant 0 : i32
    %c0_i32_1 = arith.constant 0 : i32
    return %c0_i32, %c0_i32_0 : i32, i32
  }
  func.func @transform_21(%arg0: i32) -> (i32, i32) {
    %c0_i32 = arith.constant 0 : i32
    %c0_i32_0 = arith.constant 0 : i32
    %c0_i32_1 = arith.constant 0 : i32
    return %c0_i32, %c0_i32_0 : i32, i32
  }
  func.func @transform_22(%arg0: i32) -> (i32, i32) {
    %c0_i32 = arith.constant 0 : i32
    %c0_i32_0 = arith.constant 0 : i32
    return %arg0, %c0_i32 : i32, i32
  }
}

</mosaic_0001>

<llo_original>
// kernel: tpu_custom_call.1
$region0: #{tpu_custom_call.1}
  #allocation0 [shape = 'u32[]', space=smem, size = 0x4, offset = 0x4, fixed_abs, tag = 'smem constant byte address 0x4 - core index']
  #allocation1 [shape = 'u32[144,128]{1,0:T(1,128)}', space=vmem, size = 0x12000, scoped, tag = 'internal scratch']
  #allocation2 [shape = 'f32[16,32]{1,0:T(8,128)}', space=vmem, size = 0x2000, scoped, tag = 'scratch operand']
  %s0 = inlined_call_operand.vmem [shape: f32[16,32], index: 0, kind: input, shape index: {}]
  %s1 = inlined_call_operand.vmem [shape: f32[16,32], index: 1, kind: input, shape index: {}]
  %s2 = inlined_call_operand.vmem [shape: bf16[32,96], index: 2, kind: input, shape index: {}]
  %s3 = inlined_call_operand.vmem [shape: f32[1,96], index: 3, kind: input, shape index: {}]
  %s4 = inlined_call_operand.hbm [shape: bf16[32,32], index: 4, kind: input, shape index: {}]
  %s5 = inlined_call_operand.hbm [shape: f32[1,32], index: 5, kind: input, shape index: {}]
  %s6 = inlined_call_operand.hbm [shape: f32[1,32], index: 6, kind: input, shape index: {}]
  %s7 = inlined_call_operand.hbm [shape: f32[1,32], index: 7, kind: input, shape index: {}]
  %s8 = inlined_call_operand.hbm [shape: bf16[32,32], index: 8, kind: input, shape index: {}]
  %s9 = inlined_call_operand.hbm [shape: f32[1,32], index: 9, kind: input, shape index: {}]
  %s10 = inlined_call_operand.vmem [shape: bf16[32,64], index: 10, kind: input, shape index: {}]
  %s11 = inlined_call_operand.hbm [shape: f32[1,64], index: 11, kind: input, shape index: {}]
  %s12 = inlined_call_operand.hbm [shape: bf16[32,32], index: 12, kind: input, shape index: {}]
  %s13 = inlined_call_operand.hbm [shape: f32[1,32], index: 13, kind: input, shape index: {}]
  %s14 = inlined_call_operand.vmem [shape: f32[1,32], index: 14, kind: input, shape index: {}]
  %s15 = inlined_call_operand.vmem [shape: f32[1,32], index: 15, kind: input, shape index: {}]
  %s16 = inlined_call_operand.vmem [shape: bf16[32,64], index: 16, kind: input, shape index: {}]
  %s17 = inlined_call_operand.vmem [shape: f32[1,64], index: 17, kind: input, shape index: {}]
  %s18 = inlined_call_operand.vmem [shape: bf16[64,32], index: 18, kind: input, shape index: {}]
  %s19 = inlined_call_operand.vmem [shape: f32[1,32], index: 19, kind: input, shape index: {}]
  %s20 = inlined_call_operand.vmem [shape: f32[1,32], index: 20, kind: input, shape index: {}]
  %s21 = inlined_call_operand.vmem [shape: f32[1,32], index: 21, kind: input, shape index: {}]
  %s22 = inlined_call_operand.hbm [shape: f32[16,32], index: 22, kind: output, shape index: {}]
  %s23 = sld [smem:[#allocation0]]
  $region134: #{tpu_custom_call.1} parent=0
    _
  %s25 = ssub.s32 1, %s23
  %s26 = scalar_select 0, %s25, %s23
  $region1: #{tpu_custom_call.1} parent=0
    #allocation3 [shape = 'u8[8192]{0}', space=vmem, size = 0x2000, scoped, tag = 'input window, operand 4, single buffered']
    #allocation4 [shape = 's32[1]{0}', space=sflag, size = 0x4, scoped, tag = 'scoped memory for tpu_custom_call.1']
    #allocation5 [shape = 's32[1]{0}', space=sflag, size = 0x4, scoped, tag = 'scoped memory for tpu_custom_call.1']
    #allocation6 [shape = 'u8[512]{0}', space=vmem, size = 0x400, scoped, tag = 'input window, operand 5, single buffered']
    #allocation7 [shape = 's32[1]{0}', space=sflag, size = 0x4, scoped, tag = 'scoped memory for tpu_custom_call.1']
    #allocation8 [shape = 'u8[512]{0}', space=vmem, size = 0x400, scoped, tag = 'input window, operand 6, single buffered']
    #allocation9 [shape = 'u8[512]{0}', space=vmem, size = 0x400, scoped, tag = 'input window, operand 7, single buffered']
    #allocation10 [shape = 's32[1]{0}', space=sflag, size = 0x4, scoped, tag = 'scoped memory for tpu_custom_call.1']
    #allocation11 [shape = 'u8[8192]{0}', space=vmem, size = 0x2000, scoped, tag = 'input window, operand 8, single buffered']
    #allocation12 [shape = 'u8[512]{0}', space=vmem, size = 0x400, scoped, tag = 'input window, operand 9, single buffered']
    #allocation13 [shape = 's32[1]{0}', space=sflag, size = 0x4, scoped, tag = 'scoped memory for tpu_custom_call.1']
    #allocation14 [shape = 'u8[512]{0}', space=vmem, size = 0x400, scoped, tag = 'input window, operand 11, single buffered']
    #allocation15 [shape = 'u8[8192]{0}', space=vmem, size = 0x2000, scoped, tag = 'input window, operand 12, single buffered']
    #allocation16 [shape = 's32[1]{0}', space=sflag, size = 0x4, scoped, tag = 'scoped memory for tpu_custom_call.1']
    #allocation17 [shape = 'u8[512]{0}', space=vmem, size = 0x400, scoped, tag = 'input window, operand 13, single buffered']
    #allocation18 [shape = 'u8[8192]{0}', space=vmem, size = 0x2000, scoped, tag = 'output window, operand 0, single buffered']
    %27 = vsyncpa [#allocation4], 0
    %28 = vsyncpa [#allocation7], 0
    %29 = vsyncpa [#allocation10], 0
    %30 = vsyncpa [#allocation13], 0
    %31 = vsyncpa [#allocation16], 0
    %32 = vsyncpa [#allocation5], 0
    // Predicated region
    $region2: #{tpu_custom_call.1} parent=1 // pred_check
      _
    $region3: #{tpu_custom_call.1} parent=1 // pred_check_branch
      %34 = sbr.rel (0) target = $region5
    $region4: #{tpu_custom_call.1} parent=1 // pred_region
      _
    $region5: #{tpu_custom_call.1} parent=1 // pred_fallthru
      _
    // Predicated region
    $region6: #{tpu_custom_call.1} parent=1 // pred_check
      _
    $region7: #{tpu_custom_call.1} parent=1 // pred_check_branch
      %36 = sbr.rel (0) target = $region9
    $region8: #{tpu_custom_call.1} parent=1 // pred_region
      _
    $region9: #{tpu_custom_call.1} parent=1 // pred_fallthru
      _
    // Predicated region
    $region10: #{tpu_custom_call.1} parent=1 // pred_check
      _
    $region11: #{tpu_custom_call.1} parent=1 // pred_check_branch
      %38 = sbr.rel (0) target = $region13
    $region12: #{tpu_custom_call.1} parent=1 // pred_region
      _
    $region13: #{tpu_custom_call.1} parent=1 // pred_fallthru
      _
    // Predicated region
    $region14: #{tpu_custom_call.1} parent=1 // pred_check
      _
    $region15: #{tpu_custom_call.1} parent=1 // pred_check_branch
      %40 = sbr.rel (0) target = $region17
    $region16: #{tpu_custom_call.1} parent=1 // pred_region
      _
    $region17: #{tpu_custom_call.1} parent=1 // pred_fallthru
      _
    // Predicated region
    $region18: #{tpu_custom_call.1} parent=1 // pred_check
      _
    $region19: #{tpu_custom_call.1} parent=1 // pred_check_branch
      %42 = sbr.rel (0) target = $region21
    $region20: #{tpu_custom_call.1} parent=1 // pred_region
      %s44 = ssub.s32 256, 256
      %45 = vsyncadd [#allocation4], %s44
      %s46 = sshll.u32 [#allocation3], 4
      %s47 = int_to_ptr.vmem [resolvable:$true] %s46
      %52 = dma.hbm_to_vmem [thread:$0]  %s4, 256, %s47, [#allocation4], 64, 64, 4
    $region21: #{tpu_custom_call.1} parent=1 // pred_fallthru
      _
    // Predicated region
    $region22: #{tpu_custom_call.1} parent=1 // pred_check
      _
    $region23: #{tpu_custom_call.1} parent=1 // pred_check_branch
      %54 = sbr.rel (0) target = $region25
    $region24: #{tpu_custom_call.1} parent=1 // pred_region
      %s56 = ssub.s32 16, 16
      %57 = vsyncadd [#allocation7], %s56
      %s59 = sshll.u32 [#allocation6], 4
      %s60 = int_to_ptr.vmem [resolvable:$true] %s59
      %62 = dma.hbm_to_vmem [thread:$0]  %s5, 16, %s60, [#allocation7]
    $region25: #{tpu_custom_call.1} parent=1 // pred_fallthru
      _
    // Predicated region
    $region26: #{tpu_custom_call.1} parent=1 // pred_check
      _
    $region27: #{tpu_custom_call.1} parent=1 // pred_check_branch
      %64 = sbr.rel (0) target = $region29
    $region28: #{tpu_custom_call.1} parent=1 // pred_region
      %s66 = ssub.s32 16, 16
      %67 = vsyncadd [#allocation7], %s66
      %s69 = sshll.u32 [#allocation8], 4
      %s70 = int_to_ptr.vmem [resolvable:$true] %s69
      %72 = dma.hbm_to_vmem [thread:$0]  %s6, 16, %s70, [#allocation7]
    $region29: #{tpu_custom_call.1} parent=1 // pred_fallthru
      _
    // Predicated region
    $region30: #{tpu_custom_call.1} parent=1 // pred_check
      _
    $region31: #{tpu_custom_call.1} parent=1 // pred_check_branch
      %74 = sbr.rel (0) target = $region33
    $region32: #{tpu_custom_call.1} parent=1 // pred_region
      %s76 = ssub.s32 16, 16
      %77 = vsyncadd [#allocation10], %s76
      %s79 = sshll.u32 [#allocation9], 4
      %s80 = int_to_ptr.vmem [resolvable:$true] %s79
      %82 = dma.hbm_to_vmem [thread:$0]  %s7, 16, %s80, [#allocation10]
    $region33: #{tpu_custom_call.1} parent=1 // pred_fallthru
      _
    // Predicated region
    $region34: #{tpu_custom_call.1} parent=1 // pred_check
      _
    $region35: #{tpu_custom_call.1} parent=1 // pred_check_branch
      %84 = sbr.rel (0) target = $region37
    $region36: #{tpu_custom_call.1} parent=1 // pred_region
      %s86 = ssub.s32 256, 256
      %87 = vsyncadd [#allocation10], %s86
      %s88 = sshll.u32 [#allocation11], 4
      %s89 = int_to_ptr.vmem [resolvable:$true] %s88
      %94 = dma.hbm_to_vmem [thread:$0]  %s8, 256, %s89, [#allocation10], 64, 64, 4
    $region37: #{tpu_custom_call.1} parent=1 // pred_fallthru
      _
    // Predicated region
    $region38: #{tpu_custom_call.1} parent=1 // pred_check
      _
    $region39: #{tpu_custom_call.1} parent=1 // pred_check_branch
      %96 = sbr.rel (0) target = $region41
    $region40: #{tpu_custom_call.1} parent=1 // pred_region
      %s98 = ssub.s32 16, 16
      %99 = vsyncadd [#allocation13], %s98
      %s101 = sshll.u32 [#allocation12], 4
      %s102 = int_to_ptr.vmem [resolvable:$true] %s101
      %104 = dma.hbm_to_vmem [thread:$0]  %s9, 16, %s102, [#allocation13]
    $region41: #{tpu_custom_call.1} parent=1 // pred_fallthru
      _
    // Predicated region
    $region42: #{tpu_custom_call.1} parent=1 // pred_check
      _
    $region43: #{tpu_custom_call.1} parent=1 // pred_check_branch
      %106 = sbr.rel (0) target = $region45
    $region44: #{tpu_custom_call.1} parent=1 // pred_region
      _
    $region45: #{tpu_custom_call.1} parent=1 // pred_fallthru
      _
    // Predicated region
    $region46: #{tpu_custom_call.1} parent=1 // pred_check
      _
    $region47: #{tpu_custom_call.1} parent=1 // pred_check_branch
      %108 = sbr.rel (0) target = $region49
    $region48: #{tpu_custom_call.1} parent=1 // pred_region
      %s110 = ssub.s32 16, 16
      %111 = vsyncadd [#allocation13], %s110
      %s113 = sshll.u32 [#allocation14], 4
      %s114 = int_to_ptr.vmem [resolvable:$true] %s113
      %116 = dma.hbm_to_vmem [thread:$0]  %s11, 16, %s114, [#allocation13]
    $region49: #{tpu_custom_call.1} parent=1 // pred_fallthru
      _
    // Predicated region
    $region50: #{tpu_custom_call.1} parent=1 // pred_check
      _
    $region51: #{tpu_custom_call.1} parent=1 // pred_check_branch
      %118 = sbr.rel (0) target = $region53
    $region52: #{tpu_custom_call.1} parent=1 // pred_region
      %s120 = ssub.s32 256, 256
      %121 = vsyncadd [#allocation16], %s120
      %s122 = sshll.u32 [#allocation15], 4
      %s123 = int_to_ptr.vmem [resolvable:$true] %s122
      %128 = dma.hbm_to_vmem [thread:$0]  %s12, 256, %s123, [#allocation16], 64, 64, 4
    $region53: #{tpu_custom_call.1} parent=1 // pred_fallthru
      _
    // Predicated region
    $region54: #{tpu_custom_call.1} parent=1 // pred_check
      _
    $region55: #{tpu_custom_call.1} parent=1 // pred_check_branch
      %130 = sbr.rel (0) target = $region57
    $region56: #{tpu_custom_call.1} parent=1 // pred_region
      %s132 = ssub.s32 16, 16
      %133 = vsyncadd [#allocation16], %s132
      %s135 = sshll.u32 [#allocation17], 4
      %s136 = int_to_ptr.vmem [resolvable:$true] %s135
      %138 = dma.hbm_to_vmem [thread:$0]  %s13, 16, %s136, [#allocation16]
    $region57: #{tpu_custom_call.1} parent=1 // pred_fallthru
      _
    // Predicated region
    $region58: #{tpu_custom_call.1} parent=1 // pred_check
      _
    $region59: #{tpu_custom_call.1} parent=1 // pred_check_branch
      %140 = sbr.rel (0) target = $region61
    $region60: #{tpu_custom_call.1} parent=1 // pred_region
      _
    $region61: #{tpu_custom_call.1} parent=1 // pred_fallthru
      _
    // Predicated region
    $region62: #{tpu_custom_call.1} parent=1 // pred_check
      _
    $region63: #{tpu_custom_call.1} parent=1 // pred_check_branch
      %142 = sbr.rel (0) target = $region65
    $region64: #{tpu_custom_call.1} parent=1 // pred_region
      _
    $region65: #{tpu_custom_call.1} parent=1 // pred_fallthru
      _
    // Predicated region
    $region66: #{tpu_custom_call.1} parent=1 // pred_check
      _
    $region67: #{tpu_custom_call.1} parent=1 // pred_check_branch
      %144 = sbr.rel (0) target = $region69
    $region68: #{tpu_custom_call.1} parent=1 // pred_region
      _
    $region69: #{tpu_custom_call.1} parent=1 // pred_fallthru
      _
    // Predicated region
    $region70: #{tpu_custom_call.1} parent=1 // pred_check
      _
    $region71: #{tpu_custom_call.1} parent=1 // pred_check_branch
      %146 = sbr.rel (0) target = $region73
    $region72: #{tpu_custom_call.1} parent=1 // pred_region
      _
    $region73: #{tpu_custom_call.1} parent=1 // pred_fallthru
      _
    // Predicated region
    $region74: #{tpu_custom_call.1} parent=1 // pred_check
      _
    $region75: #{tpu_custom_call.1} parent=1 // pred_check_branch
      %148 = sbr.rel (0) target = $region77
    $region76: #{tpu_custom_call.1} parent=1 // pred_region
      _
    $region77: #{tpu_custom_call.1} parent=1 // pred_fallthru
      _
    // Predicated region
    $region78: #{tpu_custom_call.1} parent=1 // pred_check
      _
    $region79: #{tpu_custom_call.1} parent=1 // pred_check_branch
      %150 = sbr.rel (0) target = $region81
    $region80: #{tpu_custom_call.1} parent=1 // pred_region
      _
    $region81: #{tpu_custom_call.1} parent=1 // pred_fallthru
      _
    // Predicated region
    $region82: #{tpu_custom_call.1} parent=1 // pred_check
      _
    $region83: #{tpu_custom_call.1} parent=1 // pred_check_branch
      %152 = sbr.rel (0) target = $region85
    $region84: #{tpu_custom_call.1} parent=1 // pred_region
      _
    $region85: #{tpu_custom_call.1} parent=1 // pred_fallthru
      _
    // Predicated region
    $region86: #{tpu_custom_call.1} parent=1 // pred_check
      _
    $region87: #{tpu_custom_call.1} parent=1 // pred_check_branch
      %154 = sbr.rel (0) target = $region89
    $region88: #{tpu_custom_call.1} parent=1 // pred_region
      _
    $region89: #{tpu_custom_call.1} parent=1 // pred_fallthru
      _
    // Predicated region
    $region90: #{tpu_custom_call.1} parent=1 // pred_check
      _
    $region91: #{tpu_custom_call.1} parent=1 // pred_check_branch
      %156 = sbr.rel (0) target = $region93
    $region92: #{tpu_custom_call.1} parent=1 // pred_region
      %157 = dma.done [#allocation4], 256
    $region93: #{tpu_custom_call.1} parent=1 // pred_fallthru
      _
    // Predicated region
    $region94: #{tpu_custom_call.1} parent=1 // pred_check
      _
    $region95: #{tpu_custom_call.1} parent=1 // pred_check_branch
      %159 = sbr.rel (0) target = $region97
    $region96: #{tpu_custom_call.1} parent=1 // pred_region
      %160 = dma.done [#allocation7], 16
    $region97: #{tpu_custom_call.1} parent=1 // pred_fallthru
      _
    // Predicated region
    $region98: #{tpu_custom_call.1} parent=1 // pred_check
      _
    $region99: #{tpu_custom_call.1} parent=1 // pred_check_branch
      %162 = sbr.rel (0) target = $region101
    $region100: #{tpu_custom_call.1} parent=1 // pred_region
      %163 = dma.done [#allocation7], 16
    $region101: #{tpu_custom_call.1} parent=1 // pred_fallthru
      _
    // Predicated region
    $region102: #{tpu_custom_call.1} parent=1 // pred_check
      _
    $region103: #{tpu_custom_call.1} parent=1 // pred_check_branch
      %165 = sbr.rel (0) target = $region105
    $region104: #{tpu_custom_call.1} parent=1 // pred_region
      %166 = dma.done [#allocation10], 16
    $region105: #{tpu_custom_call.1} parent=1 // pred_fallthru
      _
    // Predicated region
    $region106: #{tpu_custom_call.1} parent=1 // pred_check
      _
    $region107: #{tpu_custom_call.1} parent=1 // pred_check_branch
      %168 = sbr.rel (0) target = $region109
    $region108: #{tpu_custom_call.1} parent=1 // pred_region
      %169 = dma.done [#allocation10], 256
    $region109: #{tpu_custom_call.1} parent=1 // pred_fallthru
      _
    // Predicated region
    $region110: #{tpu_custom_call.1} parent=1 // pred_check
      _
    $region111: #{tpu_custom_call.1} parent=1 // pred_check_branch
      %171 = sbr.rel (0) target = $region113
    $region112: #{tpu_custom_call.1} parent=1 // pred_region
      %172 = dma.done [#allocation13], 16
    $region113: #{tpu_custom_call.1} parent=1 // pred_fallthru
      _
    // Predicated region
    $region114: #{tpu_custom_call.1} parent=1 // pred_check
      _
    $region115: #{tpu_custom_call.1} parent=1 // pred_check_branch
      %174 = sbr.rel (0) target = $region117
    $region116: #{tpu_custom_call.1} parent=1 // pred_region
      %175 = dma.done [#allocation13], 16
    $region117: #{tpu_custom_call.1} parent=1 // pred_fallthru
      _
    // Predicated region
    $region118: #{tpu_custom_call.1} parent=1 // pred_check
      _
    $region119: #{tpu_custom_call.1} parent=1 // pred_check_branch
      %177 = sbr.rel (0) target = $region121
    $region120: #{tpu_custom_call.1} parent=1 // pred_region
      %178 = dma.done [#allocation16], 256
    $region121: #{tpu_custom_call.1} parent=1 // pred_fallthru
      _
    // Predicated region
    $region122: #{tpu_custom_call.1} parent=1 // pred_check
      _
    $region123: #{tpu_custom_call.1} parent=1 // pred_check_branch
      %180 = sbr.rel (0) target = $region125
    $region124: #{tpu_custom_call.1} parent=1 // pred_region
      %181 = dma.done [#allocation16], 16
    $region125: #{tpu_custom_call.1} parent=1 // pred_fallthru
      _
    %v183 = vld [vmem:[%s0] sm:$0xff]
    %v184 = vld [vmem:[%s0 + $0x8] sm:$0xff]
    %v185 = vld [vmem:[%s1] sm:$0xff]
    %v186 = vld [vmem:[%s1 + $0x8] sm:$0xff]
    %v187 = vpack.c.bf16 %v184, %v183
    %v188 = vld [vmem:[%s2] sm:$0xf]
    %v189 = vld [vmem:[%s2 + $0x4] sm:$0xf]
    %v190 = vld [vmem:[%s2 + $0x8] sm:$0xf]
    %v191 = vld [vmem:[%s2 + $0xc] sm:$0xf]
    %v192 = vld [vmem:[%s3] sm:$0x1]
    %v194 = vlaneseq
    %v195 = vshrl.u32 %v194, 7
    %v196 = vsub.s32 0, %v195
    %v197 = vrot.slane %v192, %v196
    %v203 = vunpack.c.l.b16 %v188
    %v204 = vunpack.c.l.b16 %v189
    %v205 = vunpack.c.l.b16 %v190
    %v206 = vunpack.c.l.b16 %v191
    %v207 = vpack.c.b16 %v204, %v203
    %v208 = vpack.c.b16 %v206, %v205
    %vm211 = vcmask 261120
    %v213 = vsel %vm211, %v187, 0
    %215 = vmatprep.subr.bf16.mxu0 0
    %216 = vmatpush1.bf16.msra.mxu0 %v207
    %217 = vmatprep.subr.bf16.mxu0 0
    %218 = vmatpush1.bf16.msra.mxu0 %v208
    %219 = vmatprep.subr.bf16.mxu0 0
    %220 = vmatpush1.bf16.msra.mxu0 0
    %221 = vmatprep.subr.bf16.mxu0 0
    %222 = vmatpush1.bf16.msra.mxu0 0
    %223 = vmatprep.subr.bf16.mxu0 0
    %224 = vmatpush1.bf16.msra.mxu0 0
    %225 = vmatprep.subr.bf16.mxu0 0
    %226 = vmatpush1.bf16.msra.mxu0 0
    %227 = vmatprep.subr.bf16.mxu0 0
    %228 = vmatpush1.bf16.msra.mxu0 0
    %229 = vmatprep.subr.bf16.mxu0 0
    %230 = vmatpush1.bf16.msra.mxu0 0
    %231 = vmatprep.subr.bf16.mxu0 0
    %232 = vmatpush1.bf16.msra.mxu0 0
    %233 = vmatprep.subr.bf16.mxu0 0
    %234 = vmatpush1.bf16.msra.mxu0 0
    %235 = vmatprep.subr.bf16.mxu0 0
    %236 = vmatpush1.bf16.msra.mxu0 0
    %237 = vmatprep.subr.bf16.mxu0 0
    %238 = vmatpush1.bf16.msra.mxu0 0
    %239 = vmatprep.subr.bf16.mxu0 0
    %240 = vmatpush1.bf16.msra.mxu0 0
    %241 = vmatprep.subr.bf16.mxu0 0
    %242 = vmatpush1.bf16.msra.mxu0 0
    %243 = vmatprep.subr.bf16.mxu0 0
    %244 = vmatpush1.bf16.msra.mxu0 0
    %245 = vmatprep.subr.bf16.mxu0 0
    %246 = vmatpush1.bf16.msra.mxu0 0
    %247 = vmatprep.mubr.bf16.mxu0 0
    %248 = vmatmul.mubr.bf16.gmra.mrb[0].mxu0 %v213
    %v249 = vpop.f32.mrb[0].mxu0
    %v250 = vadd.f32 %v197, %v249
    %v251 = vpop.f32.mrb[0].mxu0
    %v252 = vpop.f32.mrb[0].mxu0
    %v253 = vadd.f32 %v197, %v252
    %v254 = vpop.f32.mrb[0].mxu0
    %255 = vdwg.mxu0
    %v256 = vmul.f32 %v250, 0.35355338
    %v257 = vpack.c.bf16 %v256, %v256
    %v258 = vpack.c.bf16 %v250, %v250
    %260 = vrot.lane.b32.xlu0 %v258, 96
    %v261 = vpop.permute.xlu0 %260
    %vm262 = vcmask 64512
    %v264 = vsel %vm262, %v257, 0
    %v267 = vsel %vm262, %v261, 0
    %269 = vmatprep.subr.bf16.mxu0 0
    %270 = vmatpush1.bf16.xpose.msra.mxu0 %v267
    %271 = vmatprep.subr.bf16.mxu0 0
    %272 = vmatpush1.bf16.xpose.msra.mxu0 0
    %273 = vmatprep.subr.bf16.mxu0 0
    %274 = vmatpush1.bf16.xpose.msra.mxu0 0
    %275 = vmatprep.subr.bf16.mxu0 0
    %276 = vmatpush1.bf16.xpose.msra.mxu0 0
    %277 = vmatprep.subr.bf16.mxu0 0
    %278 = vmatpush1.bf16.xpose.msra.mxu0 0
    %279 = vmatprep.subr.bf16.mxu0 0
    %280 = vmatpush1.bf16.xpose.msra.mxu0 0
    %281 = vmatprep.subr.bf16.mxu0 0
    %282 = vmatpush1.bf16.xpose.msra.mxu0 0
    %283 = vmatprep.subr.bf16.mxu0 0
    %284 = vmatpush1.bf16.xpose.msra.mxu0 0
    %285 = vmatprep.subr.bf16.mxu0 0
    %286 = vmatpush1.bf16.xpose.msra.mxu0 0
    %287 = vmatprep.subr.bf16.mxu0 0
    %288 = vmatpush1.bf16.xpose.msra.mxu0 0
    %289 = vmatprep.subr.bf16.mxu0 0
    %290 = vmatpush1.bf16.xpose.msra.mxu0 0
    %291 = vmatprep.subr.bf16.mxu0 0
    %292 = vmatpush1.bf16.xpose.msra.mxu0 0
    %293 = vmatprep.subr.bf16.mxu0 0
    %294 = vmatpush1.bf16.xpose.msra.mxu0 0
    %295 = vmatprep.subr.bf16.mxu0 0
    %296 = vmatpush1.bf16.xpose.msra.mxu0 0
    %297 = vmatprep.subr.bf16.mxu0 0
    %298 = vmatpush1.bf16.xpose.msra.mxu0 0
    %299 = vmatprep.subr.bf16.mxu0 0
    %300 = vmatpush1.bf16.xpose.msra.mxu0 0
    %301 = vmatprep.mubr.bf16.mxu0 0
    %302 = vmatmul.mubr.bf16.gmra.mrb[0].mxu0 %v264
    %v303 = vpop.f32.mrb[0].mxu0
    %v304 = vadd.f32 0.0, %v303
    %v305 = vpop.f32.mrb[0].mxu0
    %v306 = vpop.f32.mrb[0].mxu0
    %v307 = vpop.f32.mrb[0].mxu0
    %308 = vdwg.mxu0
    %v309 = vsel %vm262, %v304, -inf
    %310 = vmax.xlane.f32.xlu0 %v309
    %v311 = vpop.xlane.xlu0 %310
    %v312 = vsub.f32 %v304, %v311
    %v313 = vmul.f32 %v312, 1.442695
    %v314 = vpow.pop %v313
    %v315 = vsel %vm262, %v314, 0.0
    %316 = vadd.xlane.f32.xlu0 %v315
    %v317 = vpop.xlane.xlu0 %316
    %v318 = vrcp.pop %v317
    %v319 = vmul.f32 %v314, %v318
    %v320 = vpack.c.bf16 %v319, %v319
    %321 = vrot.lane.b32.xlu0 %v258, 64
    %v322 = vpop.permute.xlu0 %321
    %v324 = vsel %vm262, %v320, 0
    %vm326 = vcmask 1043456
    %v328 = vsel %vm326, %v322, 0
    %330 = vmatprep.subr.bf16.mxu0 0
    %331 = vmatpush1.bf16.msra.mxu0 %v328
    %332 = vmatprep.subr.bf16.mxu0 0
    %333 = vmatpush1.bf16.msra.mxu0 0
    %334 = vmatprep.subr.bf16.mxu0 0
    %335 = vmatpush1.bf16.msra.mxu0 0
    %336 = vmatprep.subr.bf16.mxu0 0
    %337 = vmatpush1.bf16.msra.mxu0 0
    %338 = vmatprep.subr.bf16.mxu0 0
    %339 = vmatpush1.bf16.msra.mxu0 0
    %340 = vmatprep.subr.bf16.mxu0 0
    %341 = vmatpush1.bf16.msra.mxu0 0
    %342 = vmatprep.subr.bf16.mxu0 0
    %343 = vmatpush1.bf16.msra.mxu0 0
    %344 = vmatprep.subr.bf16.mxu0 0
    %345 = vmatpush1.bf16.msra.mxu0 0
    %346 = vmatprep.subr.bf16.mxu0 0
    %347 = vmatpush1.bf16.msra.mxu0 0
    %348 = vmatprep.subr.bf16.mxu0 0
    %349 = vmatpush1.bf16.msra.mxu0 0
    %350 = vmatprep.subr.bf16.mxu0 0
    %351 = vmatpush1.bf16.msra.mxu0 0
    %352 = vmatprep.subr.bf16.mxu0 0
    %353 = vmatpush1.bf16.msra.mxu0 0
    %354 = vmatprep.subr.bf16.mxu0 0
    %355 = vmatpush1.bf16.msra.mxu0 0
    %356 = vmatprep.subr.bf16.mxu0 0
    %357 = vmatpush1.bf16.msra.mxu0 0
    %358 = vmatprep.subr.bf16.mxu0 0
    %359 = vmatpush1.bf16.msra.mxu0 0
    %360 = vmatprep.subr.bf16.mxu0 0
    %361 = vmatpush1.bf16.msra.mxu0 0
    %362 = vmatprep.mubr.bf16.mxu0 0
    %363 = vmatmul.mubr.bf16.gmra.mrb[0].mxu0 %v324
    %v364 = vpop.f32.mrb[0].mxu0
    %v365 = vadd.f32 0.0, %v364
    %v366 = vpop.f32.mrb[0].mxu0
    %v367 = vpop.f32.mrb[0].mxu0
    %v368 = vpop.f32.mrb[0].mxu0
    %369 = vdwg.mxu0
    %370 = vst.msk [vmem:[#allocation2] sm:$0xff] %vm262, %v365
    %372 = vrot.lane.b32.xlu0 %v257, 120
    %v373 = vpop.permute.xlu0 %372
    %374 = vrot.lane.b32.xlu0 %v258, 88
    %v375 = vpop.permute.xlu0 %374
    %v377 = vsel %vm262, %v373, 0
    %v380 = vsel %vm262, %v375, 0
    %382 = vmatprep.subr.bf16.mxu0 0
    %383 = vmatpush1.bf16.xpose.msra.mxu0 %v380
    %384 = vmatprep.subr.bf16.mxu0 0
    %385 = vmatpush1.bf16.xpose.msra.mxu0 0
    %386 = vmatprep.subr.bf16.mxu0 0
    %387 = vmatpush1.bf16.xpose.msra.mxu0 0
    %388 = vmatprep.subr.bf16.mxu0 0
    %389 = vmatpush1.bf16.xpose.msra.mxu0 0
    %390 = vmatprep.subr.bf16.mxu0 0
    %391 = vmatpush1.bf16.xpose.msra.mxu0 0
    %392 = vmatprep.subr.bf16.mxu0 0
    %393 = vmatpush1.bf16.xpose.msra.mxu0 0
    %394 = vmatprep.subr.bf16.mxu0 0
    %395 = vmatpush1.bf16.xpose.msra.mxu0 0
    %396 = vmatprep.subr.bf16.mxu0 0
    %397 = vmatpush1.bf16.xpose.msra.mxu0 0
    %398 = vmatprep.subr.bf16.mxu0 0
    %399 = vmatpush1.bf16.xpose.msra.mxu0 0
    %400 = vmatprep.subr.bf16.mxu0 0
    %401 = vmatpush1.bf16.xpose.msra.mxu0 0
    %402 = vmatprep.subr.bf16.mxu0 0
    %403 = vmatpush1.bf16.xpose.msra.mxu0 0
    %404 = vmatprep.subr.bf16.mxu0 0
    %405 = vmatpush1.bf16.xpose.msra.mxu0 0
    %406 = vmatprep.subr.bf16.mxu0 0
    %407 = vmatpush1.bf16.xpose.msra.mxu0 0
    %408 = vmatprep.subr.bf16.mxu0 0
    %409 = vmatpush1.bf16.xpose.msra.mxu0 0
    %410 = vmatprep.subr.bf16.mxu0 0
    %411 = vmatpush1.bf16.xpose.msra.mxu0 0
    %412 = vmatprep.subr.bf16.mxu0 0
    %413 = vmatpush1.bf16.xpose.msra.mxu0 0
    %414 = vmatprep.mubr.bf16.mxu0 0
    %415 = vmatmul.mubr.bf16.gmra.mrb[0].mxu0 %v377
    %v416 = vpop.f32.mrb[0].mxu0
    %v417 = vadd.f32 0.0, %v416
    %v418 = vpop.f32.mrb[0].mxu0
    %v419 = vpop.f32.mrb[0].mxu0
    %v420 = vpop.f32.mrb[0].mxu0
    %421 = vdwg.mxu0
    %v422 = vsel %vm262, %v417, -inf
    %423 = vmax.xlane.f32.xlu0 %v422
    %v424 = vpop.xlane.xlu0 %423
    %v425 = vsub.f32 %v417, %v424
    %v426 = vmul.f32 %v425, 1.442695
    %v427 = vpow.pop %v426
    %v428 = vsel %vm262, %v427, 0.0
    %429 = vadd.xlane.f32.xlu0 %v428
    %v430 = vpop.xlane.xlu0 %429
    %v431 = vrcp.pop %v430
    %v432 = vmul.f32 %v427, %v431
    %v433 = vpack.c.bf16 %v432, %v432
    %434 = vrot.lane.b32.xlu0 %v258, 56
    %v435 = vpop.permute.xlu0 %434
    %v437 = vsel %vm262, %v433, 0
    %v440 = vsel %vm326, %v435, 0
    %442 = vmatprep.subr.bf16.mxu0 0
    %443 = vmatpush1.bf16.msra.mxu0 %v440
    %444 = vmatprep.subr.bf16.mxu0 0
    %445 = vmatpush1.bf16.msra.mxu0 0
    %446 = vmatprep.subr.bf16.mxu0 0
    %447 = vmatpush1.bf16.msra.mxu0 0
    %448 = vmatprep.subr.bf16.mxu0 0
    %449 = vmatpush1.bf16.msra.mxu0 0
    %450 = vmatprep.subr.bf16.mxu0 0
    %451 = vmatpush1.bf16.msra.mxu0 0
    %452 = vmatprep.subr.bf16.mxu0 0
    %453 = vmatpush1.bf16.msra.mxu0 0
    %454 = vmatprep.subr.bf16.mxu0 0
    %455 = vmatpush1.bf16.msra.mxu0 0
    %456 = vmatprep.subr.bf16.mxu0 0
    %457 = vmatpush1.bf16.msra.mxu0 0
    %458 = vmatprep.subr.bf16.mxu0 0
    %459 = vmatpush1.bf16.msra.mxu0 0
    %460 = vmatprep.subr.bf16.mxu0 0
    %461 = vmatpush1.bf16.msra.mxu0 0
    %462 = vmatprep.subr.bf16.mxu0 0
    %463 = vmatpush1.bf16.msra.mxu0 0
    %464 = vmatprep.subr.bf16.mxu0 0
    %465 = vmatpush1.bf16.msra.mxu0 0
    %466 = vmatprep.subr.bf16.mxu0 0
    %467 = vmatpush1.bf16.msra.mxu0 0
    %468 = vmatprep.subr.bf16.mxu0 0
    %469 = vmatpush1.bf16.msra.mxu0 0
    %470 = vmatprep.subr.bf16.mxu0 0
    %471 = vmatpush1.bf16.msra.mxu0 0
    %472 = vmatprep.subr.bf16.mxu0 0
    %473 = vmatpush1.bf16.msra.mxu0 0
    %474 = vmatprep.mubr.bf16.mxu0 0
    %475 = vmatmul.mubr.bf16.gmra.mrb[0].mxu0 %v437
    %v476 = vpop.f32.mrb[0].mxu0
    %v477 = vadd.f32 0.0, %v476
    %v478 = vpop.f32.mrb[0].mxu0
    %v479 = vpop.f32.mrb[0].mxu0
    %v480 = vpop.f32.mrb[0].mxu0
    %481 = vdwg.mxu0
    %483 = vrot.lane.b32.xlu0 %v477, 8
    %v484 = vpop.permute.xlu0 %483
    %vm486 = vcmask 130112
    %487 = vst.msk [vmem:[#allocation2] sm:$0xff] %vm486, %v484
    %488 = vrot.lane.b32.xlu0 %v257, 112
    %v489 = vpop.permute.xlu0 %488
    %490 = vrot.lane.b32.xlu0 %v258, 80
    %v491 = vpop.permute.xlu0 %490
    %v493 = vsel %vm262, %v489, 0
    %v496 = vsel %vm262, %v491, 0
    %498 = vmatprep.subr.bf16.mxu0 0
    %499 = vmatpush1.bf16.xpose.msra.mxu0 %v496
    %500 = vmatprep.subr.bf16.mxu0 0
    %501 = vmatpush1.bf16.xpose.msra.mxu0 0
    %502 = vmatprep.subr.bf16.mxu0 0
    %503 = vmatpush1.bf16.xpose.msra.mxu0 0
    %504 = vmatprep.subr.bf16.mxu0 0
    %505 = vmatpush1.bf16.xpose.msra.mxu0 0
    %506 = vmatprep.subr.bf16.mxu0 0
    %507 = vmatpush1.bf16.xpose.msra.mxu0 0
    %508 = vmatprep.subr.bf16.mxu0 0
    %509 = vmatpush1.bf16.xpose.msra.mxu0 0
    %510 = vmatprep.subr.bf16.mxu0 0
    %511 = vmatpush1.bf16.xpose.msra.mxu0 0
    %512 = vmatprep.subr.bf16.mxu0 0
    %513 = vmatpush1.bf16.xpose.msra.mxu0 0
    %514 = vmatprep.subr.bf16.mxu0 0
    %515 = vmatpush1.bf16.xpose.msra.mxu0 0
    %516 = vmatprep.subr.bf16.mxu0 0
    %517 = vmatpush1.bf16.xpose.msra.mxu0 0
    %518 = vmatprep.subr.bf16.mxu0 0
    %519 = vmatpush1.bf16.xpose.msra.mxu0 0
    %520 = vmatprep.subr.bf16.mxu0 0
    %521 = vmatpush1.bf16.xpose.msra.mxu0 0
    %522 = vmatprep.subr.bf16.mxu0 0
    %523 = vmatpush1.bf16.xpose.msra.mxu0 0
    %524 = vmatprep.subr.bf16.mxu0 0
    %525 = vmatpush1.bf16.xpose.msra.mxu0 0
    %526 = vmatprep.subr.bf16.mxu0 0
    %527 = vmatpush1.bf16.xpose.msra.mxu0 0
    %528 = vmatprep.subr.bf16.mxu0 0
    %529 = vmatpush1.bf16.xpose.msra.mxu0 0
    %530 = vmatprep.mubr.bf16.mxu0 0
    %531 = vmatmul.mubr.bf16.gmra.mrb[0].mxu0 %v493
    %v532 = vpop.f32.mrb[0].mxu0
    %v533 = vadd.f32 0.0, %v532
    %v534 = vpop.f32.mrb[0].mxu0
    %v535 = vpop.f32.mrb[0].mxu0
    %v536 = vpop.f32.mrb[0].mxu0
    %537 = vdwg.mxu0
    %v538 = vsel %vm262, %v533, -inf
    %539 = vmax.xlane.f32.xlu0 %v538
    %v540 = vpop.xlane.xlu0 %539
    %v541 = vsub.f32 %v533, %v540
    %v542 = vmul.f32 %v541, 1.442695
    %v543 = vpow.pop %v542
    %v544 = vsel %vm262, %v543, 0.0
    %545 = vadd.xlane.f32.xlu0 %v544
    %v546 = vpop.xlane.xlu0 %545
    %v547 = vrcp.pop %v546
    %v548 = vmul.f32 %v543, %v547
    %v549 = vpack.c.bf16 %v548, %v548
    %550 = vrot.lane.b32.xlu0 %v258, 48
    %v551 = vpop.permute.xlu0 %550
    %v553 = vsel %vm262, %v549, 0
    %v556 = vsel %vm326, %v551, 0
    %558 = vmatprep.subr.bf16.mxu0 0
    %559 = vmatpush1.bf16.msra.mxu0 %v556
    %560 = vmatprep.subr.bf16.mxu0 0
    %561 = vmatpush1.bf16.msra.mxu0 0
    %562 = vmatprep.subr.bf16.mxu0 0
    %563 = vmatpush1.bf16.msra.mxu0 0
    %564 = vmatprep.subr.bf16.mxu0 0
    %565 = vmatpush1.bf16.msra.mxu0 0
    %566 = vmatprep.subr.bf16.mxu0 0
    %567 = vmatpush1.bf16.msra.mxu0 0
    %568 = vmatprep.subr.bf16.mxu0 0
    %569 = vmatpush1.bf16.msra.mxu0 0
    %570 = vmatprep.subr.bf16.mxu0 0
    %571 = vmatpush1.bf16.msra.mxu0 0
    %572 = vmatprep.subr.bf16.mxu0 0
    %573 = vmatpush1.bf16.msra.mxu0 0
    %574 = vmatprep.subr.bf16.mxu0 0
    %575 = vmatpush1.bf16.msra.mxu0 0
    %576 = vmatprep.subr.bf16.mxu0 0
    %577 = vmatpush1.bf16.msra.mxu0 0
    %578 = vmatprep.subr.bf16.mxu0 0
    %579 = vmatpush1.bf16.msra.mxu0 0
    %580 = vmatprep.subr.bf16.mxu0 0
    %581 = vmatpush1.bf16.msra.mxu0 0
    %582 = vmatprep.subr.bf16.mxu0 0
    %583 = vmatpush1.bf16.msra.mxu0 0
    %584 = vmatprep.subr.bf16.mxu0 0
    %585 = vmatpush1.bf16.msra.mxu0 0
    %586 = vmatprep.subr.bf16.mxu0 0
    %587 = vmatpush1.bf16.msra.mxu0 0
    %588 = vmatprep.subr.bf16.mxu0 0
    %589 = vmatpush1.bf16.msra.mxu0 0
    %590 = vmatprep.mubr.bf16.mxu0 0
    %591 = vmatmul.mubr.bf16.gmra.mrb[0].mxu0 %v553
    %v592 = vpop.f32.mrb[0].mxu0
    %v593 = vadd.f32 0.0, %v592
    %v594 = vpop.f32.mrb[0].mxu0
    %v595 = vpop.f32.mrb[0].mxu0
    %v596 = vpop.f32.mrb[0].mxu0
    %597 = vdwg.mxu0
    %599 = vrot.lane.b32.xlu0 %v593, 16
    %v600 = vpop.permute.xlu0 %599
    %vm602 = vcmask 195712
    %603 = vst.msk [vmem:[#allocation2] sm:$0xff] %vm602, %v600
    %604 = vrot.lane.b32.xlu0 %v257, 104
    %v605 = vpop.permute.xlu0 %604
    %606 = vrot.lane.b32.xlu0 %v258, 72
    %v607 = vpop.permute.xlu0 %606
    %v609 = vsel %vm262, %v605, 0
    %v612 = vsel %vm262, %v607, 0
    %614 = vmatprep.subr.bf16.mxu0 0
    %615 = vmatpush1.bf16.xpose.msra.mxu0 %v612
    %616 = vmatprep.subr.bf16.mxu0 0
    %617 = vmatpush1.bf16.xpose.msra.mxu0 0
    %618 = vmatprep.subr.bf16.mxu0 0
    %619 = vmatpush1.bf16.xpose.msra.mxu0 0
    %620 = vmatprep.subr.bf16.mxu0 0
    %621 = vmatpush1.bf16.xpose.msra.mxu0 0
    %622 = vmatprep.subr.bf16.mxu0 0
    %623 = vmatpush1.bf16.xpose.msra.mxu0 0
    %624 = vmatprep.subr.bf16.mxu0 0
    %625 = vmatpush1.bf16.xpose.msra.mxu0 0
    %626 = vmatprep.subr.bf16.mxu0 0
    %627 = vmatpush1.bf16.xpose.msra.mxu0 0
    %628 = vmatprep.subr.bf16.mxu0 0
    %629 = vmatpush1.bf16.xpose.msra.mxu0 0
    %630 = vmatprep.subr.bf16.mxu0 0
    %631 = vmatpush1.bf16.xpose.msra.mxu0 0
    %632 = vmatprep.subr.bf16.mxu0 0
    %633 = vmatpush1.bf16.xpose.msra.mxu0 0
    %634 = vmatprep.subr.bf16.mxu0 0
    %635 = vmatpush1.bf16.xpose.msra.mxu0 0
    %636 = vmatprep.subr.bf16.mxu0 0
    %637 = vmatpush1.bf16.xpose.msra.mxu0 0
    %638 = vmatprep.subr.bf16.mxu0 0
    %639 = vmatpush1.bf16.xpose.msra.mxu0 0
    %640 = vmatprep.subr.bf16.mxu0 0
    %641 = vmatpush1.bf16.xpose.msra.mxu0 0
    %642 = vmatprep.subr.bf16.mxu0 0
    %643 = vmatpush1.bf16.xpose.msra.mxu0 0
    %644 = vmatprep.subr.bf16.mxu0 0
    %645 = vmatpush1.bf16.xpose.msra.mxu0 0
    %646 = vmatprep.mubr.bf16.mxu0 0
    %647 = vmatmul.mubr.bf16.gmra.mrb[0].mxu0 %v609
    %v648 = vpop.f32.mrb[0].mxu0
    %v649 = vadd.f32 0.0, %v648
    %v650 = vpop.f32.mrb[0].mxu0
    %v651 = vpop.f32.mrb[0].mxu0
    %v652 = vpop.f32.mrb[0].mxu0
    %653 = vdwg.mxu0
    %v654 = vsel %vm262, %v649, -inf
    %655 = vmax.xlane.f32.xlu0 %v654
    %v656 = vpop.xlane.xlu0 %655
    %v657 = vsub.f32 %v649, %v656
    %v658 = vmul.f32 %v657, 1.442695
    %v659 = vpow.pop %v658
    %v660 = vsel %vm262, %v659, 0.0
    %661 = vadd.xlane.f32.xlu0 %v660
    %v662 = vpop.xlane.xlu0 %661
    %v663 = vrcp.pop %v662
    %v664 = vmul.f32 %v659, %v663
    %v665 = vpack.c.bf16 %v664, %v664
    %666 = vrot.lane.b32.xlu0 %v258, 40
    %v667 = vpop.permute.xlu0 %666
    %v669 = vsel %vm262, %v665, 0
    %v672 = vsel %vm326, %v667, 0
    %674 = vmatprep.subr.bf16.mxu0 0
    %675 = vmatpush1.bf16.msra.mxu0 %v672
    %676 = vmatprep.subr.bf16.mxu0 0
    %677 = vmatpush1.bf16.msra.mxu0 0
    %678 = vmatprep.subr.bf16.mxu0 0
    %679 = vmatpush1.bf16.msra.mxu0 0
    %680 = vmatprep.subr.bf16.mxu0 0
    %681 = vmatpush1.bf16.msra.mxu0 0
    %682 = vmatprep.subr.bf16.mxu0 0
    %683 = vmatpush1.bf16.msra.mxu0 0
    %684 = vmatprep.subr.bf16.mxu0 0
    %685 = vmatpush1.bf16.msra.mxu0 0
    %686 = vmatprep.subr.bf16.mxu0 0
    %687 = vmatpush1.bf16.msra.mxu0 0
    %688 = vmatprep.subr.bf16.mxu0 0
    %689 = vmatpush1.bf16.msra.mxu0 0
    %690 = vmatprep.subr.bf16.mxu0 0
    %691 = vmatpush1.bf16.msra.mxu0 0
    %692 = vmatprep.subr.bf16.mxu0 0
    %693 = vmatpush1.bf16.msra.mxu0 0
    %694 = vmatprep.subr.bf16.mxu0 0
    %695 = vmatpush1.bf16.msra.mxu0 0
    %696 = vmatprep.subr.bf16.mxu0 0
    %697 = vmatpush1.bf16.msra.mxu0 0
    %698 = vmatprep.subr.bf16.mxu0 0
    %699 = vmatpush1.bf16.msra.mxu0 0
    %700 = vmatprep.subr.bf16.mxu0 0
    %701 = vmatpush1.bf16.msra.mxu0 0
    %702 = vmatprep.subr.bf16.mxu0 0
    %703 = vmatpush1.bf16.msra.mxu0 0
    %704 = vmatprep.subr.bf16.mxu0 0
    %705 = vmatpush1.bf16.msra.mxu0 0
    %706 = vmatprep.mubr.bf16.mxu0 0
    %707 = vmatmul.mubr.bf16.gmra.mrb[0].mxu0 %v669
    %v708 = vpop.f32.mrb[0].mxu0
    %v709 = vadd.f32 0.0, %v708
    %v710 = vpop.f32.mrb[0].mxu0
    %v711 = vpop.f32.mrb[0].mxu0
    %v712 = vpop.f32.mrb[0].mxu0
    %713 = vdwg.mxu0
    %715 = vrot.lane.b32.xlu0 %v709, 24
    %v716 = vpop.permute.xlu0 %715
    %vm718 = vcmask 261312
    %719 = vst.msk [vmem:[#allocation2] sm:$0xff] %vm718, %v716
    %v720 = vmul.f32 %v253, 0.35355338
    %v721 = vpack.c.bf16 %v720, %v720
    %v722 = vpack.c.bf16 %v253, %v253
    %724 = vrot.lane.b32.xlu0 %v722, 96
    %v725 = vpop.permute.xlu0 %724
    %v727 = vsel %vm262, %v721, 0
    %v730 = vsel %vm262, %v725, 0
    %732 = vmatprep.subr.bf16.mxu0 0
    %733 = vmatpush1.bf16.xpose.msra.mxu0 %v730
    %734 = vmatprep.subr.bf16.mxu0 0
    %735 = vmatpush1.bf16.xpose.msra.mxu0 0
    %736 = vmatprep.subr.bf16.mxu0 0
    %737 = vmatpush1.bf16.xpose.msra.mxu0 0
    %738 = vmatprep.subr.bf16.mxu0 0
    %739 = vmatpush1.bf16.xpose.msra.mxu0 0
    %740 = vmatprep.subr.bf16.mxu0 0
    %741 = vmatpush1.bf16.xpose.msra.mxu0 0
    %742 = vmatprep.subr.bf16.mxu0 0
    %743 = vmatpush1.bf16.xpose.msra.mxu0 0
    %744 = vmatprep.subr.bf16.mxu0 0
    %745 = vmatpush1.bf16.xpose.msra.mxu0 0
    %746 = vmatprep.subr.bf16.mxu0 0
    %747 = vmatpush1.bf16.xpose.msra.mxu0 0
    %748 = vmatprep.subr.bf16.mxu0 0
    %749 = vmatpush1.bf16.xpose.msra.mxu0 0
    %750 = vmatprep.subr.bf16.mxu0 0
    %751 = vmatpush1.bf16.xpose.msra.mxu0 0
    %752 = vmatprep.subr.bf16.mxu0 0
    %753 = vmatpush1.bf16.xpose.msra.mxu0 0
    %754 = vmatprep.subr.bf16.mxu0 0
    %755 = vmatpush1.bf16.xpose.msra.mxu0 0
    %756 = vmatprep.subr.bf16.mxu0 0
    %757 = vmatpush1.bf16.xpose.msra.mxu0 0
    %758 = vmatprep.subr.bf16.mxu0 0
    %759 = vmatpush1.bf16.xpose.msra.mxu0 0
    %760 = vmatprep.subr.bf16.mxu0 0
    %761 = vmatpush1.bf16.xpose.msra.mxu0 0
    %762 = vmatprep.subr.bf16.mxu0 0
    %763 = vmatpush1.bf16.xpose.msra.mxu0 0
    %764 = vmatprep.mubr.bf16.mxu0 0
    %765 = vmatmul.mubr.bf16.gmra.mrb[0].mxu0 %v727
    %v766 = vpop.f32.mrb[0].mxu0
    %v767 = vadd.f32 0.0, %v766
    %v768 = vpop.f32.mrb[0].mxu0
    %v769 = vpop.f32.mrb[0].mxu0
    %v770 = vpop.f32.mrb[0].mxu0
    %771 = vdwg.mxu0
    %v772 = vsel %vm262, %v767, -inf
    %773 = vmax.xlane.f32.xlu0 %v772
    %v774 = vpop.xlane.xlu0 %773
    %v775 = vsub.f32 %v767, %v774
    %v776 = vmul.f32 %v775, 1.442695
    %v777 = vpow.pop %v776
    %v778 = vsel %vm262, %v777, 0.0
    %779 = vadd.xlane.f32.xlu0 %v778
    %v780 = vpop.xlane.xlu0 %779
    %v781 = vrcp.pop %v780
    %v782 = vmul.f32 %v777, %v781
    %v783 = vpack.c.bf16 %v782, %v782
    %784 = vrot.lane.b32.xlu0 %v722, 64
    %v785 = vpop.permute.xlu0 %784
    %v787 = vsel %vm262, %v783, 0
    %v790 = vsel %vm326, %v785, 0
    %792 = vmatprep.subr.bf16.mxu0 0
    %793 = vmatpush1.bf16.msra.mxu0 %v790
    %794 = vmatprep.subr.bf16.mxu0 0
    %795 = vmatpush1.bf16.msra.mxu0 0
    %796 = vmatprep.subr.bf16.mxu0 0
    %797 = vmatpush1.bf16.msra.mxu0 0
    %798 = vmatprep.subr.bf16.mxu0 0
    %799 = vmatpush1.bf16.msra.mxu0 0
    %800 = vmatprep.subr.bf16.mxu0 0
    %801 = vmatpush1.bf16.msra.mxu0 0
    %802 = vmatprep.subr.bf16.mxu0 0
    %803 = vmatpush1.bf16.msra.mxu0 0
    %804 = vmatprep.subr.bf16.mxu0 0
    %805 = vmatpush1.bf16.msra.mxu0 0
    %806 = vmatprep.subr.bf16.mxu0 0
    %807 = vmatpush1.bf16.msra.mxu0 0
    %808 = vmatprep.subr.bf16.mxu0 0
    %809 = vmatpush1.bf16.msra.mxu0 0
    %810 = vmatprep.subr.bf16.mxu0 0
    %811 = vmatpush1.bf16.msra.mxu0 0
    %812 = vmatprep.subr.bf16.mxu0 0
    %813 = vmatpush1.bf16.msra.mxu0 0
    %814 = vmatprep.subr.bf16.mxu0 0
    %815 = vmatpush1.bf16.msra.mxu0 0
    %816 = vmatprep.subr.bf16.mxu0 0
    %817 = vmatpush1.bf16.msra.mxu0 0
    %818 = vmatprep.subr.bf16.mxu0 0
    %819 = vmatpush1.bf16.msra.mxu0 0
    %820 = vmatprep.subr.bf16.mxu0 0
    %821 = vmatpush1.bf16.msra.mxu0 0
    %822 = vmatprep.subr.bf16.mxu0 0
    %823 = vmatpush1.bf16.msra.mxu0 0
    %824 = vmatprep.mubr.bf16.mxu0 0
    %825 = vmatmul.mubr.bf16.gmra.mrb[0].mxu0 %v787
    %v826 = vpop.f32.mrb[0].mxu0
    %v827 = vadd.f32 0.0, %v826
    %v828 = vpop.f32.mrb[0].mxu0
    %v829 = vpop.f32.mrb[0].mxu0
    %v830 = vpop.f32.mrb[0].mxu0
    %831 = vdwg.mxu0
    %832 = vst.msk [vmem:[#allocation2 + $0x8] sm:$0xff] %vm262, %v827
    %834 = vrot.lane.b32.xlu0 %v721, 120
    %v835 = vpop.permute.xlu0 %834
    %836 = vrot.lane.b32.xlu0 %v722, 88
    %v837 = vpop.permute.xlu0 %836
    %v839 = vsel %vm262, %v835, 0
    %v842 = vsel %vm262, %v837, 0
    %844 = vmatprep.subr.bf16.mxu0 0
    %845 = vmatpush1.bf16.xpose.msra.mxu0 %v842
    %846 = vmatprep.subr.bf16.mxu0 0
    %847 = vmatpush1.bf16.xpose.msra.mxu0 0
    %848 = vmatprep.subr.bf16.mxu0 0
    %849 = vmatpush1.bf16.xpose.msra.mxu0 0
    %850 = vmatprep.subr.bf16.mxu0 0
    %851 = vmatpush1.bf16.xpose.msra.mxu0 0
    %852 = vmatprep.subr.bf16.mxu0 0
    %853 = vmatpush1.bf16.xpose.msra.mxu0 0
    %854 = vmatprep.subr.bf16.mxu0 0
    %855 = vmatpush1.bf16.xpose.msra.mxu0 0
    %856 = vmatprep.subr.bf16.mxu0 0
    %857 = vmatpush1.bf16.xpose.msra.mxu0 0
    %858 = vmatprep.subr.bf16.mxu0 0
    %859 = vmatpush1.bf16.xpose.msra.mxu0 0
    %860 = vmatprep.subr.bf16.mxu0 0
    %861 = vmatpush1.bf16.xpose.msra.mxu0 0
    %862 = vmatprep.subr.bf16.mxu0 0
    %863 = vmatpush1.bf16.xpose.msra.mxu0 0
    %864 = vmatprep.subr.bf16.mxu0 0
    %865 = vmatpush1.bf16.xpose.msra.mxu0 0
    %866 = vmatprep.subr.bf16.mxu0 0
    %867 = vmatpush1.bf16.xpose.msra.mxu0 0
    %868 = vmatprep.subr.bf16.mxu0 0
    %869 = vmatpush1.bf16.xpose.msra.mxu0 0
    %870 = vmatprep.subr.bf16.mxu0 0
    %871 = vmatpush1.bf16.xpose.msra.mxu0 0
    %872 = vmatprep.subr.bf16.mxu0 0
    %873 = vmatpush1.bf16.xpose.msra.mxu0 0
    %874 = vmatprep.subr.bf16.mxu0 0
    %875 = vmatpush1.bf16.xpose.msra.mxu0 0
    %876 = vmatprep.mubr.bf16.mxu0 0
    %877 = vmatmul.mubr.bf16.gmra.mrb[0].mxu0 %v839
    %v878 = vpop.f32.mrb[0].mxu0
    %v879 = vadd.f32 0.0, %v878
    %v880 = vpop.f32.mrb[0].mxu0
    %v881 = vpop.f32.mrb[0].mxu0
    %v882 = vpop.f32.mrb[0].mxu0
    %883 = vdwg.mxu0
    %v884 = vsel %vm262, %v879, -inf
    %885 = vmax.xlane.f32.xlu0 %v884
    %v886 = vpop.xlane.xlu0 %885
    %v887 = vsub.f32 %v879, %v886
    %v888 = vmul.f32 %v887, 1.442695
    %v889 = vpow.pop %v888
    %v890 = vsel %vm262, %v889, 0.0
    %891 = vadd.xlane.f32.xlu0 %v890
    %v892 = vpop.xlane.xlu0 %891
    %v893 = vrcp.pop %v892
    %v894 = vmul.f32 %v889, %v893
    %v895 = vpack.c.bf16 %v894, %v894
    %896 = vrot.lane.b32.xlu0 %v722, 56
    %v897 = vpop.permute.xlu0 %896
    %v899 = vsel %vm262, %v895, 0
    %v902 = vsel %vm326, %v897, 0
    %904 = vmatprep.subr.bf16.mxu0 0
    %905 = vmatpush1.bf16.msra.mxu0 %v902
    %906 = vmatprep.subr.bf16.mxu0 0
    %907 = vmatpush1.bf16.msra.mxu0 0
    %908 = vmatprep.subr.bf16.mxu0 0
    %909 = vmatpush1.bf16.msra.mxu0 0
    %910 = vmatprep.subr.bf16.mxu0 0
    %911 = vmatpush1.bf16.msra.mxu0 0
    %912 = vmatprep.subr.bf16.mxu0 0
    %913 = vmatpush1.bf16.msra.mxu0 0
    %914 = vmatprep.subr.bf16.mxu0 0
    %915 = vmatpush1.bf16.msra.mxu0 0
    %916 = vmatprep.subr.bf16.mxu0 0
    %917 = vmatpush1.bf16.msra.mxu0 0
    %918 = vmatprep.subr.bf16.mxu0 0
    %919 = vmatpush1.bf16.msra.mxu0 0
    %920 = vmatprep.subr.bf16.mxu0 0
    %921 = vmatpush1.bf16.msra.mxu0 0
    %922 = vmatprep.subr.bf16.mxu0 0
    %923 = vmatpush1.bf16.msra.mxu0 0
    %924 = vmatprep.subr.bf16.mxu0 0
    %925 = vmatpush1.bf16.msra.mxu0 0
    %926 = vmatprep.subr.bf16.mxu0 0
    %927 = vmatpush1.bf16.msra.mxu0 0
    %928 = vmatprep.subr.bf16.mxu0 0
    %929 = vmatpush1.bf16.msra.mxu0 0
    %930 = vmatprep.subr.bf16.mxu0 0
    %931 = vmatpush1.bf16.msra.mxu0 0
    %932 = vmatprep.subr.bf16.mxu0 0
    %933 = vmatpush1.bf16.msra.mxu0 0
    %934 = vmatprep.subr.bf16.mxu0 0
    %935 = vmatpush1.bf16.msra.mxu0 0
    %936 = vmatprep.mubr.bf16.mxu0 0
    %937 = vmatmul.mubr.bf16.gmra.mrb[0].mxu0 %v899
    %v938 = vpop.f32.mrb[0].mxu0
    %v939 = vadd.f32 0.0, %v938
    %v940 = vpop.f32.mrb[0].mxu0
    %v941 = vpop.f32.mrb[0].mxu0
    %v942 = vpop.f32.mrb[0].mxu0
    %943 = vdwg.mxu0
    %945 = vrot.lane.b32.xlu0 %v939, 8
    %v946 = vpop.permute.xlu0 %945
    %948 = vst.msk [vmem:[#allocation2 + $0x8] sm:$0xff] %vm486, %v946
    %949 = vrot.lane.b32.xlu0 %v721, 112
    %v950 = vpop.permute.xlu0 %949
    %951 = vrot.lane.b32.xlu0 %v722, 80
    %v952 = vpop.permute.xlu0 %951
    %v954 = vsel %vm262, %v950, 0
    %v957 = vsel %vm262, %v952, 0
    %959 = vmatprep.subr.bf16.mxu0 0
    %960 = vmatpush1.bf16.xpose.msra.mxu0 %v957
    %961 = vmatprep.subr.bf16.mxu0 0
    %962 = vmatpush1.bf16.xpose.msra.mxu0 0
    %963 = vmatprep.subr.bf16.mxu0 0
    %964 = vmatpush1.bf16.xpose.msra.mxu0 0
    %965 = vmatprep.subr.bf16.mxu0 0
    %966 = vmatpush1.bf16.xpose.msra.mxu0 0
    %967 = vmatprep.subr.bf16.mxu0 0
    %968 = vmatpush1.bf16.xpose.msra.mxu0 0
    %969 = vmatprep.subr.bf16.mxu0 0
    %970 = vmatpush1.bf16.xpose.msra.mxu0 0
    %971 = vmatprep.subr.bf16.mxu0 0
    %972 = vmatpush1.bf16.xpose.msra.mxu0 0
    %973 = vmatprep.subr.bf16.mxu0 0
    %974 = vmatpush1.bf16.xpose.msra.mxu0 0
    %975 = vmatprep.subr.bf16.mxu0 0
    %976 = vmatpush1.bf16.xpose.msra.mxu0 0
    %977 = vmatprep.subr.bf16.mxu0 0
    %978 = vmatpush1.bf16.xpose.msra.mxu0 0
    %979 = vmatprep.subr.bf16.mxu0 0
    %980 = vmatpush1.bf16.xpose.msra.mxu0 0
    %981 = vmatprep.subr.bf16.mxu0 0
    %982 = vmatpush1.bf16.xpose.msra.mxu0 0
    %983 = vmatprep.subr.bf16.mxu0 0
    %984 = vmatpush1.bf16.xpose.msra.mxu0 0
    %985 = vmatprep.subr.bf16.mxu0 0
    %986 = vmatpush1.bf16.xpose.msra.mxu0 0
    %987 = vmatprep.subr.bf16.mxu0 0
    %988 = vmatpush1.bf16.xpose.msra.mxu0 0
    %989 = vmatprep.subr.bf16.mxu0 0
    %990 = vmatpush1.bf16.xpose.msra.mxu0 0
    %991 = vmatprep.mubr.bf16.mxu0 0
    %992 = vmatmul.mubr.bf16.gmra.mrb[0].mxu0 %v954
    %v993 = vpop.f32.mrb[0].mxu0
    %v994 = vadd.f32 0.0, %v993
    %v995 = vpop.f32.mrb[0].mxu0
    %v996 = vpop.f32.mrb[0].mxu0
    %v997 = vpop.f32.mrb[0].mxu0
    %998 = vdwg.mxu0
    %v999 = vsel %vm262, %v994, -inf
    %1000 = vmax.xlane.f32.xlu0 %v999
    %v1001 = vpop.xlane.xlu0 %1000
    %v1002 = vsub.f32 %v994, %v1001
    %v1003 = vmul.f32 %v1002, 1.442695
    %v1004 = vpow.pop %v1003
    %v1005 = vsel %vm262, %v1004, 0.0
    %1006 = vadd.xlane.f32.xlu0 %v1005
    %v1007 = vpop.xlane.xlu0 %1006
    %v1008 = vrcp.pop %v1007
    %v1009 = vmul.f32 %v1004, %v1008
    %v1010 = vpack.c.bf16 %v1009, %v1009
    %1011 = vrot.lane.b32.xlu0 %v722, 48
    %v1012 = vpop.permute.xlu0 %1011
    %v1014 = vsel %vm262, %v1010, 0
    %v1017 = vsel %vm326, %v1012, 0
    %1019 = vmatprep.subr.bf16.mxu0 0
    %1020 = vmatpush1.bf16.msra.mxu0 %v1017
    %1021 = vmatprep.subr.bf16.mxu0 0
    %1022 = vmatpush1.bf16.msra.mxu0 0
    %1023 = vmatprep.subr.bf16.mxu0 0
    %1024 = vmatpush1.bf16.msra.mxu0 0
    %1025 = vmatprep.subr.bf16.mxu0 0
    %1026 = vmatpush1.bf16.msra.mxu0 0
    %1027 = vmatprep.subr.bf16.mxu0 0
    %1028 = vmatpush1.bf16.msra.mxu0 0
    %1029 = vmatprep.subr.bf16.mxu0 0
    %1030 = vmatpush1.bf16.msra.mxu0 0
    %1031 = vmatprep.subr.bf16.mxu0 0
    %1032 = vmatpush1.bf16.msra.mxu0 0
    %1033 = vmatprep.subr.bf16.mxu0 0
    %1034 = vmatpush1.bf16.msra.mxu0 0
    %1035 = vmatprep.subr.bf16.mxu0 0
    %1036 = vmatpush1.bf16.msra.mxu0 0
    %1037 = vmatprep.subr.bf16.mxu0 0
    %1038 = vmatpush1.bf16.msra.mxu0 0
    %1039 = vmatprep.subr.bf16.mxu0 0
    %1040 = vmatpush1.bf16.msra.mxu0 0
    %1041 = vmatprep.subr.bf16.mxu0 0
    %1042 = vmatpush1.bf16.msra.mxu0 0
    %1043 = vmatprep.subr.bf16.mxu0 0
    %1044 = vmatpush1.bf16.msra.mxu0 0
    %1045 = vmatprep.subr.bf16.mxu0 0
    %1046 = vmatpush1.bf16.msra.mxu0 0
    %1047 = vmatprep.subr.bf16.mxu0 0
    %1048 = vmatpush1.bf16.msra.mxu0 0
    %1049 = vmatprep.subr.bf16.mxu0 0
    %1050 = vmatpush1.bf16.msra.mxu0 0
    %1051 = vmatprep.mubr.bf16.mxu0 0
    %1052 = vmatmul.mubr.bf16.gmra.mrb[0].mxu0 %v1014
    %v1053 = vpop.f32.mrb[0].mxu0
    %v1054 = vadd.f32 0.0, %v1053
    %v1055 = vpop.f32.mrb[0].mxu0
    %v1056 = vpop.f32.mrb[0].mxu0
    %v1057 = vpop.f32.mrb[0].mxu0
    %1058 = vdwg.mxu0
    %1060 = vrot.lane.b32.xlu0 %v1054, 16
    %v1061 = vpop.permute.xlu0 %1060
    %1063 = vst.msk [vmem:[#allocation2 + $0x8] sm:$0xff] %vm602, %v1061
    %1064 = vrot.lane.b32.xlu0 %v721, 104
    %v1065 = vpop.permute.xlu0 %1064
    %1066 = vrot.lane.b32.xlu0 %v722, 72
    %v1067 = vpop.permute.xlu0 %1066
    %v1069 = vsel %vm262, %v1065, 0
    %v1072 = vsel %vm262, %v1067, 0
    %1074 = vmatprep.subr.bf16.mxu0 0
    %1075 = vmatpush1.bf16.xpose.msra.mxu0 %v1072
    %1076 = vmatprep.subr.bf16.mxu0 0
    %1077 = vmatpush1.bf16.xpose.msra.mxu0 0
    %1078 = vmatprep.subr.bf16.mxu0 0
    %1079 = vmatpush1.bf16.xpose.msra.mxu0 0
    %1080 = vmatprep.subr.bf16.mxu0 0
    %1081 = vmatpush1.bf16.xpose.msra.mxu0 0
    %1082 = vmatprep.subr.bf16.mxu0 0
    %1083 = vmatpush1.bf16.xpose.msra.mxu0 0
    %1084 = vmatprep.subr.bf16.mxu0 0
    %1085 = vmatpush1.bf16.xpose.msra.mxu0 0
    %1086 = vmatprep.subr.bf16.mxu0 0
    %1087 = vmatpush1.bf16.xpose.msra.mxu0 0
    %1088 = vmatprep.subr.bf16.mxu0 0
    %1089 = vmatpush1.bf16.xpose.msra.mxu0 0
    %1090 = vmatprep.subr.bf16.mxu0 0
    %1091 = vmatpush1.bf16.xpose.msra.mxu0 0
    %1092 = vmatprep.subr.bf16.mxu0 0
    %1093 = vmatpush1.bf16.xpose.msra.mxu0 0
    %1094 = vmatprep.subr.bf16.mxu0 0
    %1095 = vmatpush1.bf16.xpose.msra.mxu0 0
    %1096 = vmatprep.subr.bf16.mxu0 0
    %1097 = vmatpush1.bf16.xpose.msra.mxu0 0
    %1098 = vmatprep.subr.bf16.mxu0 0
    %1099 = vmatpush1.bf16.xpose.msra.mxu0 0
    %1100 = vmatprep.subr.bf16.mxu0 0
    %1101 = vmatpush1.bf16.xpose.msra.mxu0 0
    %1102 = vmatprep.subr.bf16.mxu0 0
    %1103 = vmatpush1.bf16.xpose.msra.mxu0 0
    %1104 = vmatprep.subr.bf16.mxu0 0
    %1105 = vmatpush1.bf16.xpose.msra.mxu0 0
    %1106 = vmatprep.mubr.bf16.mxu0 0
    %1107 = vmatmul.mubr.bf16.gmra.mrb[0].mxu0 %v1069
    %v1108 = vpop.f32.mrb[0].mxu0
    %v1109 = vadd.f32 0.0, %v1108
    %v1110 = vpop.f32.mrb[0].mxu0
    %v1111 = vpop.f32.mrb[0].mxu0
    %v1112 = vpop.f32.mrb[0].mxu0
    %1113 = vdwg.mxu0
    %v1114 = vsel %vm262, %v1109, -inf
    %1115 = vmax.xlane.f32.xlu0 %v1114
    %v1116 = vpop.xlane.xlu0 %1115
    %v1117 = vsub.f32 %v1109, %v1116
    %v1118 = vmul.f32 %v1117, 1.442695
    %v1119 = vpow.pop %v1118
    %v1120 = vsel %vm262, %v1119, 0.0
    %1121 = vadd.xlane.f32.xlu0 %v1120
    %v1122 = vpop.xlane.xlu0 %1121
    %v1123 = vrcp.pop %v1122
    %v1124 = vmul.f32 %v1119, %v1123
    %v1125 = vpack.c.bf16 %v1124, %v1124
    %1126 = vrot.lane.b32.xlu0 %v722, 40
    %v1127 = vpop.permute.xlu0 %1126
    %v1129 = vsel %vm262, %v1125, 0
    %v1132 = vsel %vm326, %v1127, 0
    %1134 = vmatprep.subr.bf16.mxu0 0
    %1135 = vmatpush1.bf16.msra.mxu0 %v1132
    %1136 = vmatprep.subr.bf16.mxu0 0
    %1137 = vmatpush1.bf16.msra.mxu0 0
    %1138 = vmatprep.subr.bf16.mxu0 0
    %1139 = vmatpush1.bf16.msra.mxu0 0
    %1140 = vmatprep.subr.bf16.mxu0 0
    %1141 = vmatpush1.bf16.msra.mxu0 0
    %1142 = vmatprep.subr.bf16.mxu0 0
    %1143 = vmatpush1.bf16.msra.mxu0 0
    %1144 = vmatprep.subr.bf16.mxu0 0
    %1145 = vmatpush1.bf16.msra.mxu0 0
    %1146 = vmatprep.subr.bf16.mxu0 0
    %1147 = vmatpush1.bf16.msra.mxu0 0
    %1148 = vmatprep.subr.bf16.mxu0 0
    %1149 = vmatpush1.bf16.msra.mxu0 0
    %1150 = vmatprep.subr.bf16.mxu0 0
    %1151 = vmatpush1.bf16.msra.mxu0 0
    %1152 = vmatprep.subr.bf16.mxu0 0
    %1153 = vmatpush1.bf16.msra.mxu0 0
    %1154 = vmatprep.subr.bf16.mxu0 0
    %1155 = vmatpush1.bf16.msra.mxu0 0
    %1156 = vmatprep.subr.bf16.mxu0 0
    %1157 = vmatpush1.bf16.msra.mxu0 0
    %1158 = vmatprep.subr.bf16.mxu0 0
    %1159 = vmatpush1.bf16.msra.mxu0 0
    %1160 = vmatprep.subr.bf16.mxu0 0
    %1161 = vmatpush1.bf16.msra.mxu0 0
    %1162 = vmatprep.subr.bf16.mxu0 0
    %1163 = vmatpush1.bf16.msra.mxu0 0
    %1164 = vmatprep.subr.bf16.mxu0 0
    %1165 = vmatpush1.bf16.msra.mxu0 0
    %1166 = vmatprep.mubr.bf16.mxu0 0
    %1167 = vmatmul.mubr.bf16.gmra.mrb[0].mxu0 %v1129
    %v1168 = vpop.f32.mrb[0].mxu0
    %v1169 = vadd.f32 0.0, %v1168
    %v1170 = vpop.f32.mrb[0].mxu0
    %v1171 = vpop.f32.mrb[0].mxu0
    %v1172 = vpop.f32.mrb[0].mxu0
    %1173 = vdwg.mxu0
    %1175 = vrot.lane.b32.xlu0 %v1169, 24
    %v1176 = vpop.permute.xlu0 %1175
    %1178 = vst.msk [vmem:[#allocation2 + $0x8] sm:$0xff] %vm718, %v1176
    %v1179 = vld [vmem:[#allocation2] sm:$0xff]
    %v1180 = vld [vmem:[#allocation2 + $0x8] sm:$0xff]
    %v1181 = vpack.c.bf16 %v1180, %v1179
    %v1182 = vld [vmem:[#allocation3] sm:$0xf]
    %v1183 = vld [vmem:[#allocation3 + $0x4] sm:$0xf]
    %v1184 = vld [vmem:[#allocation3 + $0x8] sm:$0xf]
    %v1185 = vld [vmem:[#allocation3 + $0xc] sm:$0xf]
    %v1186 = vld [vmem:[#allocation6] sm:$0x1]
    %v1188 = vlaneseq
    %v1189 = vshrl.u32 %v1188, 7
    %v1190 = vsub.s32 0, %v1189
    %v1191 = vrot.slane %v1186, %v1190
    %v1197 = vunpack.c.l.b16 %v1182
    %v1198 = vunpack.c.l.b16 %v1183
    %v1199 = vunpack.c.l.b16 %v1184
    %v1200 = vunpack.c.l.b16 %v1185
    %v1201 = vpack.c.b16 %v1198, %v1197
    %v1202 = vpack.c.b16 %v1200, %v1199
    %v1206 = vsel %vm211, %v1181, 0
    %1208 = vmatprep.subr.bf16.mxu0 0
    %1209 = vmatpush1.bf16.msra.mxu0 %v1201
    %1210 = vmatprep.subr.bf16.mxu0 0
    %1211 = vmatpush1.bf16.msra.mxu0 %v1202
    %1212 = vmatprep.subr.bf16.mxu0 0
    %1213 = vmatpush1.bf16.msra.mxu0 0
    %1214 = vmatprep.subr.bf16.mxu0 0
    %1215 = vmatpush1.bf16.msra.mxu0 0
    %1216 = vmatprep.subr.bf16.mxu0 0
    %1217 = vmatpush1.bf16.msra.mxu0 0
    %1218 = vmatprep.subr.bf16.mxu0 0
    %1219 = vmatpush1.bf16.msra.mxu0 0
    %1220 = vmatprep.subr.bf16.mxu0 0
    %1221 = vmatpush1.bf16.msra.mxu0 0
    %1222 = vmatprep.subr.bf16.mxu0 0
    %1223 = vmatpush1.bf16.msra.mxu0 0
    %1224 = vmatprep.subr.bf16.mxu0 0
    %1225 = vmatpush1.bf16.msra.mxu0 0
    %1226 = vmatprep.subr.bf16.mxu0 0
    %1227 = vmatpush1.bf16.msra.mxu0 0
    %1228 = vmatprep.subr.bf16.mxu0 0
    %1229 = vmatpush1.bf16.msra.mxu0 0
    %1230 = vmatprep.subr.bf16.mxu0 0
    %1231 = vmatpush1.bf16.msra.mxu0 0
    %1232 = vmatprep.subr.bf16.mxu0 0
    %1233 = vmatpush1.bf16.msra.mxu0 0
    %1234 = vmatprep.subr.bf16.mxu0 0
    %1235 = vmatpush1.bf16.msra.mxu0 0
    %1236 = vmatprep.subr.bf16.mxu0 0
    %1237 = vmatpush1.bf16.msra.mxu0 0
    %1238 = vmatprep.subr.bf16.mxu0 0
    %1239 = vmatpush1.bf16.msra.mxu0 0
    %1240 = vmatprep.mubr.bf16.mxu0 0
    %1241 = vmatmul.mubr.bf16.gmra.mrb[0].mxu0 %v1206
    %v1242 = vpop.f32.mrb[0].mxu0
    %v1243 = vadd.f32 %v1191, %v1242
    %v1244 = vpop.f32.mrb[0].mxu0
    %v1245 = vpop.f32.mrb[0].mxu0
    %v1246 = vadd.f32 %v1191, %v1245
    %v1247 = vpop.f32.mrb[0].mxu0
    %1248 = vdwg.mxu0
    %v1249 = vadd.f32 %v183, %v1243
    %v1250 = vadd.f32 %v184, %v1246
    %v1251 = vld [vmem:[#allocation8] sm:$0x1]
    %v1252 = vld [vmem:[#allocation9] sm:$0x1]
    %v1253 = vsel %vm211, %v1249, 0.0
    %1254 = vadd.xlane.f32.xlu0 %v1253
    %v1255 = vpop.xlane.xlu0 %1254
    %v1256 = vsel %vm211, %v1250, 0.0
    %1257 = vadd.xlane.f32.xlu0 %v1256
    %v1258 = vpop.xlane.xlu0 %1257
    %v1259 = vrcp.pop 32.0
    %v1260 = vmul.f32 %v1255, %v1259
    %v1261 = vmul.f32 %v1258, %v1259
    %v1262 = vsub.f32 %v1249, %v1260
    %v1263 = vsub.f32 %v1250, %v1261
    %v1264 = vmul.f32 %v1262, %v1262
    %v1265 = vmul.f32 %v1263, %v1263
    %v1266 = vsel %vm211, %v1264, 0.0
    %1267 = vadd.xlane.f32.xlu0 %v1266
    %v1268 = vpop.xlane.xlu0 %1267
    %v1269 = vsel %vm211, %v1265, 0.0
    %1270 = vadd.xlane.f32.xlu0 %v1269
    %v1271 = vpop.xlane.xlu0 %1270
    %v1272 = vmul.f32 %v1268, %v1259
    %v1273 = vmul.f32 %v1271, %v1259
    %v1274 = vadd.f32 %v1272, 1e-05
    %v1275 = vadd.f32 %v1273, 1e-05
    %v1276 = vrsqrt.pop %v1274
    %v1277 = vrsqrt.pop %v1275
    %v1278 = vmul.f32 %v1262, %v1276
    %v1279 = vmul.f32 %v1263, %v1277
    %v1281 = vlaneseq
    %v1282 = vshrl.u32 %v1281, 7
    %v1283 = vsub.s32 0, %v1282
    %v1284 = vrot.slane %v1251, %v1283
    %v1286 = vmul.f32 %v1278, %v1284
    %v1287 = vmul.f32 %v1279, %v1284
    %v1289 = vlaneseq
    %v1290 = vshrl.u32 %v1289, 7
    %v1291 = vsub.s32 0, %v1290
    %v1292 = vrot.slane %v1252, %v1291
    %v1294 = vadd.f32 %v1286, %v1292
    %v1295 = vadd.f32 %v1287, %v1292
    %v1296 = vpack.c.bf16 %v1295, %v1294
    %v1297 = vld [vmem:[#allocation11] sm:$0xf]
    %v1298 = vld [vmem:[#allocation11 + $0x4] sm:$0xf]
    %v1299 = vld [vmem:[#allocation11 + $0x8] sm:$0xf]
    %v1300 = vld [vmem:[#allocation11 + $0xc] sm:$0xf]
    %v1301 = vld [vmem:[#allocation12] sm:$0x1]
    %v1303 = vlaneseq
    %v1304 = vshrl.u32 %v1303, 7
    %v1305 = vsub.s32 0, %v1304
    %v1306 = vrot.slane %v1301, %v1305
    %v1312 = vunpack.c.l.b16 %v1297
    %v1313 = vunpack.c.l.b16 %v1298
    %v1314 = vunpack.c.l.b16 %v1299
    %v1315 = vunpack.c.l.b16 %v1300
    %v1316 = vpack.c.b16 %v1313, %v1312
    %v1317 = vpack.c.b16 %v1315, %v1314
    %v1321 = vsel %vm211, %v1296, 0
    %1323 = vmatprep.subr.bf16.mxu0 0
    %1324 = vmatpush1.bf16.msra.mxu0 %v1316
    %1325 = vmatprep.subr.bf16.mxu0 0
    %1326 = vmatpush1.bf16.msra.mxu0 %v1317
    %1327 = vmatprep.subr.bf16.mxu0 0
    %1328 = vmatpush1.bf16.msra.mxu0 0
    %1329 = vmatprep.subr.bf16.mxu0 0
    %1330 = vmatpush1.bf16.msra.mxu0 0
    %1331 = vmatprep.subr.bf16.mxu0 0
    %1332 = vmatpush1.bf16.msra.mxu0 0
    %1333 = vmatprep.subr.bf16.mxu0 0
    %1334 = vmatpush1.bf16.msra.mxu0 0
    %1335 = vmatprep.subr.bf16.mxu0 0
    %1336 = vmatpush1.bf16.msra.mxu0 0
    %1337 = vmatprep.subr.bf16.mxu0 0
    %1338 = vmatpush1.bf16.msra.mxu0 0
    %1339 = vmatprep.subr.bf16.mxu0 0
    %1340 = vmatpush1.bf16.msra.mxu0 0
    %1341 = vmatprep.subr.bf16.mxu0 0
    %1342 = vmatpush1.bf16.msra.mxu0 0
    %1343 = vmatprep.subr.bf16.mxu0 0
    %1344 = vmatpush1.bf16.msra.mxu0 0
    %1345 = vmatprep.subr.bf16.mxu0 0
    %1346 = vmatpush1.bf16.msra.mxu0 0
    %1347 = vmatprep.subr.bf16.mxu0 0
    %1348 = vmatpush1.bf16.msra.mxu0 0
    %1349 = vmatprep.subr.bf16.mxu0 0
    %1350 = vmatpush1.bf16.msra.mxu0 0
    %1351 = vmatprep.subr.bf16.mxu0 0
    %1352 = vmatpush1.bf16.msra.mxu0 0
    %1353 = vmatprep.subr.bf16.mxu0 0
    %1354 = vmatpush1.bf16.msra.mxu0 0
    %1355 = vmatprep.mubr.bf16.mxu0 0
    %1356 = vmatmul.mubr.bf16.gmra.mrb[0].mxu0 %v1321
    %v1357 = vpop.f32.mrb[0].mxu0
    %v1358 = vadd.f32 %v1306, %v1357
    %v1359 = vpop.f32.mrb[0].mxu0
    %v1360 = vpop.f32.mrb[0].mxu0
    %v1361 = vadd.f32 %v1306, %v1360
    %v1362 = vpop.f32.mrb[0].mxu0
    %1363 = vdwg.mxu0
    %v1364 = vpack.c.bf16 %v186, %v185
    %v1365 = vld [vmem:[%s10] sm:$0xf]
    %v1366 = vld [vmem:[%s10 + $0x4] sm:$0xf]
    %v1367 = vld [vmem:[%s10 + $0x8] sm:$0xf]
    %v1368 = vld [vmem:[%s10 + $0xc] sm:$0xf]
    %v1369 = vld [vmem:[#allocation14] sm:$0x1]
    %v1371 = vlaneseq
    %v1372 = vshrl.u32 %v1371, 7
    %v1373 = vsub.s32 0, %v1372
    %v1374 = vrot.slane %v1369, %v1373
    %v1380 = vunpack.c.l.b16 %v1365
    %v1381 = vunpack.c.l.b16 %v1366
    %v1382 = vunpack.c.l.b16 %v1367
    %v1383 = vunpack.c.l.b16 %v1368
    %v1384 = vpack.c.b16 %v1381, %v1380
    %v1385 = vpack.c.b16 %v1383, %v1382
    %v1389 = vsel %vm211, %v1364, 0
    %1391 = vmatprep.subr.bf16.mxu0 0
    %1392 = vmatpush1.bf16.msra.mxu0 %v1384
    %1393 = vmatprep.subr.bf16.mxu0 0
    %1394 = vmatpush1.bf16.msra.mxu0 %v1385
    %1395 = vmatprep.subr.bf16.mxu0 0
    %1396 = vmatpush1.bf16.msra.mxu0 0
    %1397 = vmatprep.subr.bf16.mxu0 0
    %1398 = vmatpush1.bf16.msra.mxu0 0
    %1399 = vmatprep.subr.bf16.mxu0 0
    %1400 = vmatpush1.bf16.msra.mxu0 0
    %1401 = vmatprep.subr.bf16.mxu0 0
    %1402 = vmatpush1.bf16.msra.mxu0 0
    %1403 = vmatprep.subr.bf16.mxu0 0
    %1404 = vmatpush1.bf16.msra.mxu0 0
    %1405 = vmatprep.subr.bf16.mxu0 0
    %1406 = vmatpush1.bf16.msra.mxu0 0
    %1407 = vmatprep.subr.bf16.mxu0 0
    %1408 = vmatpush1.bf16.msra.mxu0 0
    %1409 = vmatprep.subr.bf16.mxu0 0
    %1410 = vmatpush1.bf16.msra.mxu0 0
    %1411 = vmatprep.subr.bf16.mxu0 0
    %1412 = vmatpush1.bf16.msra.mxu0 0
    %1413 = vmatprep.subr.bf16.mxu0 0
    %1414 = vmatpush1.bf16.msra.mxu0 0
    %1415 = vmatprep.subr.bf16.mxu0 0
    %1416 = vmatpush1.bf16.msra.mxu0 0
    %1417 = vmatprep.subr.bf16.mxu0 0
    %1418 = vmatpush1.bf16.msra.mxu0 0
    %1419 = vmatprep.subr.bf16.mxu0 0
    %1420 = vmatpush1.bf16.msra.mxu0 0
    %1421 = vmatprep.subr.bf16.mxu0 0
    %1422 = vmatpush1.bf16.msra.mxu0 0
    %1423 = vmatprep.mubr.bf16.mxu0 0
    %1424 = vmatmul.mubr.bf16.gmra.mrb[0].mxu0 %v1389
    %v1425 = vpop.f32.mrb[0].mxu0
    %v1426 = vadd.f32 %v1374, %v1425
    %v1427 = vpop.f32.mrb[0].mxu0
    %v1428 = vpop.f32.mrb[0].mxu0
    %v1429 = vadd.f32 %v1374, %v1428
    %v1430 = vpop.f32.mrb[0].mxu0
    %1431 = vdwg.mxu0
    %v1432 = vmul.f32 %v1358, 0.35355338
    %v1433 = vpack.c.bf16 %v1432, %v1432
    %v1434 = vpack.c.bf16 %v1426, %v1426
    %v1436 = vsel %vm262, %v1433, 0
    %v1439 = vsel %vm262, %v1434, 0
    %1441 = vmatprep.subr.bf16.mxu0 0
    %1442 = vmatpush1.bf16.xpose.msra.mxu0 %v1439
    %1443 = vmatprep.subr.bf16.mxu0 0
    %1444 = vmatpush1.bf16.xpose.msra.mxu0 0
    %1445 = vmatprep.subr.bf16.mxu0 0
    %1446 = vmatpush1.bf16.xpose.msra.mxu0 0
    %1447 = vmatprep.subr.bf16.mxu0 0
    %1448 = vmatpush1.bf16.xpose.msra.mxu0 0
    %1449 = vmatprep.subr.bf16.mxu0 0
    %1450 = vmatpush1.bf16.xpose.msra.mxu0 0
    %1451 = vmatprep.subr.bf16.mxu0 0
    %1452 = vmatpush1.bf16.xpose.msra.mxu0 0
    %1453 = vmatprep.subr.bf16.mxu0 0
    %1454 = vmatpush1.bf16.xpose.msra.mxu0 0
    %1455 = vmatprep.subr.bf16.mxu0 0
    %1456 = vmatpush1.bf16.xpose.msra.mxu0 0
    %1457 = vmatprep.subr.bf16.mxu0 0
    %1458 = vmatpush1.bf16.xpose.msra.mxu0 0
    %1459 = vmatprep.subr.bf16.mxu0 0
    %1460 = vmatpush1.bf16.xpose.msra.mxu0 0
    %1461 = vmatprep.subr.bf16.mxu0 0
    %1462 = vmatpush1.bf16.xpose.msra.mxu0 0
    %1463 = vmatprep.subr.bf16.mxu0 0
    %1464 = vmatpush1.bf16.xpose.msra.mxu0 0
    %1465 = vmatprep.subr.bf16.mxu0 0
    %1466 = vmatpush1.bf16.xpose.msra.mxu0 0
    %1467 = vmatprep.subr.bf16.mxu0 0
    %1468 = vmatpush1.bf16.xpose.msra.mxu0 0
    %1469 = vmatprep.subr.bf16.mxu0 0
    %1470 = vmatpush1.bf16.xpose.msra.mxu0 0
    %1471 = vmatprep.subr.bf16.mxu0 0
    %1472 = vmatpush1.bf16.xpose.msra.mxu0 0
    %1473 = vmatprep.mubr.bf16.mxu0 0
    %1474 = vmatmul.mubr.bf16.gmra.mrb[0].mxu0 %v1436
    %v1475 = vpop.f32.mrb[0].mxu0
    %v1476 = vadd.f32 0.0, %v1475
    %v1477 = vpop.f32.mrb[0].mxu0
    %v1478 = vpop.f32.mrb[0].mxu0
    %v1479 = vpop.f32.mrb[0].mxu0
    %1480 = vdwg.mxu0
    %v1481 = vsel %vm262, %v1476, -inf
    %1482 = vmax.xlane.f32.xlu0 %v1481
    %v1483 = vpop.xlane.xlu0 %1482
    %v1484 = vsub.f32 %v1476, %v1483
    %v1485 = vmul.f32 %v1484, 1.442695
    %v1486 = vpow.pop %v1485
    %v1487 = vsel %vm262, %v1486, 0.0
    %1488 = vadd.xlane.f32.xlu0 %v1487
    %v1489 = vpop.xlane.xlu0 %1488
    %v1490 = vrcp.pop %v1489
    %v1491 = vmul.f32 %v1486, %v1490
    %v1492 = vpack.c.bf16 %v1491, %v1491
    %1494 = vrot.lane.b32.xlu0 %v1434, 96
    %v1495 = vpop.permute.xlu0 %1494
    %v1497 = vsel %vm262, %v1492, 0
    %v1500 = vsel %vm326, %v1495, 0
    %1502 = vmatprep.subr.bf16.mxu0 0
    %1503 = vmatpush1.bf16.msra.mxu0 %v1500
    %1504 = vmatprep.subr.bf16.mxu0 0
    %1505 = vmatpush1.bf16.msra.mxu0 0
    %1506 = vmatprep.subr.bf16.mxu0 0
    %1507 = vmatpush1.bf16.msra.mxu0 0
    %1508 = vmatprep.subr.bf16.mxu0 0
    %1509 = vmatpush1.bf16.msra.mxu0 0
    %1510 = vmatprep.subr.bf16.mxu0 0
    %1511 = vmatpush1.bf16.msra.mxu0 0
    %1512 = vmatprep.subr.bf16.mxu0 0
    %1513 = vmatpush1.bf16.msra.mxu0 0
    %1514 = vmatprep.subr.bf16.mxu0 0
    %1515 = vmatpush1.bf16.msra.mxu0 0
    %1516 = vmatprep.subr.bf16.mxu0 0
    %1517 = vmatpush1.bf16.msra.mxu0 0
    %1518 = vmatprep.subr.bf16.mxu0 0
    %1519 = vmatpush1.bf16.msra.mxu0 0
    %1520 = vmatprep.subr.bf16.mxu0 0
    %1521 = vmatpush1.bf16.msra.mxu0 0
    %1522 = vmatprep.subr.bf16.mxu0 0
    %1523 = vmatpush1.bf16.msra.mxu0 0
    %1524 = vmatprep.subr.bf16.mxu0 0
    %1525 = vmatpush1.bf16.msra.mxu0 0
    %1526 = vmatprep.subr.bf16.mxu0 0
    %1527 = vmatpush1.bf16.msra.mxu0 0
    %1528 = vmatprep.subr.bf16.mxu0 0
    %1529 = vmatpush1.bf16.msra.mxu0 0
    %1530 = vmatprep.subr.bf16.mxu0 0
    %1531 = vmatpush1.bf16.msra.mxu0 0
    %1532 = vmatprep.subr.bf16.mxu0 0
    %1533 = vmatpush1.bf16.msra.mxu0 0
    %1534 = vmatprep.mubr.bf16.mxu0 0
    %1535 = vmatmul.mubr.bf16.gmra.mrb[0].mxu0 %v1497
    %v1536 = vpop.f32.mrb[0].mxu0
    %v1537 = vadd.f32 0.0, %v1536
    %v1538 = vpop.f32.mrb[0].mxu0
    %v1539 = vpop.f32.mrb[0].mxu0
    %v1540 = vpop.f32.mrb[0].mxu0
    %1541 = vdwg.mxu0
    %1542 = vst.msk [vmem:[#allocation2] sm:$0xff] %vm262, %v1537
    %1544 = vrot.lane.b32.xlu0 %v1433, 120
    %v1545 = vpop.permute.xlu0 %1544
    %1546 = vrot.lane.b32.xlu0 %v1434, 120
    %v1547 = vpop.permute.xlu0 %1546
    %v1549 = vsel %vm262, %v1545, 0
    %v1552 = vsel %vm262, %v1547, 0
    %1554 = vmatprep.subr.bf16.mxu0 0
    %1555 = vmatpush1.bf16.xpose.msra.mxu0 %v1552
    %1556 = vmatprep.subr.bf16.mxu0 0
    %1557 = vmatpush1.bf16.xpose.msra.mxu0 0
    %1558 = vmatprep.subr.bf16.mxu0 0
    %1559 = vmatpush1.bf16.xpose.msra.mxu0 0
    %1560 = vmatprep.subr.bf16.mxu0 0
    %1561 = vmatpush1.bf16.xpose.msra.mxu0 0
    %1562 = vmatprep.subr.bf16.mxu0 0
    %1563 = vmatpush1.bf16.xpose.msra.mxu0 0
    %1564 = vmatprep.subr.bf16.mxu0 0
    %1565 = vmatpush1.bf16.xpose.msra.mxu0 0
    %1566 = vmatprep.subr.bf16.mxu0 0
    %1567 = vmatpush1.bf16.xpose.msra.mxu0 0
    %1568 = vmatprep.subr.bf16.mxu0 0
    %1569 = vmatpush1.bf16.xpose.msra.mxu0 0
    %1570 = vmatprep.subr.bf16.mxu0 0
    %1571 = vmatpush1.bf16.xpose.msra.mxu0 0
    %1572 = vmatprep.subr.bf16.mxu0 0
    %1573 = vmatpush1.bf16.xpose.msra.mxu0 0
    %1574 = vmatprep.subr.bf16.mxu0 0
    %1575 = vmatpush1.bf16.xpose.msra.mxu0 0
    %1576 = vmatprep.subr.bf16.mxu0 0
    %1577 = vmatpush1.bf16.xpose.msra.mxu0 0
    %1578 = vmatprep.subr.bf16.mxu0 0
    %1579 = vmatpush1.bf16.xpose.msra.mxu0 0
    %1580 = vmatprep.subr.bf16.mxu0 0
    %1581 = vmatpush1.bf16.xpose.msra.mxu0 0
    %1582 = vmatprep.subr.bf16.mxu0 0
    %1583 = vmatpush1.bf16.xpose.msra.mxu0 0
    %1584 = vmatprep.subr.bf16.mxu0 0
    %1585 = vmatpush1.bf16.xpose.msra.mxu0 0
    %1586 = vmatprep.mubr.bf16.mxu0 0
    %1587 = vmatmul.mubr.bf16.gmra.mrb[0].mxu0 %v1549
    %v1588 = vpop.f32.mrb[0].mxu0
    %v1589 = vadd.f32 0.0, %v1588
    %v1590 = vpop.f32.mrb[0].mxu0
    %v1591 = vpop.f32.mrb[0].mxu0
    %v1592 = vpop.f32.mrb[0].mxu0
    %1593 = vdwg.mxu0
    %v1594 = vsel %vm262, %v1589, -inf
    %1595 = vmax.xlane.f32.xlu0 %v1594
    %v1596 = vpop.xlane.xlu0 %1595
    %v1597 = vsub.f32 %v1589, %v1596
    %v1598 = vmul.f32 %v1597, 1.442695
    %v1599 = vpow.pop %v1598
    %v1600 = vsel %vm262, %v1599, 0.0
    %1601 = vadd.xlane.f32.xlu0 %v1600
    %v1602 = vpop.xlane.xlu0 %1601
    %v1603 = vrcp.pop %v1602
    %v1604 = vmul.f32 %v1599, %v1603
    %v1605 = vpack.c.bf16 %v1604, %v1604
    %1606 = vrot.lane.b32.xlu0 %v1434, 88
    %v1607 = vpop.permute.xlu0 %1606
    %v1609 = vsel %vm262, %v1605, 0
    %v1612 = vsel %vm326, %v1607, 0
    %1614 = vmatprep.subr.bf16.mxu0 0
    %1615 = vmatpush1.bf16.msra.mxu0 %v1612
    %1616 = vmatprep.subr.bf16.mxu0 0
    %1617 = vmatpush1.bf16.msra.mxu0 0
    %1618 = vmatprep.subr.bf16.mxu0 0
    %1619 = vmatpush1.bf16.msra.mxu0 0
    %1620 = vmatprep.subr.bf16.mxu0 0
    %1621 = vmatpush1.bf16.msra.mxu0 0
    %1622 = vmatprep.subr.bf16.mxu0 0
    %1623 = vmatpush1.bf16.msra.mxu0 0
    %1624 = vmatprep.subr.bf16.mxu0 0
    %1625 = vmatpush1.bf16.msra.mxu0 0
    %1626 = vmatprep.subr.bf16.mxu0 0
    %1627 = vmatpush1.bf16.msra.mxu0 0
    %1628 = vmatprep.subr.bf16.mxu0 0
    %1629 = vmatpush1.bf16.msra.mxu0 0
    %1630 = vmatprep.subr.bf16.mxu0 0
    %1631 = vmatpush1.bf16.msra.mxu0 0
    %1632 = vmatprep.subr.bf16.mxu0 0
    %1633 = vmatpush1.bf16.msra.mxu0 0
    %1634 = vmatprep.subr.bf16.mxu0 0
    %1635 = vmatpush1.bf16.msra.mxu0 0
    %1636 = vmatprep.subr.bf16.mxu0 0
    %1637 = vmatpush1.bf16.msra.mxu0 0
    %1638 = vmatprep.subr.bf16.mxu0 0
    %1639 = vmatpush1.bf16.msra.mxu0 0
    %1640 = vmatprep.subr.bf16.mxu0 0
    %1641 = vmatpush1.bf16.msra.mxu0 0
    %1642 = vmatprep.subr.bf16.mxu0 0
    %1643 = vmatpush1.bf16.msra.mxu0 0
    %1644 = vmatprep.subr.bf16.mxu0 0
    %1645 = vmatpush1.bf16.msra.mxu0 0
    %1646 = vmatprep.mubr.bf16.mxu0 0
    %1647 = vmatmul.mubr.bf16.gmra.mrb[0].mxu0 %v1609
    %v1648 = vpop.f32.mrb[0].mxu0
    %v1649 = vadd.f32 0.0, %v1648
    %v1650 = vpop.f32.mrb[0].mxu0
    %v1651 = vpop.f32.mrb[0].mxu0
    %v1652 = vpop.f32.mrb[0].mxu0
    %1653 = vdwg.mxu0
    %1655 = vrot.lane.b32.xlu0 %v1649, 8
    %v1656 = vpop.permute.xlu0 %1655
    %1658 = vst.msk [vmem:[#allocation2] sm:$0xff] %vm486, %v1656
    %1659 = vrot.lane.b32.xlu0 %v1433, 112
    %v1660 = vpop.permute.xlu0 %1659
    %1661 = vrot.lane.b32.xlu0 %v1434, 112
    %v1662 = vpop.permute.xlu0 %1661
    %v1664 = vsel %vm262, %v1660, 0
    %v1667 = vsel %vm262, %v1662, 0
    %1669 = vmatprep.subr.bf16.mxu0 0
    %1670 = vmatpush1.bf16.xpose.msra.mxu0 %v1667
    %1671 = vmatprep.subr.bf16.mxu0 0
    %1672 = vmatpush1.bf16.xpose.msra.mxu0 0
    %1673 = vmatprep.subr.bf16.mxu0 0
    %1674 = vmatpush1.bf16.xpose.msra.mxu0 0
    %1675 = vmatprep.subr.bf16.mxu0 0
    %1676 = vmatpush1.bf16.xpose.msra.mxu0 0
    %1677 = vmatprep.subr.bf16.mxu0 0
    %1678 = vmatpush1.bf16.xpose.msra.mxu0 0
    %1679 = vmatprep.subr.bf16.mxu0 0
    %1680 = vmatpush1.bf16.xpose.msra.mxu0 0
    %1681 = vmatprep.subr.bf16.mxu0 0
    %1682 = vmatpush1.bf16.xpose.msra.mxu0 0
    %1683 = vmatprep.subr.bf16.mxu0 0
    %1684 = vmatpush1.bf16.xpose.msra.mxu0 0
    %1685 = vmatprep.subr.bf16.mxu0 0
    %1686 = vmatpush1.bf16.xpose.msra.mxu0 0
    %1687 = vmatprep.subr.bf16.mxu0 0
    %1688 = vmatpush1.bf16.xpose.msra.mxu0 0
    %1689 = vmatprep.subr.bf16.mxu0 0
    %1690 = vmatpush1.bf16.xpose.msra.mxu0 0
    %1691 = vmatprep.subr.bf16.mxu0 0
    %1692 = vmatpush1.bf16.xpose.msra.mxu0 0
    %1693 = vmatprep.subr.bf16.mxu0 0
    %1694 = vmatpush1.bf16.xpose.msra.mxu0 0
    %1695 = vmatprep.subr.bf16.mxu0 0
    %1696 = vmatpush1.bf16.xpose.msra.mxu0 0
    %1697 = vmatprep.subr.bf16.mxu0 0
    %1698 = vmatpush1.bf16.xpose.msra.mxu0 0
    %1699 = vmatprep.subr.bf16.mxu0 0
    %1700 = vmatpush1.bf16.xpose.msra.mxu0 0
    %1701 = vmatprep.mubr.bf16.mxu0 0
    %1702 = vmatmul.mubr.bf16.gmra.mrb[0].mxu0 %v1664
    %v1703 = vpop.f32.mrb[0].mxu0
    %v1704 = vadd.f32 0.0, %v1703
    %v1705 = vpop.f32.mrb[0].mxu0
    %v1706 = vpop.f32.mrb[0].mxu0
    %v1707 = vpop.f32.mrb[0].mxu0
    %1708 = vdwg.mxu0
    %v1709 = vsel %vm262, %v1704, -inf
    %1710 = vmax.xlane.f32.xlu0 %v1709
    %v1711 = vpop.xlane.xlu0 %1710
    %v1712 = vsub.f32 %v1704, %v1711
    %v1713 = vmul.f32 %v1712, 1.442695
    %v1714 = vpow.pop %v1713
    %v1715 = vsel %vm262, %v1714, 0.0
    %1716 = vadd.xlane.f32.xlu0 %v1715
    %v1717 = vpop.xlane.xlu0 %1716
    %v1718 = vrcp.pop %v1717
    %v1719 = vmul.f32 %v1714, %v1718
    %v1720 = vpack.c.bf16 %v1719, %v1719
    %1721 = vrot.lane.b32.xlu0 %v1434, 80
    %v1722 = vpop.permute.xlu0 %1721
    %v1724 = vsel %vm262, %v1720, 0
    %v1727 = vsel %vm326, %v1722, 0
    %1729 = vmatprep.subr.bf16.mxu0 0
    %1730 = vmatpush1.bf16.msra.mxu0 %v1727
    %1731 = vmatprep.subr.bf16.mxu0 0
    %1732 = vmatpush1.bf16.msra.mxu0 0
    %1733 = vmatprep.subr.bf16.mxu0 0
    %1734 = vmatpush1.bf16.msra.mxu0 0
    %1735 = vmatprep.subr.bf16.mxu0 0
    %1736 = vmatpush1.bf16.msra.mxu0 0
    %1737 = vmatprep.subr.bf16.mxu0 0
    %1738 = vmatpush1.bf16.msra.mxu0 0
    %1739 = vmatprep.subr.bf16.mxu0 0
    %1740 = vmatpush1.bf16.msra.mxu0 0
    %1741 = vmatprep.subr.bf16.mxu0 0
    %1742 = vmatpush1.bf16.msra.mxu0 0
    %1743 = vmatprep.subr.bf16.mxu0 0
    %1744 = vmatpush1.bf16.msra.mxu0 0
    %1745 = vmatprep.subr.bf16.mxu0 0
    %1746 = vmatpush1.bf16.msra.mxu0 0
    %1747 = vmatprep.subr.bf16.mxu0 0
    %1748 = vmatpush1.bf16.msra.mxu0 0
    %1749 = vmatprep.subr.bf16.mxu0 0
    %1750 = vmatpush1.bf16.msra.mxu0 0
    %1751 = vmatprep.subr.bf16.mxu0 0
    %1752 = vmatpush1.bf16.msra.mxu0 0
    %1753 = vmatprep.subr.bf16.mxu0 0
    %1754 = vmatpush1.bf16.msra.mxu0 0
    %1755 = vmatprep.subr.bf16.mxu0 0
    %1756 = vmatpush1.bf16.msra.mxu0 0
    %1757 = vmatprep.subr.bf16.mxu0 0
    %1758 = vmatpush1.bf16.msra.mxu0 0
    %1759 = vmatprep.subr.bf16.mxu0 0
    %1760 = vmatpush1.bf16.msra.mxu0 0
    %1761 = vmatprep.mubr.bf16.mxu0 0
    %1762 = vmatmul.mubr.bf16.gmra.mrb[0].mxu0 %v1724
    %v1763 = vpop.f32.mrb[0].mxu0
    %v1764 = vadd.f32 0.0, %v1763
    %v1765 = vpop.f32.mrb[0].mxu0
    %v1766 = vpop.f32.mrb[0].mxu0
    %v1767 = vpop.f32.mrb[0].mxu0
    %1768 = vdwg.mxu0
    %1770 = vrot.lane.b32.xlu0 %v1764, 16
    %v1771 = vpop.permute.xlu0 %1770
    %1773 = vst.msk [vmem:[#allocation2] sm:$0xff] %vm602, %v1771
    %1774 = vrot.lane.b32.xlu0 %v1433, 104
    %v1775 = vpop.permute.xlu0 %1774
    %1776 = vrot.lane.b32.xlu0 %v1434, 104
    %v1777 = vpop.permute.xlu0 %1776
    %v1779 = vsel %vm262, %v1775, 0
    %v1782 = vsel %vm262, %v1777, 0
    %1784 = vmatprep.subr.bf16.mxu0 0
    %1785 = vmatpush1.bf16.xpose.msra.mxu0 %v1782
    %1786 = vmatprep.subr.bf16.mxu0 0
    %1787 = vmatpush1.bf16.xpose.msra.mxu0 0
    %1788 = vmatprep.subr.bf16.mxu0 0
    %1789 = vmatpush1.bf16.xpose.msra.mxu0 0
    %1790 = vmatprep.subr.bf16.mxu0 0
    %1791 = vmatpush1.bf16.xpose.msra.mxu0 0
    %1792 = vmatprep.subr.bf16.mxu0 0
    %1793 = vmatpush1.bf16.xpose.msra.mxu0 0
    %1794 = vmatprep.subr.bf16.mxu0 0
    %1795 = vmatpush1.bf16.xpose.msra.mxu0 0
    %1796 = vmatprep.subr.bf16.mxu0 0
    %1797 = vmatpush1.bf16.xpose.msra.mxu0 0
    %1798 = vmatprep.subr.bf16.mxu0 0
    %1799 = vmatpush1.bf16.xpose.msra.mxu0 0
    %1800 = vmatprep.subr.bf16.mxu0 0
    %1801 = vmatpush1.bf16.xpose.msra.mxu0 0
    %1802 = vmatprep.subr.bf16.mxu0 0
    %1803 = vmatpush1.bf16.xpose.msra.mxu0 0
    %1804 = vmatprep.subr.bf16.mxu0 0
    %1805 = vmatpush1.bf16.xpose.msra.mxu0 0
    %1806 = vmatprep.subr.bf16.mxu0 0
    %1807 = vmatpush1.bf16.xpose.msra.mxu0 0
    %1808 = vmatprep.subr.bf16.mxu0 0
    %1809 = vmatpush1.bf16.xpose.msra.mxu0 0
    %1810 = vmatprep.subr.bf16.mxu0 0
    %1811 = vmatpush1.bf16.xpose.msra.mxu0 0
    %1812 = vmatprep.subr.bf16.mxu0 0
    %1813 = vmatpush1.bf16.xpose.msra.mxu0 0
    %1814 = vmatprep.subr.bf16.mxu0 0
    %1815 = vmatpush1.bf16.xpose.msra.mxu0 0
    %1816 = vmatprep.mubr.bf16.mxu0 0
    %1817 = vmatmul.mubr.bf16.gmra.mrb[0].mxu0 %v1779
    %v1818 = vpop.f32.mrb[0].mxu0
    %v1819 = vadd.f32 0.0, %v1818
    %v1820 = vpop.f32.mrb[0].mxu0
    %v1821 = vpop.f32.mrb[0].mxu0
    %v1822 = vpop.f32.mrb[0].mxu0
    %1823 = vdwg.mxu0
    %v1824 = vsel %vm262, %v1819, -inf
    %1825 = vmax.xlane.f32.xlu0 %v1824
    %v1826 = vpop.xlane.xlu0 %1825
    %v1827 = vsub.f32 %v1819, %v1826
    %v1828 = vmul.f32 %v1827, 1.442695
    %v1829 = vpow.pop %v1828
    %v1830 = vsel %vm262, %v1829, 0.0
    %1831 = vadd.xlane.f32.xlu0 %v1830
    %v1832 = vpop.xlane.xlu0 %1831
    %v1833 = vrcp.pop %v1832
    %v1834 = vmul.f32 %v1829, %v1833
    %v1835 = vpack.c.bf16 %v1834, %v1834
    %1836 = vrot.lane.b32.xlu0 %v1434, 72
    %v1837 = vpop.permute.xlu0 %1836
    %v1839 = vsel %vm262, %v1835, 0
    %v1842 = vsel %vm326, %v1837, 0
    %1844 = vmatprep.subr.bf16.mxu0 0
    %1845 = vmatpush1.bf16.msra.mxu0 %v1842
    %1846 = vmatprep.subr.bf16.mxu0 0
    %1847 = vmatpush1.bf16.msra.mxu0 0
    %1848 = vmatprep.subr.bf16.mxu0 0
    %1849 = vmatpush1.bf16.msra.mxu0 0
    %1850 = vmatprep.subr.bf16.mxu0 0
    %1851 = vmatpush1.bf16.msra.mxu0 0
    %1852 = vmatprep.subr.bf16.mxu0 0
    %1853 = vmatpush1.bf16.msra.mxu0 0
    %1854 = vmatprep.subr.bf16.mxu0 0
    %1855 = vmatpush1.bf16.msra.mxu0 0
    %1856 = vmatprep.subr.bf16.mxu0 0
    %1857 = vmatpush1.bf16.msra.mxu0 0
    %1858 = vmatprep.subr.bf16.mxu0 0
    %1859 = vmatpush1.bf16.msra.mxu0 0
    %1860 = vmatprep.subr.bf16.mxu0 0
    %1861 = vmatpush1.bf16.msra.mxu0 0
    %1862 = vmatprep.subr.bf16.mxu0 0
    %1863 = vmatpush1.bf16.msra.mxu0 0
    %1864 = vmatprep.subr.bf16.mxu0 0
    %1865 = vmatpush1.bf16.msra.mxu0 0
    %1866 = vmatprep.subr.bf16.mxu0 0
    %1867 = vmatpush1.bf16.msra.mxu0 0
    %1868 = vmatprep.subr.bf16.mxu0 0
    %1869 = vmatpush1.bf16.msra.mxu0 0
    %1870 = vmatprep.subr.bf16.mxu0 0
    %1871 = vmatpush1.bf16.msra.mxu0 0
    %1872 = vmatprep.subr.bf16.mxu0 0
    %1873 = vmatpush1.bf16.msra.mxu0 0
    %1874 = vmatprep.subr.bf16.mxu0 0
    %1875 = vmatpush1.bf16.msra.mxu0 0
    %1876 = vmatprep.mubr.bf16.mxu0 0
    %1877 = vmatmul.mubr.bf16.gmra.mrb[0].mxu0 %v1839
    %v1878 = vpop.f32.mrb[0].mxu0
    %v1879 = vadd.f32 0.0, %v1878
    %v1880 = vpop.f32.mrb[0].mxu0
    %v1881 = vpop.f32.mrb[0].mxu0
    %v1882 = vpop.f32.mrb[0].mxu0
    %1883 = vdwg.mxu0
    %1885 = vrot.lane.b32.xlu0 %v1879, 24
    %v1886 = vpop.permute.xlu0 %1885
    %1888 = vst.msk [vmem:[#allocation2] sm:$0xff] %vm718, %v1886
    %v1889 = vmul.f32 %v1361, 0.35355338
    %v1890 = vpack.c.bf16 %v1889, %v1889
    %v1891 = vpack.c.bf16 %v1429, %v1429
    %v1893 = vsel %vm262, %v1890, 0
    %v1896 = vsel %vm262, %v1891, 0
    %1898 = vmatprep.subr.bf16.mxu0 0
    %1899 = vmatpush1.bf16.xpose.msra.mxu0 %v1896
    %1900 = vmatprep.subr.bf16.mxu0 0
    %1901 = vmatpush1.bf16.xpose.msra.mxu0 0
    %1902 = vmatprep.subr.bf16.mxu0 0
    %1903 = vmatpush1.bf16.xpose.msra.mxu0 0
    %1904 = vmatprep.subr.bf16.mxu0 0
    %1905 = vmatpush1.bf16.xpose.msra.mxu0 0
    %1906 = vmatprep.subr.bf16.mxu0 0
    %1907 = vmatpush1.bf16.xpose.msra.mxu0 0
    %1908 = vmatprep.subr.bf16.mxu0 0
    %1909 = vmatpush1.bf16.xpose.msra.mxu0 0
    %1910 = vmatprep.subr.bf16.mxu0 0
    %1911 = vmatpush1.bf16.xpose.msra.mxu0 0
    %1912 = vmatprep.subr.bf16.mxu0 0
    %1913 = vmatpush1.bf16.xpose.msra.mxu0 0
    %1914 = vmatprep.subr.bf16.mxu0 0
    %1915 = vmatpush1.bf16.xpose.msra.mxu0 0
    %1916 = vmatprep.subr.bf16.mxu0 0
    %1917 = vmatpush1.bf16.xpose.msra.mxu0 0
    %1918 = vmatprep.subr.bf16.mxu0 0
    %1919 = vmatpush1.bf16.xpose.msra.mxu0 0
    %1920 = vmatprep.subr.bf16.mxu0 0
    %1921 = vmatpush1.bf16.xpose.msra.mxu0 0
    %1922 = vmatprep.subr.bf16.mxu0 0
    %1923 = vmatpush1.bf16.xpose.msra.mxu0 0
    %1924 = vmatprep.subr.bf16.mxu0 0
    %1925 = vmatpush1.bf16.xpose.msra.mxu0 0
    %1926 = vmatprep.subr.bf16.mxu0 0
    %1927 = vmatpush1.bf16.xpose.msra.mxu0 0
    %1928 = vmatprep.subr.bf16.mxu0 0
    %1929 = vmatpush1.bf16.xpose.msra.mxu0 0
    %1930 = vmatprep.mubr.bf16.mxu0 0
    %1931 = vmatmul.mubr.bf16.gmra.mrb[0].mxu0 %v1893
    %v1932 = vpop.f32.mrb[0].mxu0
    %v1933 = vadd.f32 0.0, %v1932
    %v1934 = vpop.f32.mrb[0].mxu0
    %v1935 = vpop.f32.mrb[0].mxu0
    %v1936 = vpop.f32.mrb[0].mxu0
    %1937 = vdwg.mxu0
    %v1938 = vsel %vm262, %v1933, -inf
    %1939 = vmax.xlane.f32.xlu0 %v1938
    %v1940 = vpop.xlane.xlu0 %1939
    %v1941 = vsub.f32 %v1933, %v1940
    %v1942 = vmul.f32 %v1941, 1.442695
    %v1943 = vpow.pop %v1942
    %v1944 = vsel %vm262, %v1943, 0.0
    %1945 = vadd.xlane.f32.xlu0 %v1944
    %v1946 = vpop.xlane.xlu0 %1945
    %v1947 = vrcp.pop %v1946
    %v1948 = vmul.f32 %v1943, %v1947
    %v1949 = vpack.c.bf16 %v1948, %v1948
    %1951 = vrot.lane.b32.xlu0 %v1891, 96
    %v1952 = vpop.permute.xlu0 %1951
    %v1954 = vsel %vm262, %v1949, 0
    %v1957 = vsel %vm326, %v1952, 0
    %1959 = vmatprep.subr.bf16.mxu0 0
    %1960 = vmatpush1.bf16.msra.mxu0 %v1957
    %1961 = vmatprep.subr.bf16.mxu0 0
    %1962 = vmatpush1.bf16.msra.mxu0 0
    %1963 = vmatprep.subr.bf16.mxu0 0
    %1964 = vmatpush1.bf16.msra.mxu0 0
    %1965 = vmatprep.subr.bf16.mxu0 0
    %1966 = vmatpush1.bf16.msra.mxu0 0
    %1967 = vmatprep.subr.bf16.mxu0 0
    %1968 = vmatpush1.bf16.msra.mxu0 0
    %1969 = vmatprep.subr.bf16.mxu0 0
    %1970 = vmatpush1.bf16.msra.mxu0 0
    %1971 = vmatprep.subr.bf16.mxu0 0
    %1972 = vmatpush1.bf16.msra.mxu0 0
    %1973 = vmatprep.subr.bf16.mxu0 0
    %1974 = vmatpush1.bf16.msra.mxu0 0
    %1975 = vmatprep.subr.bf16.mxu0 0
    %1976 = vmatpush1.bf16.msra.mxu0 0
    %1977 = vmatprep.subr.bf16.mxu0 0
    %1978 = vmatpush1.bf16.msra.mxu0 0
    %1979 = vmatprep.subr.bf16.mxu0 0
    %1980 = vmatpush1.bf16.msra.mxu0 0
    %1981 = vmatprep.subr.bf16.mxu0 0
    %1982 = vmatpush1.bf16.msra.mxu0 0
    %1983 = vmatprep.subr.bf16.mxu0 0
    %1984 = vmatpush1.bf16.msra.mxu0 0
    %1985 = vmatprep.subr.bf16.mxu0 0
    %1986 = vmatpush1.bf16.msra.mxu0 0
    %1987 = vmatprep.subr.bf16.mxu0 0
    %1988 = vmatpush1.bf16.msra.mxu0 0
    %1989 = vmatprep.subr.bf16.mxu0 0
    %1990 = vmatpush1.bf16.msra.mxu0 0
    %1991 = vmatprep.mubr.bf16.mxu0 0
    %1992 = vmatmul.mubr.bf16.gmra.mrb[0].mxu0 %v1954
    %v1993 = vpop.f32.mrb[0].mxu0
    %v1994 = vadd.f32 0.0, %v1993
    %v1995 = vpop.f32.mrb[0].mxu0
    %v1996 = vpop.f32.mrb[0].mxu0
    %v1997 = vpop.f32.mrb[0].mxu0
    %1998 = vdwg.mxu0
    %1999 = vst.msk [vmem:[#allocation2 + $0x8] sm:$0xff] %vm262, %v1994
    %2001 = vrot.lane.b32.xlu0 %v1890, 120
    %v2002 = vpop.permute.xlu0 %2001
    %2003 = vrot.lane.b32.xlu0 %v1891, 120
    %v2004 = vpop.permute.xlu0 %2003
    %v2006 = vsel %vm262, %v2002, 0
    %v2009 = vsel %vm262, %v2004, 0
    %2011 = vmatprep.subr.bf16.mxu0 0
    %2012 = vmatpush1.bf16.xpose.msra.mxu0 %v2009
    %2013 = vmatprep.subr.bf16.mxu0 0
    %2014 = vmatpush1.bf16.xpose.msra.mxu0 0
    %2015 = vmatprep.subr.bf16.mxu0 0
    %2016 = vmatpush1.bf16.xpose.msra.mxu0 0
    %2017 = vmatprep.subr.bf16.mxu0 0
    %2018 = vmatpush1.bf16.xpose.msra.mxu0 0
    %2019 = vmatprep.subr.bf16.mxu0 0
    %2020 = vmatpush1.bf16.xpose.msra.mxu0 0
    %2021 = vmatprep.subr.bf16.mxu0 0
    %2022 = vmatpush1.bf16.xpose.msra.mxu0 0
    %2023 = vmatprep.subr.bf16.mxu0 0
    %2024 = vmatpush1.bf16.xpose.msra.mxu0 0
    %2025 = vmatprep.subr.bf16.mxu0 0
    %2026 = vmatpush1.bf16.xpose.msra.mxu0 0
    %2027 = vmatprep.subr.bf16.mxu0 0
    %2028 = vmatpush1.bf16.xpose.msra.mxu0 0
    %2029 = vmatprep.subr.bf16.mxu0 0
    %2030 = vmatpush1.bf16.xpose.msra.mxu0 0
    %2031 = vmatprep.subr.bf16.mxu0 0
    %2032 = vmatpush1.bf16.xpose.msra.mxu0 0
    %2033 = vmatprep.subr.bf16.mxu0 0
    %2034 = vmatpush1.bf16.xpose.msra.mxu0 0
    %2035 = vmatprep.subr.bf16.mxu0 0
    %2036 = vmatpush1.bf16.xpose.msra.mxu0 0
    %2037 = vmatprep.subr.bf16.mxu0 0
    %2038 = vmatpush1.bf16.xpose.msra.mxu0 0
    %2039 = vmatprep.subr.bf16.mxu0 0
    %2040 = vmatpush1.bf16.xpose.msra.mxu0 0
    %2041 = vmatprep.subr.bf16.mxu0 0
    %2042 = vmatpush1.bf16.xpose.msra.mxu0 0
    %2043 = vmatprep.mubr.bf16.mxu0 0
    %2044 = vmatmul.mubr.bf16.gmra.mrb[0].mxu0 %v2006
    %v2045 = vpop.f32.mrb[0].mxu0
    %v2046 = vadd.f32 0.0, %v2045
    %v2047 = vpop.f32.mrb[0].mxu0
    %v2048 = vpop.f32.mrb[0].mxu0
    %v2049 = vpop.f32.mrb[0].mxu0
    %2050 = vdwg.mxu0
    %v2051 = vsel %vm262, %v2046, -inf
    %2052 = vmax.xlane.f32.xlu0 %v2051
    %v2053 = vpop.xlane.xlu0 %2052
    %v2054 = vsub.f32 %v2046, %v2053
    %v2055 = vmul.f32 %v2054, 1.442695
    %v2056 = vpow.pop %v2055
    %v2057 = vsel %vm262, %v2056, 0.0
    %2058 = vadd.xlane.f32.xlu0 %v2057
    %v2059 = vpop.xlane.xlu0 %2058
    %v2060 = vrcp.pop %v2059
    %v2061 = vmul.f32 %v2056, %v2060
    %v2062 = vpack.c.bf16 %v2061, %v2061
    %2063 = vrot.lane.b32.xlu0 %v1891, 88
    %v2064 = vpop.permute.xlu0 %2063
    %v2066 = vsel %vm262, %v2062, 0
    %v2069 = vsel %vm326, %v2064, 0
    %2071 = vmatprep.subr.bf16.mxu0 0
    %2072 = vmatpush1.bf16.msra.mxu0 %v2069
    %2073 = vmatprep.subr.bf16.mxu0 0
    %2074 = vmatpush1.bf16.msra.mxu0 0
    %2075 = vmatprep.subr.bf16.mxu0 0
    %2076 = vmatpush1.bf16.msra.mxu0 0
    %2077 = vmatprep.subr.bf16.mxu0 0
    %2078 = vmatpush1.bf16.msra.mxu0 0
    %2079 = vmatprep.subr.bf16.mxu0 0
    %2080 = vmatpush1.bf16.msra.mxu0 0
    %2081 = vmatprep.subr.bf16.mxu0 0
    %2082 = vmatpush1.bf16.msra.mxu0 0
    %2083 = vmatprep.subr.bf16.mxu0 0
    %2084 = vmatpush1.bf16.msra.mxu0 0
    %2085 = vmatprep.subr.bf16.mxu0 0
    %2086 = vmatpush1.bf16.msra.mxu0 0
    %2087 = vmatprep.subr.bf16.mxu0 0
    %2088 = vmatpush1.bf16.msra.mxu0 0
    %2089 = vmatprep.subr.bf16.mxu0 0
    %2090 = vmatpush1.bf16.msra.mxu0 0
    %2091 = vmatprep.subr.bf16.mxu0 0
    %2092 = vmatpush1.bf16.msra.mxu0 0
    %2093 = vmatprep.subr.bf16.mxu0 0
    %2094 = vmatpush1.bf16.msra.mxu0 0
    %2095 = vmatprep.subr.bf16.mxu0 0
    %2096 = vmatpush1.bf16.msra.mxu0 0
    %2097 = vmatprep.subr.bf16.mxu0 0
    %2098 = vmatpush1.bf16.msra.mxu0 0
    %2099 = vmatprep.subr.bf16.mxu0 0
    %2100 = vmatpush1.bf16.msra.mxu0 0
    %2101 = vmatprep.subr.bf16.mxu0 0
    %2102 = vmatpush1.bf16.msra.mxu0 0
    %2103 = vmatprep.mubr.bf16.mxu0 0
    %2104 = vmatmul.mubr.bf16.gmra.mrb[0].mxu0 %v2066
    %v2105 = vpop.f32.mrb[0].mxu0
    %v2106 = vadd.f32 0.0, %v2105
    %v2107 = vpop.f32.mrb[0].mxu0
    %v2108 = vpop.f32.mrb[0].mxu0
    %v2109 = vpop.f32.mrb[0].mxu0
    %2110 = vdwg.mxu0
    %2112 = vrot.lane.b32.xlu0 %v2106, 8
    %v2113 = vpop.permute.xlu0 %2112
    %2115 = vst.msk [vmem:[#allocation2 + $0x8] sm:$0xff] %vm486, %v2113
    %2116 = vrot.lane.b32.xlu0 %v1890, 112
    %v2117 = vpop.permute.xlu0 %2116
    %2118 = vrot.lane.b32.xlu0 %v1891, 112
    %v2119 = vpop.permute.xlu0 %2118
    %v2121 = vsel %vm262, %v2117, 0
    %v2124 = vsel %vm262, %v2119, 0
    %2126 = vmatprep.subr.bf16.mxu0 0
    %2127 = vmatpush1.bf16.xpose.msra.mxu0 %v2124
    %2128 = vmatprep.subr.bf16.mxu0 0
    %2129 = vmatpush1.bf16.xpose.msra.mxu0 0
    %2130 = vmatprep.subr.bf16.mxu0 0
    %2131 = vmatpush1.bf16.xpose.msra.mxu0 0
    %2132 = vmatprep.subr.bf16.mxu0 0
    %2133 = vmatpush1.bf16.xpose.msra.mxu0 0
    %2134 = vmatprep.subr.bf16.mxu0 0
    %2135 = vmatpush1.bf16.xpose.msra.mxu0 0
    %2136 = vmatprep.subr.bf16.mxu0 0
    %2137 = vmatpush1.bf16.xpose.msra.mxu0 0
    %2138 = vmatprep.subr.bf16.mxu0 0
    %2139 = vmatpush1.bf16.xpose.msra.mxu0 0
    %2140 = vmatprep.subr.bf16.mxu0 0
    %2141 = vmatpush1.bf16.xpose.msra.mxu0 0
    %2142 = vmatprep.subr.bf16.mxu0 0
    %2143 = vmatpush1.bf16.xpose.msra.mxu0 0
    %2144 = vmatprep.subr.bf16.mxu0 0
    %2145 = vmatpush1.bf16.xpose.msra.mxu0 0
    %2146 = vmatprep.subr.bf16.mxu0 0
    %2147 = vmatpush1.bf16.xpose.msra.mxu0 0
    %2148 = vmatprep.subr.bf16.mxu0 0
    %2149 = vmatpush1.bf16.xpose.msra.mxu0 0
    %2150 = vmatprep.subr.bf16.mxu0 0
    %2151 = vmatpush1.bf16.xpose.msra.mxu0 0
    %2152 = vmatprep.subr.bf16.mxu0 0
    %2153 = vmatpush1.bf16.xpose.msra.mxu0 0
    %2154 = vmatprep.subr.bf16.mxu0 0
    %2155 = vmatpush1.bf16.xpose.msra.mxu0 0
    %2156 = vmatprep.subr.bf16.mxu0 0
    %2157 = vmatpush1.bf16.xpose.msra.mxu0 0
    %2158 = vmatprep.mubr.bf16.mxu0 0
    %2159 = vmatmul.mubr.bf16.gmra.mrb[0].mxu0 %v2121
    %v2160 = vpop.f32.mrb[0].mxu0
    %v2161 = vadd.f32 0.0, %v2160
    %v2162 = vpop.f32.mrb[0].mxu0
    %v2163 = vpop.f32.mrb[0].mxu0
    %v2164 = vpop.f32.mrb[0].mxu0
    %2165 = vdwg.mxu0
    %v2166 = vsel %vm262, %v2161, -inf
    %2167 = vmax.xlane.f32.xlu0 %v2166
    %v2168 = vpop.xlane.xlu0 %2167
    %v2169 = vsub.f32 %v2161, %v2168
    %v2170 = vmul.f32 %v2169, 1.442695
    %v2171 = vpow.pop %v2170
    %v2172 = vsel %vm262, %v2171, 0.0
    %2173 = vadd.xlane.f32.xlu0 %v2172
    %v2174 = vpop.xlane.xlu0 %2173
    %v2175 = vrcp.pop %v2174
    %v2176 = vmul.f32 %v2171, %v2175
    %v2177 = vpack.c.bf16 %v2176, %v2176
    %2178 = vrot.lane.b32.xlu0 %v1891, 80
    %v2179 = vpop.permute.xlu0 %2178
    %v2181 = vsel %vm262, %v2177, 0
    %v2184 = vsel %vm326, %v2179, 0
    %2186 = vmatprep.subr.bf16.mxu0 0
    %2187 = vmatpush1.bf16.msra.mxu0 %v2184
    %2188 = vmatprep.subr.bf16.mxu0 0
    %2189 = vmatpush1.bf16.msra.mxu0 0
    %2190 = vmatprep.subr.bf16.mxu0 0
    %2191 = vmatpush1.bf16.msra.mxu0 0
    %2192 = vmatprep.subr.bf16.mxu0 0
    %2193 = vmatpush1.bf16.msra.mxu0 0
    %2194 = vmatprep.subr.bf16.mxu0 0
    %2195 = vmatpush1.bf16.msra.mxu0 0
    %2196 = vmatprep.subr.bf16.mxu0 0
    %2197 = vmatpush1.bf16.msra.mxu0 0
    %2198 = vmatprep.subr.bf16.mxu0 0
    %2199 = vmatpush1.bf16.msra.mxu0 0
    %2200 = vmatprep.subr.bf16.mxu0 0
    %2201 = vmatpush1.bf16.msra.mxu0 0
    %2202 = vmatprep.subr.bf16.mxu0 0
    %2203 = vmatpush1.bf16.msra.mxu0 0
    %2204 = vmatprep.subr.bf16.mxu0 0
    %2205 = vmatpush1.bf16.msra.mxu0 0
    %2206 = vmatprep.subr.bf16.mxu0 0
    %2207 = vmatpush1.bf16.msra.mxu0 0
    %2208 = vmatprep.subr.bf16.mxu0 0
    %2209 = vmatpush1.bf16.msra.mxu0 0
    %2210 = vmatprep.subr.bf16.mxu0 0
    %2211 = vmatpush1.bf16.msra.mxu0 0
    %2212 = vmatprep.subr.bf16.mxu0 0
    %2213 = vmatpush1.bf16.msra.mxu0 0
    %2214 = vmatprep.subr.bf16.mxu0 0
    %2215 = vmatpush1.bf16.msra.mxu0 0
    %2216 = vmatprep.subr.bf16.mxu0 0
    %2217 = vmatpush1.bf16.msra.mxu0 0
    %2218 = vmatprep.mubr.bf16.mxu0 0
    %2219 = vmatmul.mubr.bf16.gmra.mrb[0].mxu0 %v2181
    %v2220 = vpop.f32.mrb[0].mxu0
    %v2221 = vadd.f32 0.0, %v2220
    %v2222 = vpop.f32.mrb[0].mxu0
    %v2223 = vpop.f32.mrb[0].mxu0
    %v2224 = vpop.f32.mrb[0].mxu0
    %2225 = vdwg.mxu0
    %2227 = vrot.lane.b32.xlu0 %v2221, 16
    %v2228 = vpop.permute.xlu0 %2227
    %2230 = vst.msk [vmem:[#allocation2 + $0x8] sm:$0xff] %vm602, %v2228
    %2231 = vrot.lane.b32.xlu0 %v1890, 104
    %v2232 = vpop.permute.xlu0 %2231
    %2233 = vrot.lane.b32.xlu0 %v1891, 104
    %v2234 = vpop.permute.xlu0 %2233
    %v2236 = vsel %vm262, %v2232, 0
    %v2239 = vsel %vm262, %v2234, 0
    %2241 = vmatprep.subr.bf16.mxu0 0
    %2242 = vmatpush1.bf16.xpose.msra.mxu0 %v2239
    %2243 = vmatprep.subr.bf16.mxu0 0
    %2244 = vmatpush1.bf16.xpose.msra.mxu0 0
    %2245 = vmatprep.subr.bf16.mxu0 0
    %2246 = vmatpush1.bf16.xpose.msra.mxu0 0
    %2247 = vmatprep.subr.bf16.mxu0 0
    %2248 = vmatpush1.bf16.xpose.msra.mxu0 0
    %2249 = vmatprep.subr.bf16.mxu0 0
    %2250 = vmatpush1.bf16.xpose.msra.mxu0 0
    %2251 = vmatprep.subr.bf16.mxu0 0
    %2252 = vmatpush1.bf16.xpose.msra.mxu0 0
    %2253 = vmatprep.subr.bf16.mxu0 0
    %2254 = vmatpush1.bf16.xpose.msra.mxu0 0
    %2255 = vmatprep.subr.bf16.mxu0 0
    %2256 = vmatpush1.bf16.xpose.msra.mxu0 0
    %2257 = vmatprep.subr.bf16.mxu0 0
    %2258 = vmatpush1.bf16.xpose.msra.mxu0 0
    %2259 = vmatprep.subr.bf16.mxu0 0
    %2260 = vmatpush1.bf16.xpose.msra.mxu0 0
    %2261 = vmatprep.subr.bf16.mxu0 0
    %2262 = vmatpush1.bf16.xpose.msra.mxu0 0
    %2263 = vmatprep.subr.bf16.mxu0 0
    %2264 = vmatpush1.bf16.xpose.msra.mxu0 0
    %2265 = vmatprep.subr.bf16.mxu0 0
    %2266 = vmatpush1.bf16.xpose.msra.mxu0 0
    %2267 = vmatprep.subr.bf16.mxu0 0
    %2268 = vmatpush1.bf16.xpose.msra.mxu0 0
    %2269 = vmatprep.subr.bf16.mxu0 0
    %2270 = vmatpush1.bf16.xpose.msra.mxu0 0
    %2271 = vmatprep.subr.bf16.mxu0 0
    %2272 = vmatpush1.bf16.xpose.msra.mxu0 0
    %2273 = vmatprep.mubr.bf16.mxu0 0
    %2274 = vmatmul.mubr.bf16.gmra.mrb[0].mxu0 %v2236
    %v2275 = vpop.f32.mrb[0].mxu0
    %v2276 = vadd.f32 0.0, %v2275
    %v2277 = vpop.f32.mrb[0].mxu0
    %v2278 = vpop.f32.mrb[0].mxu0
    %v2279 = vpop.f32.mrb[0].mxu0
    %2280 = vdwg.mxu0
    %v2281 = vsel %vm262, %v2276, -inf
    %2282 = vmax.xlane.f32.xlu0 %v2281
    %v2283 = vpop.xlane.xlu0 %2282
    %v2284 = vsub.f32 %v2276, %v2283
    %v2285 = vmul.f32 %v2284, 1.442695
    %v2286 = vpow.pop %v2285
    %v2287 = vsel %vm262, %v2286, 0.0
    %2288 = vadd.xlane.f32.xlu0 %v2287
    %v2289 = vpop.xlane.xlu0 %2288
    %v2290 = vrcp.pop %v2289
    %v2291 = vmul.f32 %v2286, %v2290
    %v2292 = vpack.c.bf16 %v2291, %v2291
    %2293 = vrot.lane.b32.xlu0 %v1891, 72
    %v2294 = vpop.permute.xlu0 %2293
    %v2296 = vsel %vm262, %v2292, 0
    %v2299 = vsel %vm326, %v2294, 0
    %2301 = vmatprep.subr.bf16.mxu0 0
    %2302 = vmatpush1.bf16.msra.mxu0 %v2299
    %2303 = vmatprep.subr.bf16.mxu0 0
    %2304 = vmatpush1.bf16.msra.mxu0 0
    %2305 = vmatprep.subr.bf16.mxu0 0
    %2306 = vmatpush1.bf16.msra.mxu0 0
    %2307 = vmatprep.subr.bf16.mxu0 0
    %2308 = vmatpush1.bf16.msra.mxu0 0
    %2309 = vmatprep.subr.bf16.mxu0 0
    %2310 = vmatpush1.bf16.msra.mxu0 0
    %2311 = vmatprep.subr.bf16.mxu0 0
    %2312 = vmatpush1.bf16.msra.mxu0 0
    %2313 = vmatprep.subr.bf16.mxu0 0
    %2314 = vmatpush1.bf16.msra.mxu0 0
    %2315 = vmatprep.subr.bf16.mxu0 0
    %2316 = vmatpush1.bf16.msra.mxu0 0
    %2317 = vmatprep.subr.bf16.mxu0 0
    %2318 = vmatpush1.bf16.msra.mxu0 0
    %2319 = vmatprep.subr.bf16.mxu0 0
    %2320 = vmatpush1.bf16.msra.mxu0 0
    %2321 = vmatprep.subr.bf16.mxu0 0
    %2322 = vmatpush1.bf16.msra.mxu0 0
    %2323 = vmatprep.subr.bf16.mxu0 0
    %2324 = vmatpush1.bf16.msra.mxu0 0
    %2325 = vmatprep.subr.bf16.mxu0 0
    %2326 = vmatpush1.bf16.msra.mxu0 0
    %2327 = vmatprep.subr.bf16.mxu0 0
    %2328 = vmatpush1.bf16.msra.mxu0 0
    %2329 = vmatprep.subr.bf16.mxu0 0
    %2330 = vmatpush1.bf16.msra.mxu0 0
    %2331 = vmatprep.subr.bf16.mxu0 0
    %2332 = vmatpush1.bf16.msra.mxu0 0
    %2333 = vmatprep.mubr.bf16.mxu0 0
    %2334 = vmatmul.mubr.bf16.gmra.mrb[0].mxu0 %v2296
    %v2335 = vpop.f32.mrb[0].mxu0
    %v2336 = vadd.f32 0.0, %v2335
    %v2337 = vpop.f32.mrb[0].mxu0
    %v2338 = vpop.f32.mrb[0].mxu0
    %v2339 = vpop.f32.mrb[0].mxu0
    %2340 = vdwg.mxu0
    %2342 = vrot.lane.b32.xlu0 %v2336, 24
    %v2343 = vpop.permute.xlu0 %2342
    %2345 = vst.msk [vmem:[#allocation2 + $0x8] sm:$0xff] %vm718, %v2343
    %v2346 = vld [vmem:[#allocation2] sm:$0xff]
    %v2347 = vld [vmem:[#allocation2 + $0x8] sm:$0xff]
    %v2348 = vpack.c.bf16 %v2347, %v2346
    %v2349 = vld [vmem:[#allocation15] sm:$0xf]
    %v2350 = vld [vmem:[#allocation15 + $0x4] sm:$0xf]
    %v2351 = vld [vmem:[#allocation15 + $0x8] sm:$0xf]
    %v2352 = vld [vmem:[#allocation15 + $0xc] sm:$0xf]
    %v2353 = vld [vmem:[#allocation17] sm:$0x1]
    %v2355 = vlaneseq
    %v2356 = vshrl.u32 %v2355, 7
    %v2357 = vsub.s32 0, %v2356
    %v2358 = vrot.slane %v2353, %v2357
    %v2364 = vunpack.c.l.b16 %v2349
    %v2365 = vunpack.c.l.b16 %v2350
    %v2366 = vunpack.c.l.b16 %v2351
    %v2367 = vunpack.c.l.b16 %v2352
    %v2368 = vpack.c.b16 %v2365, %v2364
    %v2369 = vpack.c.b16 %v2367, %v2366
    %v2373 = vsel %vm211, %v2348, 0
    %2375 = vmatprep.subr.bf16.mxu0 0
    %2376 = vmatpush1.bf16.msra.mxu0 %v2368
    %2377 = vmatprep.subr.bf16.mxu0 0
    %2378 = vmatpush1.bf16.msra.mxu0 %v2369
    %2379 = vmatprep.subr.bf16.mxu0 0
    %2380 = vmatpush1.bf16.msra.mxu0 0
    %2381 = vmatprep.subr.bf16.mxu0 0
    %2382 = vmatpush1.bf16.msra.mxu0 0
    %2383 = vmatprep.subr.bf16.mxu0 0
    %2384 = vmatpush1.bf16.msra.mxu0 0
    %2385 = vmatprep.subr.bf16.mxu0 0
    %2386 = vmatpush1.bf16.msra.mxu0 0
    %2387 = vmatprep.subr.bf16.mxu0 0
    %2388 = vmatpush1.bf16.msra.mxu0 0
    %2389 = vmatprep.subr.bf16.mxu0 0
    %2390 = vmatpush1.bf16.msra.mxu0 0
    %2391 = vmatprep.subr.bf16.mxu0 0
    %2392 = vmatpush1.bf16.msra.mxu0 0
    %2393 = vmatprep.subr.bf16.mxu0 0
    %2394 = vmatpush1.bf16.msra.mxu0 0
    %2395 = vmatprep.subr.bf16.mxu0 0
    %2396 = vmatpush1.bf16.msra.mxu0 0
    %2397 = vmatprep.subr.bf16.mxu0 0
    %2398 = vmatpush1.bf16.msra.mxu0 0
    %2399 = vmatprep.subr.bf16.mxu0 0
    %2400 = vmatpush1.bf16.msra.mxu0 0
    %2401 = vmatprep.subr.bf16.mxu0 0
    %2402 = vmatpush1.bf16.msra.mxu0 0
    %2403 = vmatprep.subr.bf16.mxu0 0
    %2404 = vmatpush1.bf16.msra.mxu0 0
    %2405 = vmatprep.subr.bf16.mxu0 0
    %2406 = vmatpush1.bf16.msra.mxu0 0
    %2407 = vmatprep.mubr.bf16.mxu0 0
    %2408 = vmatmul.mubr.bf16.gmra.mrb[0].mxu0 %v2373
    %v2409 = vpop.f32.mrb[0].mxu0
    %v2410 = vadd.f32 %v2358, %v2409
    %v2411 = vpop.f32.mrb[0].mxu0
    %v2412 = vpop.f32.mrb[0].mxu0
    %v2413 = vadd.f32 %v2358, %v2412
    %v2414 = vpop.f32.mrb[0].mxu0
    %2415 = vdwg.mxu0
    %v2416 = vadd.f32 %v1294, %v2410
    %v2417 = vadd.f32 %v1295, %v2413
    %v2418 = vld [vmem:[%s14] sm:$0x1]
    %v2419 = vld [vmem:[%s15] sm:$0x1]
    %v2420 = vsel %vm211, %v2416, 0.0
    %2421 = vadd.xlane.f32.xlu0 %v2420
    %v2422 = vpop.xlane.xlu0 %2421
    %v2423 = vsel %vm211, %v2417, 0.0
    %2424 = vadd.xlane.f32.xlu0 %v2423
    %v2425 = vpop.xlane.xlu0 %2424
    %v2426 = vmul.f32 %v2422, %v1259
    %v2427 = vmul.f32 %v2425, %v1259
    %v2428 = vsub.f32 %v2416, %v2426
    %v2429 = vsub.f32 %v2417, %v2427
    %v2430 = vmul.f32 %v2428, %v2428
    %v2431 = vmul.f32 %v2429, %v2429
    %v2432 = vsel %vm211, %v2430, 0.0
    %2433 = vadd.xlane.f32.xlu0 %v2432
    %v2434 = vpop.xlane.xlu0 %2433
    %v2435 = vsel %vm211, %v2431, 0.0
    %2436 = vadd.xlane.f32.xlu0 %v2435
    %v2437 = vpop.xlane.xlu0 %2436
    %v2438 = vmul.f32 %v2434, %v1259
    %v2439 = vmul.f32 %v2437, %v1259
    %v2440 = vadd.f32 %v2438, 1e-05
    %v2441 = vadd.f32 %v2439, 1e-05
    %v2442 = vrsqrt.pop %v2440
    %v2443 = vrsqrt.pop %v2441
    %v2444 = vmul.f32 %v2428, %v2442
    %v2445 = vmul.f32 %v2429, %v2443
    %v2447 = vlaneseq
    %v2448 = vshrl.u32 %v2447, 7
    %v2449 = vsub.s32 0, %v2448
    %v2450 = vrot.slane %v2418, %v2449
    %v2452 = vmul.f32 %v2444, %v2450
    %v2453 = vmul.f32 %v2445, %v2450
    %v2455 = vlaneseq
    %v2456 = vshrl.u32 %v2455, 7
    %v2457 = vsub.s32 0, %v2456
    %v2458 = vrot.slane %v2419, %v2457
    %v2460 = vadd.f32 %v2452, %v2458
    %v2461 = vadd.f32 %v2453, %v2458
    %v2462 = vpack.c.bf16 %v2461, %v2460
    %v2463 = vld [vmem:[%s16] sm:$0xf]
    %v2464 = vld [vmem:[%s16 + $0x4] sm:$0xf]
    %v2465 = vld [vmem:[%s16 + $0x8] sm:$0xf]
    %v2466 = vld [vmem:[%s16 + $0xc] sm:$0xf]
    %v2467 = vld [vmem:[%s17] sm:$0x1]
    %v2469 = vlaneseq
    %v2470 = vshrl.u32 %v2469, 7
    %v2471 = vsub.s32 0, %v2470
    %v2472 = vrot.slane %v2467, %v2471
    %v2478 = vunpack.c.l.b16 %v2463
    %v2479 = vunpack.c.l.b16 %v2464
    %v2480 = vunpack.c.l.b16 %v2465
    %v2481 = vunpack.c.l.b16 %v2466
    %v2482 = vpack.c.b16 %v2479, %v2478
    %v2483 = vpack.c.b16 %v2481, %v2480
    %v2487 = vsel %vm211, %v2462, 0
    %2489 = vmatprep.subr.bf16.mxu0 0
    %2490 = vmatpush1.bf16.msra.mxu0 %v2482
    %2491 = vmatprep.subr.bf16.mxu0 0
    %2492 = vmatpush1.bf16.msra.mxu0 %v2483
    %2493 = vmatprep.subr.bf16.mxu0 0
    %2494 = vmatpush1.bf16.msra.mxu0 0
    %2495 = vmatprep.subr.bf16.mxu0 0
    %2496 = vmatpush1.bf16.msra.mxu0 0
    %2497 = vmatprep.subr.bf16.mxu0 0
    %2498 = vmatpush1.bf16.msra.mxu0 0
    %2499 = vmatprep.subr.bf16.mxu0 0
    %2500 = vmatpush1.bf16.msra.mxu0 0
    %2501 = vmatprep.subr.bf16.mxu0 0
    %2502 = vmatpush1.bf16.msra.mxu0 0
    %2503 = vmatprep.subr.bf16.mxu0 0
    %2504 = vmatpush1.bf16.msra.mxu0 0
    %2505 = vmatprep.subr.bf16.mxu0 0
    %2506 = vmatpush1.bf16.msra.mxu0 0
    %2507 = vmatprep.subr.bf16.mxu0 0
    %2508 = vmatpush1.bf16.msra.mxu0 0
    %2509 = vmatprep.subr.bf16.mxu0 0
    %2510 = vmatpush1.bf16.msra.mxu0 0
    %2511 = vmatprep.subr.bf16.mxu0 0
    %2512 = vmatpush1.bf16.msra.mxu0 0
    %2513 = vmatprep.subr.bf16.mxu0 0
    %2514 = vmatpush1.bf16.msra.mxu0 0
    %2515 = vmatprep.subr.bf16.mxu0 0
    %2516 = vmatpush1.bf16.msra.mxu0 0
    %2517 = vmatprep.subr.bf16.mxu0 0
    %2518 = vmatpush1.bf16.msra.mxu0 0
    %2519 = vmatprep.subr.bf16.mxu0 0
    %2520 = vmatpush1.bf16.msra.mxu0 0
    %2521 = vmatprep.mubr.bf16.mxu0 0
    %2522 = vmatmul.mubr.bf16.gmra.mrb[0].mxu0 %v2487
    %v2523 = vpop.f32.mrb[0].mxu0
    %v2524 = vadd.f32 %v2472, %v2523
    %v2525 = vpop.f32.mrb[0].mxu0
    %v2526 = vpop.f32.mrb[0].mxu0
    %v2527 = vadd.f32 %v2472, %v2526
    %v2528 = vpop.f32.mrb[0].mxu0
    %2529 = vdwg.mxu0
    %v2530 = vmax.f32 %v2524, 0.0
    %v2531 = vmax.f32 %v2527, 0.0
    %v2532 = vpack.c.bf16 %v2531, %v2530
    %v2533 = vld [vmem:[%s18] sm:$0xf]
    %v2534 = vld [vmem:[%s18 + $0x4] sm:$0xf]
    %v2535 = vld [vmem:[%s18 + $0x8] sm:$0xf]
    %v2536 = vld [vmem:[%s18 + $0xc] sm:$0xf]
    %v2537 = vld [vmem:[%s18 + $0x10] sm:$0xf]
    %v2538 = vld [vmem:[%s18 + $0x14] sm:$0xf]
    %v2539 = vld [vmem:[%s18 + $0x18] sm:$0xf]
    %v2540 = vld [vmem:[%s18 + $0x1c] sm:$0xf]
    %v2541 = vld [vmem:[%s19] sm:$0x1]
    %v2543 = vlaneseq
    %v2544 = vshrl.u32 %v2543, 7
    %v2545 = vsub.s32 0, %v2544
    %v2546 = vrot.slane %v2541, %v2545
    %v2556 = vunpack.c.l.b16 %v2533
    %v2557 = vunpack.c.l.b16 %v2534
    %v2558 = vunpack.c.l.b16 %v2535
    %v2559 = vunpack.c.l.b16 %v2536
    %v2560 = vunpack.c.l.b16 %v2537
    %v2561 = vunpack.c.l.b16 %v2538
    %v2562 = vunpack.c.l.b16 %v2539
    %v2563 = vunpack.c.l.b16 %v2540
    %v2564 = vpack.c.b16 %v2557, %v2556
    %v2565 = vpack.c.b16 %v2559, %v2558
    %v2566 = vpack.c.b16 %v2561, %v2560
    %v2567 = vpack.c.b16 %v2563, %v2562
    %vm2572 = vcmask 523264
    %v2574 = vsel %vm2572, %v2532, 0
    %2576 = vmatprep.subr.bf16.mxu0 0
    %2577 = vmatpush1.bf16.msra.mxu0 %v2564
    %2578 = vmatprep.subr.bf16.mxu0 0
    %2579 = vmatpush1.bf16.msra.mxu0 %v2565
    %2580 = vmatprep.subr.bf16.mxu0 0
    %2581 = vmatpush1.bf16.msra.mxu0 %v2566
    %2582 = vmatprep.subr.bf16.mxu0 0
    %2583 = vmatpush1.bf16.msra.mxu0 %v2567
    %2584 = vmatprep.subr.bf16.mxu0 0
    %2585 = vmatpush1.bf16.msra.mxu0 0
    %2586 = vmatprep.subr.bf16.mxu0 0
    %2587 = vmatpush1.bf16.msra.mxu0 0
    %2588 = vmatprep.subr.bf16.mxu0 0
    %2589 = vmatpush1.bf16.msra.mxu0 0
    %2590 = vmatprep.subr.bf16.mxu0 0
    %2591 = vmatpush1.bf16.msra.mxu0 0
    %2592 = vmatprep.subr.bf16.mxu0 0
    %2593 = vmatpush1.bf16.msra.mxu0 0
    %2594 = vmatprep.subr.bf16.mxu0 0
    %2595 = vmatpush1.bf16.msra.mxu0 0
    %2596 = vmatprep.subr.bf16.mxu0 0
    %2597 = vmatpush1.bf16.msra.mxu0 0
    %2598 = vmatprep.subr.bf16.mxu0 0
    %2599 = vmatpush1.bf16.msra.mxu0 0
    %2600 = vmatprep.subr.bf16.mxu0 0
    %2601 = vmatpush1.bf16.msra.mxu0 0
    %2602 = vmatprep.subr.bf16.mxu0 0
    %2603 = vmatpush1.bf16.msra.mxu0 0
    %2604 = vmatprep.subr.bf16.mxu0 0
    %2605 = vmatpush1.bf16.msra.mxu0 0
    %2606 = vmatprep.subr.bf16.mxu0 0
    %2607 = vmatpush1.bf16.msra.mxu0 0
    %2608 = vmatprep.mubr.bf16.mxu0 0
    %2609 = vmatmul.mubr.bf16.gmra.mrb[0].mxu0 %v2574
    %v2610 = vpop.f32.mrb[0].mxu0
    %v2611 = vadd.f32 %v2546, %v2610
    %v2612 = vpop.f32.mrb[0].mxu0
    %v2613 = vpop.f32.mrb[0].mxu0
    %v2614 = vadd.f32 %v2546, %v2613
    %v2615 = vpop.f32.mrb[0].mxu0
    %2616 = vdwg.mxu0
    %v2617 = vadd.f32 %v2460, %v2611
    %v2618 = vadd.f32 %v2461, %v2614
    %v2619 = vld [vmem:[%s20] sm:$0x1]
    %v2620 = vld [vmem:[%s21] sm:$0x1]
    %v2621 = vsel %vm211, %v2617, 0.0
    %2622 = vadd.xlane.f32.xlu0 %v2621
    %v2623 = vpop.xlane.xlu0 %2622
    %v2624 = vsel %vm211, %v2618, 0.0
    %2625 = vadd.xlane.f32.xlu0 %v2624
    %v2626 = vpop.xlane.xlu0 %2625
    %v2627 = vmul.f32 %v2623, %v1259
    %v2628 = vmul.f32 %v2626, %v1259
    %v2629 = vsub.f32 %v2617, %v2627
    %v2630 = vsub.f32 %v2618, %v2628
    %v2631 = vmul.f32 %v2629, %v2629
    %v2632 = vmul.f32 %v2630, %v2630
    %v2633 = vsel %vm211, %v2631, 0.0
    %2634 = vadd.xlane.f32.xlu0 %v2633
    %v2635 = vpop.xlane.xlu0 %2634
    %v2636 = vsel %vm211, %v2632, 0.0
    %2637 = vadd.xlane.f32.xlu0 %v2636
    %v2638 = vpop.xlane.xlu0 %2637
    %v2639 = vmul.f32 %v2635, %v1259
    %v2640 = vmul.f32 %v2638, %v1259
    %v2641 = vadd.f32 %v2639, 1e-05
    %v2642 = vadd.f32 %v2640, 1e-05
    %v2643 = vrsqrt.pop %v2641
    %v2644 = vrsqrt.pop %v2642
    %v2645 = vmul.f32 %v2629, %v2643
    %v2646 = vmul.f32 %v2630, %v2644
    %v2648 = vlaneseq
    %v2649 = vshrl.u32 %v2648, 7
    %v2650 = vsub.s32 0, %v2649
    %v2651 = vrot.slane %v2619, %v2650
    %v2653 = vmul.f32 %v2645, %v2651
    %v2654 = vmul.f32 %v2646, %v2651
    %v2656 = vlaneseq
    %v2657 = vshrl.u32 %v2656, 7
    %v2658 = vsub.s32 0, %v2657
    %v2659 = vrot.slane %v2620, %v2658
    %v2661 = vadd.f32 %v2653, %v2659
    %v2662 = vadd.f32 %v2654, %v2659
    %2663 = vst.msk [vmem:[#allocation18] sm:$0xff] %vm211, %v2661
    %2664 = vst.msk [vmem:[#allocation18 + $0x8] sm:$0xff] %vm211, %v2662
    // Predicated region
    $region126: #{tpu_custom_call.1} parent=1 // pred_check
      _
    $region127: #{tpu_custom_call.1} parent=1 // pred_check_branch
      %2666 = sbr.rel (0) target = $region129
    $region128: #{tpu_custom_call.1} parent=1 // pred_region
      %s2668 = ssub.s32 256, 256
      %2669 = vsyncadd [#allocation5], %s2668
      %s2670 = sshll.u32 [#allocation18], 4
      %s2671 = int_to_ptr.vmem [resolvable:$true] %s2670
      %2676 = dma.vmem_to_hbm [thread:$0]  %s2671, 256, %s22, [#allocation5], 128, 128, 8
    $region129: #{tpu_custom_call.1} parent=1 // pred_fallthru
      _
    // Predicated region
    $region130: #{tpu_custom_call.1} parent=1 // pred_check
      _
    $region131: #{tpu_custom_call.1} parent=1 // pred_check_branch
      %2678 = sbr.rel (0) target = $region133
    $region132: #{tpu_custom_call.1} parent=1 // pred_region
      %2679 = dma.done [#allocation5], 256
    $region133: #{tpu_custom_call.1} parent=1 // pred_fallthru
      _
    %2680 = vsyncpa [#allocation4], 1
    %2681 = vsyncpa [#allocation7], 1
    %2682 = vsyncpa [#allocation10], 1
    %2683 = vsyncpa [#allocation13], 1
    %2684 = vsyncpa [#allocation16], 1
    %2685 = vsyncpa [#allocation5], 1

</llo_original>
